<compile_context>
chip_gen: v7x
topology: tpu7x:2x2x1
jax: 0.10.0
libtpu: 0.0.40
codegen_flags: <defaults>
</compile_context>

<pallas_src>
import math
import numpy as np
import jax
import jax.numpy as jnp
from jax.experimental import pallas as pl
from jax.experimental.pallas import tpu as pltpu

# ----------------------------- static config ------------------------------
N_EMBD   = 64                 # n_embd (divisible by 16 for GroupNorm, by 4 heads)
N_HEADS  = 4
DIM_HEAD = N_EMBD // N_HEADS  # 16
KSIZES   = (7, 5)             # kernel_sizes
NB       = len(KSIZES)        # 2 branches
KMAX     = max(KSIZES)        # 7 (the k=5 branch is zero-padded to 7 taps)
PAD      = KMAX // 2          # 3
N_HIDDEN = 4 * N_EMBD         # 256 mlp hidden
H_CHUNK  = 64                 # MLP hidden slab size for up-proj + GELU
N_CHUNK  = N_HIDDEN // H_CHUNK
N_GROUPS = 16
GSIZE    = N_EMBD // N_GROUPS # 4
SCALOR   = DIM_HEAD ** (-0.5)
EPS      = 1e-5
T_LEN    = 128
BATCH    = 2
BATCH_FOLD = 2                # batch elements folded onto the lane dimension


# ----------------------------- math helpers -------------------------------
_SQRT_2_OVER_PI = math.sqrt(2.0 / math.pi)


def _sigmoid(x):
    # exact sigmoid via the tanh identity: one EUP op, no approximate reciprocal.
    return 0.5 * (jnp.tanh(0.5 * x) + 1.0)


def _gelu(x):
    # tanh-GELU (torch.nn.GELU(approximate='tanh')): 1 EUP tanh + a few VPU ops.
    # Max deviation from the exact erf GELU is ~1e-3 (review-endorsed tradeoff).
    inner = _SQRT_2_OVER_PI * (x + 0.044715 * (x * x * x))
    return 0.5 * x * (1.0 + jnp.tanh(inner))


# ------------------------------- kernel ------------------------------------
def dyne_kernel(
    x_ref, mask_ref,
    vecc_ref, vec96_ref, vec32_ref, mlp_b1_ref,
    qkv_w_ref, am_w1_ref, am_w2_ref, mw_res_ref, mw_fc_ref, gmat_ref,
    mlp_w1_ref, mlp_w2_ref,
    out_ref,
    g_ref,
):
    f32, bf16 = jnp.float32, jnp.bfloat16
    x = x_ref[0]                      # (C, L) f32, L = batch_fold * T
    msk = mask_ref[0]                 # (1, L) f32
    C, L = x.shape
    T = T_LEN
    n_seg = L // T                    # batch segments folded onto lanes
    dh = DIM_HEAD

    # ---- packed per-channel vectors: one VMEM read each, sliced locally ----
    vecc = vecc_ref[...]              # (C, 10)
    ln_w, ln_b   = vecc[:, 0:1], vecc[:, 1:2]
    fc_w, fc_b   = vecc[:, 2:3], vecc[:, 3:4]
    gfc_w, gfc_b = vecc[:, 4:5], vecc[:, 5:6]
    gn_w, gn_b   = vecc[:, 6:7], vecc[:, 7:8]
    merge_b      = vecc[:, 8:9]
    mlp_b2       = vecc[:, 9:10]

    vec96 = vec96_ref[...]            # (96, 2 + KMAX)
    qkv_b, conv_b = vec96[:, 0:1], vec96[:, 1:2]
    conv_w = vec96[:, 2:2 + KMAX]     # (96, KMAX) depthwise taps (hoisted)

    vec32 = vec32_ref[...]            # (32, 2)
    am_b1, am_b2 = vec32[:, 0:1], vec32[:, 1:2]

    # lane -> (segment, local-t) decomposition for the batch-folded layout
    t_idx = jax.lax.broadcasted_iota(jnp.int32, (1, L), 1)
    if (T & (T - 1)) == 0:
        t_loc = jnp.bitwise_and(t_idx, T - 1)
    else:
        t_loc = jax.lax.rem(t_idx, T)

    def per_segment(vals):
        # vals: one (C, 1) column per batch segment -> (C, L) lane broadcast.
        acc = vals[-1]
        for s in range(n_seg - 2, -1, -1):
            acc = jnp.where(t_idx < (s + 1) * T, vals[s], acc)
        return acc

    # ---- stacked qkv projection for both branches (bf16 MXU, f32 acc) ----
    # row order: [q0, q1, k0, k1, v0, v1], 16 rows each.  Consumes raw x
    # (matches the reference: high_fre_attntion takes x, not ln(x)).
    qkv = jnp.dot(qkv_w_ref[...], x.astype(bf16),
                  preferred_element_type=f32) + qkv_b               # (96, L)

    # ---- LayerNorm over the channel dim (ActionFormer-style, biased var) ----
    mu = jnp.mean(x, axis=0, keepdims=True)
    xc = x - mu
    var = jnp.mean(xc * xc, axis=0, keepdims=True)
    ln_out = xc * jax.lax.rsqrt(var + EPS) * ln_w + ln_b

    # ---- fc (depthwise 1x1) and global gating phi (per batch segment) ----
    fc_val = ln_out * fc_w + fc_b
    phis = []
    for s in range(n_seg):
        m_s = jnp.mean(ln_out[:, s * T:(s + 1) * T], axis=1, keepdims=True)
        phis.append(jnp.maximum(m_s * gfc_w + gfc_b, 0.0))          # relu
    fcphi = fc_val * per_segment(phis)

    # ---- merge_fc (fc*phi half) + ln residual + masked-input residual ----
    # issued before the attention dependency chain; replaces the (96,L) concat.
    base = jnp.dot(mw_fc_ref[...], fcphi.astype(bf16),
                   preferred_element_type=f32) + merge_b + ln_out
    base = x * msk + base                                           # drop_path_out = Identity

    # ---- depthwise conv along T: per-tap lane roll (XLU) + edge mask + FMA,
    #      processed per 32-row (q/k/v) slab to keep vreg pressure bounded ----
    def dwconv(slab, r0, r1):
        m = conv_b[r0:r1] + conv_w[r0:r1, PAD:PAD + 1] * slab       # center tap
        for j in range(KMAX):
            d = j - PAD
            if d == 0:
                continue
            rolled = pltpu.roll(slab, shift=(-d) % L, axis=1)
            valid = (t_loc < (T - d)) if d > 0 else (t_loc >= (-d))
            m = m + conv_w[r0:r1, j:j + 1] * jnp.where(valid, rolled, 0.0)
        return m

    nq = NB * dh                                                    # 32
    q = dwconv(qkv[0 * nq:1 * nq], 0 * nq, 1 * nq)
    k = dwconv(qkv[1 * nq:2 * nq], 1 * nq, 2 * nq)
    v = dwconv(qkv[2 * nq:3 * nq], 2 * nq, 3 * nq)

    # ---- AttnMap for both branches via block-diagonal (32,32) weights ----
    qk = (q * k).astype(bf16)
    a = jnp.dot(am_w1_ref[...], qk, preferred_element_type=f32) + am_b1
    a = a * _sigmoid(a)                                             # MemoryEfficientSwish
    a = jnp.dot(am_w2_ref[...], a.astype(bf16), preferred_element_type=f32) + am_b2
    res = jnp.tanh(a * SCALOR) * v                                  # (32, L) = [res0; res1]

    # ---- merge_fc (attention-result half) ----
    out = base + jnp.dot(mw_res_ref[...], res.astype(bf16),
                         preferred_element_type=f32)

    # ---- GroupNorm(16): one-pass stats.  Exact f32 per-segment lane sums,
    #      stat columns assembled with iota/where (no concat), group totals via
    #      a single (C,C)@(C,2*n_seg) matmul with the 0/1 gmat. ----
    inv_n = 1.0 / float(GSIZE * T)
    cols = []
    for s in range(n_seg):
        seg = out[:, s * T:(s + 1) * T]
        cols.append(jnp.sum(seg, axis=1, keepdims=True))            # sum
        cols.append(jnp.sum(seg * seg, axis=1, keepdims=True))      # sum of squares
    col_iota = jax.lax.broadcasted_iota(jnp.int32, (1, 2 * n_seg), 1)
    stats = cols[-1]
    for idx in range(2 * n_seg - 2, -1, -1):
        stats = jnp.where(col_iota == idx, cols[idx], stats)        # (C, 2*n_seg)
    gstats = jnp.dot(gmat_ref[...], stats, preferred_element_type=f32) * inv_n
    gms, gvs = [], []
    for s in range(n_seg):
        gm = gstats[:, 2 * s:2 * s + 1]
        gvs.append(jnp.maximum(gstats[:, 2 * s + 1:2 * s + 2] - gm * gm, 0.0))
        gms.append(gm)
    gmean = per_segment(gms)
    gvar = per_segment(gvs)
    gn = (out - gmean) * jax.lax.rsqrt(gvar + EPS) * gn_w + gn_b

    # ---- MLP: conv1x1 -> GELU -> conv1x1.  Up-proj + GELU in 64-row slabs
    #      stored to a bf16 VMEM scratch, single K=256 down-proj, and exactly
    #      one write of the output block (no out_ref read-modify-write). ----
    gn_bf = gn.astype(bf16)
    for c in range(N_CHUNK):
        h = jnp.dot(mlp_w1_ref[c], gn_bf, preferred_element_type=f32) + mlp_b1_ref[c]
        g_ref[c * H_CHUNK:(c + 1) * H_CHUNK, :] = _gelu(h).astype(bf16)
    mlp_out = jnp.dot(mlp_w2_ref[...], g_ref[...], preferred_element_type=f32)
    out_ref[0] = out + mlp_b2 + mlp_out                             # drop_path_mlp = Identity


# ----------------------------- wrapper -------------------------------------
def _full_spec(arr):
    nd = arr.ndim
    return pl.BlockSpec(arr.shape, lambda g, _nd=nd: (0,) * _nd)


def dyne_layer_v3(x, mask_bool, params, batch_fold=BATCH_FOLD):
    B, C, T = x.shape
    bfold = batch_fold
    assert B % bfold == 0 and C == N_EMBD and T == T_LEN
    G = B // bfold
    L = bfold * T

    # stride == 1  =>  nearest interpolation of the mask is the identity
    mask_f = mask_bool.astype(x.dtype)

    # fold `bfold` batch elements onto the lane dimension: (G, C, bfold*T)
    x_f = x.reshape(G, bfold, C, T).transpose(0, 2, 1, 3).reshape(G, C, L)
    m_f = mask_f.reshape(G, bfold, 1, T).transpose(0, 2, 1, 3).reshape(G, 1, L)

    weights = [params[k] for k in (
        "vecc", "vec96", "vec32", "mlp_b1",
        "qkv_w", "am_w1", "am_w2", "mw_res", "mw_fc", "gmat",
        "mlp_w1", "mlp_w2")]

    in_specs = [
        pl.BlockSpec((1, C, L), lambda g: (g, 0, 0)),   # x (batch-folded)
        pl.BlockSpec((1, 1, L), lambda g: (g, 0, 0)),   # mask
    ] + [_full_spec(w) for w in weights]

    out = pl.pallas_call(
        dyne_kernel,
        out_shape=jax.ShapeDtypeStruct((G, C, L), x.dtype),
        grid=(G,),
        in_specs=in_specs,
        out_specs=pl.BlockSpec((1, C, L), lambda g: (g, 0, 0)),
        scratch_shapes=[pltpu.VMEM((N_HIDDEN, L), jnp.bfloat16)],   # GELU slab scratch
        compiler_params=pltpu.CompilerParams(
            dimension_semantics=("parallel",)),
    )(x_f, m_f, *weights)

    out = out.reshape(G, C, bfold, T).transpose(0, 2, 1, 3).reshape(B, C, T)
    return out, mask_bool.astype(bool)


# -------------------------- parameter init ---------------------------------
def init_params(key):
    C, dh, H = N_EMBD, DIM_HEAD, N_HIDDEN
    f32, bf16 = jnp.float32, jnp.bfloat16
    keys = iter(jax.random.split(key, 64))

    def nrm(shape, std=0.02):
        return std * jax.random.normal(next(keys), shape, f32)

    # ---- packed (C, 1) affine / bias vectors -> one (C, 10) array ----
    cols = [
        jnp.ones((C, 1), f32),                              # ln_w
        jnp.zeros((C, 1), f32),                             # ln_b
        0.1 * jax.random.normal(next(keys), (C, 1), f32),   # fc_w   (init_conv_vars)
        jnp.zeros((C, 1), f32),                             # fc_b
        0.1 * jax.random.normal(next(keys), (C, 1), f32),   # gfc_w
        jnp.zeros((C, 1), f32),                             # gfc_b
        jnp.ones((C, 1), f32),                              # gn_w
        jnp.zeros((C, 1), f32),                             # gn_b
        nrm((C, 1)),                                        # merge_b
        nrm((C, 1)),                                        # mlp_b2
    ]
    vecc = jnp.concatenate(cols, axis=1)                    # (C, 10)

    # ---- per-branch attention params (per-branch row order [q; k; v]) ----
    qkv_w_b, qkv_b_b, conv_w_b, conv_b_b = [], [], [], []
    am_w1_b, am_b1_b, am_w2_b, am_b2_b = [], [], [], []
    for ksize in KSIZES:
        qkv_w_b.append(nrm((3 * dh, C)))
        qkv_b_b.append(nrm((3 * dh, 1)))
        w = nrm((3 * dh, ksize))
        padl = (KMAX - ksize) // 2          # zero-pad taps to KMAX (same result)
        conv_w_b.append(jnp.pad(w, ((0, 0), (padl, KMAX - ksize - padl))))
        conv_b_b.append(nrm((3 * dh, 1)))
        am_w1_b.append(nrm((dh, dh)))
        am_b1_b.append(nrm((dh, 1)))
        am_w2_b.append(nrm((dh, dh)))
        am_b2_b.append(nrm((dh, 1)))

    def stack_qkv_rows(per_branch):
        # per-branch rows are [q; k; v]; stacked order is [q0,q1,k0,k1,v0,v1]
        parts = []
        for s in range(3):
            for arr in per_branch:
                parts.append(arr[s * dh:(s + 1) * dh])
        return jnp.concatenate(parts, axis=0)

    qkv_w_s  = stack_qkv_rows(qkv_w_b)       # (96, C)
    qkv_b_s  = stack_qkv_rows(qkv_b_b)       # (96, 1)
    conv_w_s = stack_qkv_rows(conv_w_b)      # (96, KMAX)
    conv_b_s = stack_qkv_rows(conv_b_b)      # (96, 1)
    vec96 = jnp.concatenate([qkv_b_s, conv_b_s, conv_w_s], axis=1)   # (96, 2 + KMAX)

    def block_diag2(a, b):
        za = jnp.zeros((a.shape[0], b.shape[1]), f32)
        zb = jnp.zeros((b.shape[0], a.shape[1]), f32)
        return jnp.concatenate(
            [jnp.concatenate([a, za], axis=1),
             jnp.concatenate([zb, b], axis=1)], axis=0)

    am_w1 = block_diag2(am_w1_b[0], am_w1_b[1])              # (32, 32)
    am_w2 = block_diag2(am_w2_b[0], am_w2_b[1])
    vec32 = jnp.concatenate([jnp.concatenate(am_b1_b, axis=0),
                             jnp.concatenate(am_b2_b, axis=0)], axis=1)   # (32, 2)

    # merge_fc: Conv1d(2*dh + C, C, 1) on torch's concat [res0, res1, fc*phi];
    # split into the attention-result half and the fc*phi half (no in-kernel concat)
    mw = nrm((C, NB * dh + C))
    mw_res = mw[:, :NB * dh]                                  # (C, 32)
    mw_fc  = mw[:, NB * dh:]                                  # (C, C)

    # block-diagonal "same group" matrix for GroupNorm group reductions
    gmat = jnp.asarray(np.kron(np.eye(N_GROUPS, dtype=np.float32),
                               np.ones((GSIZE, GSIZE), np.float32)))

    # MLP: Conv1d(C, 4C, 1) -> GELU -> Conv1d(4C, C, 1); up-proj split into
    # 64-row hidden slabs, down-proj kept whole (single K=256 matmul in-kernel)
    mlp_w1 = nrm((H, C))
    mlp_b1 = nrm((H, 1))
    mlp_w2 = nrm((C, H))

    return dict(
        vecc=vecc, vec96=vec96, vec32=vec32,
        mlp_b1=mlp_b1.reshape(N_CHUNK, H_CHUNK, 1),
        qkv_w=qkv_w_s.astype(bf16),
        am_w1=am_w1.astype(bf16), am_w2=am_w2.astype(bf16),
        mw_res=mw_res.astype(bf16), mw_fc=mw_fc.astype(bf16),
        gmat=gmat,
        mlp_w1=mlp_w1.reshape(N_CHUNK, H_CHUNK, C).astype(bf16),
        mlp_w2=mlp_w2.astype(bf16),
    )


# ------------------------------- main ---------------------------------------
if __name__ == "__main__":
    key = jax.random.PRNGKey(0)
    kx, kp = jax.random.split(key, 2)

    x = jax.random.normal(kx, (BATCH, N_EMBD, T_LEN), jnp.float32)
    # boolean validity mask (B, 1, T): first `length` positions valid
    lengths = jnp.array([T_LEN, T_LEN // 2], jnp.int32)
    t = jnp.arange(T_LEN)[None, None, :]
    mask = t < lengths[:, None, None]

    params = init_params(kp)

    out, out_mask = dyne_layer_v3(x, mask, params)
    out = jax.block_until_ready(out)
    out_mask = jax.block_until_ready(out_mask)

    assert out.shape == (BATCH, N_EMBD, T_LEN) and out.dtype == jnp.float32
    assert out_mask.shape == (BATCH, 1, T_LEN) and out_mask.dtype == jnp.bool_
    assert bool(jnp.all(jnp.isfinite(out)))
    print("KERNEL_OK")
</pallas_src>

<mosaic_0001>
module attributes {stable_mosaic.version = 11 : i64} {
  func.func @dyne_kernel(%arg0: i32, %arg1: memref<1x64x256xf32, #tpu.memory_space<vmem>>, %arg2: memref<1x1x256xf32, #tpu.memory_space<vmem>>, %arg3: memref<64x10xf32, #tpu.memory_space<vmem>>, %arg4: memref<96x9xf32, #tpu.memory_space<vmem>>, %arg5: memref<32x2xf32, #tpu.memory_space<vmem>>, %arg6: memref<4x64x1xf32, #tpu.memory_space<vmem>>, %arg7: memref<96x64xbf16, #tpu.memory_space<vmem>>, %arg8: memref<32x32xbf16, #tpu.memory_space<vmem>>, %arg9: memref<32x32xbf16, #tpu.memory_space<vmem>>, %arg10: memref<64x32xbf16, #tpu.memory_space<vmem>>, %arg11: memref<64x64xbf16, #tpu.memory_space<vmem>>, %arg12: memref<64x64xf32, #tpu.memory_space<vmem>>, %arg13: memref<4x64x64xbf16, #tpu.memory_space<vmem>>, %arg14: memref<64x256xbf16, #tpu.memory_space<vmem>>, %arg15: memref<1x64x256xf32, #tpu.memory_space<vmem>>, %arg16: memref<256x256xbf16, #tpu.memory_space<vmem>>) attributes {dimension_semantics = [#tpu.dimension_semantics<parallel>], iteration_bounds = array<i64: 1>, scalar_prefetch = 0 : i64, scratch_operands = 1 : i64, tpu.core_type = #tpu.core_type<tc>, window_params = [{transform_indices = @transform_0, window_bounds = array<i64: 1, 64, 256>}, {transform_indices = @transform_1, window_bounds = array<i64: 1, 1, 256>}, {pipeline_mode = #tpu.pipeline_mode<synchronous>, transform_indices = @transform_2, window_bounds = array<i64: 64, 10>}, {pipeline_mode = #tpu.pipeline_mode<synchronous>, transform_indices = @transform_3, window_bounds = array<i64: 96, 9>}, {pipeline_mode = #tpu.pipeline_mode<synchronous>, transform_indices = @transform_4, window_bounds = array<i64: 32, 2>}, {pipeline_mode = #tpu.pipeline_mode<synchronous>, transform_indices = @transform_5, window_bounds = array<i64: 4, 64, 1>}, {pipeline_mode = #tpu.pipeline_mode<synchronous>, transform_indices = @transform_6, window_bounds = array<i64: 96, 64>}, {pipeline_mode = #tpu.pipeline_mode<synchronous>, transform_indices = @transform_7, window_bounds = array<i64: 32, 32>}, {pipeline_mode = #tpu.pipeline_mode<synchronous>, transform_indices = @transform_8, window_bounds = array<i64: 32, 32>}, {pipeline_mode = #tpu.pipeline_mode<synchronous>, transform_indices = @transform_9, window_bounds = array<i64: 64, 32>}, {pipeline_mode = #tpu.pipeline_mode<synchronous>, transform_indices = @transform_10, window_bounds = array<i64: 64, 64>}, {pipeline_mode = #tpu.pipeline_mode<synchronous>, transform_indices = @transform_11, window_bounds = array<i64: 64, 64>}, {pipeline_mode = #tpu.pipeline_mode<synchronous>, transform_indices = @transform_12, window_bounds = array<i64: 4, 64, 64>}, {pipeline_mode = #tpu.pipeline_mode<synchronous>, transform_indices = @transform_13, window_bounds = array<i64: 64, 256>}, {transform_indices = @transform_14, window_bounds = array<i64: 1, 64, 256>}]} {
    %c0 = arith.constant 0 : index
    %c0_0 = arith.constant 0 : index
    %c0_1 = arith.constant 0 : index
    %0 = vector.load %arg1[%c0, %c0_0, %c0_1] : memref<1x64x256xf32, #tpu.memory_space<vmem>>, vector<1x64x256xf32>
    %1 = vector.shape_cast %0 : vector<1x64x256xf32> to vector<64x256xf32>
    %c0_2 = arith.constant 0 : index
    %c0_3 = arith.constant 0 : index
    %c0_4 = arith.constant 0 : index
    %2 = vector.load %arg2[%c0_2, %c0_3, %c0_4] : memref<1x1x256xf32, #tpu.memory_space<vmem>>, vector<1x1x256xf32>
    %3 = vector.shape_cast %2 : vector<1x1x256xf32> to vector<1x256xf32>
    %c0_5 = arith.constant 0 : index
    %c0_6 = arith.constant 0 : index
    %4 = vector.load %arg3[%c0_5, %c0_6] : memref<64x10xf32, #tpu.memory_space<vmem>>, vector<64x10xf32>
    %5 = vector.extract_strided_slice %4 {offsets = [0, 0], sizes = [64, 1], strides = [1, 1]} : vector<64x10xf32> to vector<64x1xf32>
    %6 = vector.extract_strided_slice %4 {offsets = [0, 1], sizes = [64, 1], strides = [1, 1]} : vector<64x10xf32> to vector<64x1xf32>
    %7 = vector.extract_strided_slice %4 {offsets = [0, 2], sizes = [64, 1], strides = [1, 1]} : vector<64x10xf32> to vector<64x1xf32>
    %8 = vector.extract_strided_slice %4 {offsets = [0, 3], sizes = [64, 1], strides = [1, 1]} : vector<64x10xf32> to vector<64x1xf32>
    %9 = vector.extract_strided_slice %4 {offsets = [0, 4], sizes = [64, 1], strides = [1, 1]} : vector<64x10xf32> to vector<64x1xf32>
    %10 = vector.extract_strided_slice %4 {offsets = [0, 5], sizes = [64, 1], strides = [1, 1]} : vector<64x10xf32> to vector<64x1xf32>
    %11 = vector.extract_strided_slice %4 {offsets = [0, 6], sizes = [64, 1], strides = [1, 1]} : vector<64x10xf32> to vector<64x1xf32>
    %12 = vector.extract_strided_slice %4 {offsets = [0, 7], sizes = [64, 1], strides = [1, 1]} : vector<64x10xf32> to vector<64x1xf32>
    %13 = vector.extract_strided_slice %4 {offsets = [0, 8], sizes = [64, 1], strides = [1, 1]} : vector<64x10xf32> to vector<64x1xf32>
    %14 = vector.extract_strided_slice %4 {offsets = [0, 9], sizes = [64, 1], strides = [1, 1]} : vector<64x10xf32> to vector<64x1xf32>
    %c0_7 = arith.constant 0 : index
    %c0_8 = arith.constant 0 : index
    %15 = vector.load %arg4[%c0_7, %c0_8] : memref<96x9xf32, #tpu.memory_space<vmem>>, vector<96x9xf32>
    %16 = vector.extract_strided_slice %15 {offsets = [0, 0], sizes = [96, 1], strides = [1, 1]} : vector<96x9xf32> to vector<96x1xf32>
    %17 = vector.extract_strided_slice %15 {offsets = [0, 1], sizes = [96, 1], strides = [1, 1]} : vector<96x9xf32> to vector<96x1xf32>
    %18 = vector.extract_strided_slice %15 {offsets = [0, 2], sizes = [96, 7], strides = [1, 1]} : vector<96x9xf32> to vector<96x7xf32>
    %c0_9 = arith.constant 0 : index
    %c0_10 = arith.constant 0 : index
    %19 = vector.load %arg5[%c0_9, %c0_10] : memref<32x2xf32, #tpu.memory_space<vmem>>, vector<32x2xf32>
    %20 = vector.extract_strided_slice %19 {offsets = [0, 0], sizes = [32, 1], strides = [1, 1]} : vector<32x2xf32> to vector<32x1xf32>
    %21 = vector.extract_strided_slice %19 {offsets = [0, 1], sizes = [32, 1], strides = [1, 1]} : vector<32x2xf32> to vector<32x1xf32>
    %22 = tpu.iota {dimensions = array<i32: 1>} : vector<1x256xi32>
    %c127_i32 = arith.constant 127 : i32
    %23 = vector.broadcast %c127_i32 : i32 to vector<1x256xi32>
    %24 = arith.andi %22, %23 : vector<1x256xi32>
    %c0_11 = arith.constant 0 : index
    %c0_12 = arith.constant 0 : index
    %25 = vector.load %arg7[%c0_11, %c0_12] : memref<96x64xbf16, #tpu.memory_space<vmem>>, vector<96x64xbf16>
    %26 = arith.truncf %1 : vector<64x256xf32> to vector<64x256xbf16>
    %cst = arith.constant dense<0.000000e+00> : vector<96x256xf32>
    %27 = tpu.matmul %25, %26, %cst {dimension_numbers = #tpu.dot_dimension_numbers<[1], [0], [0], [1], [0, 0, 1, 1], [], []>} : vector<96x64xbf16>, vector<64x256xbf16>, vector<96x256xf32> -> vector<96x256xf32>
    %28 = vector.broadcast %16 : vector<96x1xf32> to vector<96x256xf32>
    %29 = arith.addf %27, %28 : vector<96x256xf32>
    %cst_13 = arith.constant dense<0.000000e+00> : vector<256xf32>
    %30 = vector.multi_reduction <add>, %1, %cst_13 [0] : vector<64x256xf32> to vector<256xf32>
    %31 = vector.shape_cast %30 : vector<256xf32> to vector<1x256xf32>
    %cst_14 = arith.constant 6.400000e+01 : f32
    %32 = vector.broadcast %cst_14 : f32 to vector<1x256xf32>
    %33 = arith.divf %31, %32 : vector<1x256xf32>
    %34 = vector.broadcast %33 : vector<1x256xf32> to vector<64x256xf32>
    %35 = arith.subf %1, %34 : vector<64x256xf32>
    %36 = arith.mulf %35, %35 : vector<64x256xf32>
    %cst_15 = arith.constant dense<0.000000e+00> : vector<256xf32>
    %37 = vector.multi_reduction <add>, %36, %cst_15 [0] : vector<64x256xf32> to vector<256xf32>
    %38 = vector.shape_cast %37 : vector<256xf32> to vector<1x256xf32>
    %cst_16 = arith.constant 6.400000e+01 : f32
    %39 = vector.broadcast %cst_16 : f32 to vector<1x256xf32>
    %40 = arith.divf %38, %39 : vector<1x256xf32>
    %cst_17 = arith.constant 9.99999974E-6 : f32
    %41 = vector.broadcast %cst_17 : f32 to vector<1x256xf32>
    %42 = arith.addf %40, %41 : vector<1x256xf32>
    %43 = math.rsqrt %42 : vector<1x256xf32>
    %44 = vector.broadcast %43 : vector<1x256xf32> to vector<64x256xf32>
    %45 = arith.mulf %35, %44 : vector<64x256xf32>
    %46 = vector.broadcast %5 : vector<64x1xf32> to vector<64x256xf32>
    %47 = arith.mulf %45, %46 : vector<64x256xf32>
    %48 = vector.broadcast %6 : vector<64x1xf32> to vector<64x256xf32>
    %49 = arith.addf %47, %48 : vector<64x256xf32>
    %50 = vector.broadcast %7 : vector<64x1xf32> to vector<64x256xf32>
    %51 = arith.mulf %49, %50 : vector<64x256xf32>
    %52 = vector.broadcast %8 : vector<64x1xf32> to vector<64x256xf32>
    %53 = arith.addf %51, %52 : vector<64x256xf32>
    %54 = vector.extract_strided_slice %49 {offsets = [0, 0], sizes = [64, 128], strides = [1, 1]} : vector<64x256xf32> to vector<64x128xf32>
    %cst_18 = arith.constant dense<0.000000e+00> : vector<64xf32>
    %55 = vector.multi_reduction <add>, %54, %cst_18 [1] : vector<64x128xf32> to vector<64xf32>
    %56 = vector.shape_cast %55 : vector<64xf32> to vector<64x1xf32>
    %cst_19 = arith.constant 1.280000e+02 : f32
    %57 = vector.broadcast %cst_19 : f32 to vector<64x1xf32>
    %58 = arith.divf %56, %57 : vector<64x1xf32>
    %59 = arith.mulf %58, %9 : vector<64x1xf32>
    %60 = arith.addf %59, %10 : vector<64x1xf32>
    %cst_20 = arith.constant 0.000000e+00 : f32
    %61 = vector.broadcast %cst_20 : f32 to vector<64x1xf32>
    %62 = arith.maximumf %60, %61 : vector<64x1xf32>
    %63 = vector.extract_strided_slice %49 {offsets = [0, 128], sizes = [64, 128], strides = [1, 1]} : vector<64x256xf32> to vector<64x128xf32>
    %cst_21 = arith.constant dense<0.000000e+00> : vector<64xf32>
    %64 = vector.multi_reduction <add>, %63, %cst_21 [1] : vector<64x128xf32> to vector<64xf32>
    %65 = vector.shape_cast %64 : vector<64xf32> to vector<64x1xf32>
    %cst_22 = arith.constant 1.280000e+02 : f32
    %66 = vector.broadcast %cst_22 : f32 to vector<64x1xf32>
    %67 = arith.divf %65, %66 : vector<64x1xf32>
    %68 = arith.mulf %67, %9 : vector<64x1xf32>
    %69 = arith.addf %68, %10 : vector<64x1xf32>
    %cst_23 = arith.constant 0.000000e+00 : f32
    %70 = vector.broadcast %cst_23 : f32 to vector<64x1xf32>
    %71 = arith.maximumf %69, %70 : vector<64x1xf32>
    %c128_i32 = arith.constant 128 : i32
    %72 = vector.broadcast %c128_i32 : i32 to vector<1x256xi32>
    %73 = arith.cmpi slt, %22, %72 : vector<1x256xi32>
    %74 = vector.shape_cast %73 : vector<1x256xi1> to vector<1x256xi1>
    %75 = vector.broadcast %74 : vector<1x256xi1> to vector<64x256xi1>
    %76 = vector.shape_cast %62 : vector<64x1xf32> to vector<64x1xf32>
    %77 = vector.broadcast %76 : vector<64x1xf32> to vector<64x256xf32>
    %78 = vector.shape_cast %71 : vector<64x1xf32> to vector<64x1xf32>
    %79 = vector.broadcast %78 : vector<64x1xf32> to vector<64x256xf32>
    %80 = arith.select %75, %77, %79 : vector<64x256xi1>, vector<64x256xf32>
    %81 = arith.mulf %53, %80 : vector<64x256xf32>
    %c0_24 = arith.constant 0 : index
    %c0_25 = arith.constant 0 : index
    %82 = vector.load %arg11[%c0_24, %c0_25] : memref<64x64xbf16, #tpu.memory_space<vmem>>, vector<64x64xbf16>
    %83 = arith.truncf %81 : vector<64x256xf32> to vector<64x256xbf16>
    %cst_26 = arith.constant dense<0.000000e+00> : vector<64x256xf32>
    %84 = tpu.matmul %82, %83, %cst_26 {dimension_numbers = #tpu.dot_dimension_numbers<[1], [0], [0], [1], [0, 0, 1, 1], [], []>} : vector<64x64xbf16>, vector<64x256xbf16>, vector<64x256xf32> -> vector<64x256xf32>
    %85 = vector.broadcast %13 : vector<64x1xf32> to vector<64x256xf32>
    %86 = arith.addf %84, %85 : vector<64x256xf32>
    %87 = arith.addf %86, %49 : vector<64x256xf32>
    %88 = vector.broadcast %3 : vector<1x256xf32> to vector<64x256xf32>
    %89 = arith.mulf %1, %88 : vector<64x256xf32>
    %90 = arith.addf %89, %87 : vector<64x256xf32>
    %91 = vector.extract_strided_slice %29 {offsets = [0, 0], sizes = [32, 256], strides = [1, 1]} : vector<96x256xf32> to vector<32x256xf32>
    %92 = vector.extract_strided_slice %17 {offsets = [0, 0], sizes = [32, 1], strides = [1, 1]} : vector<96x1xf32> to vector<32x1xf32>
    %93 = vector.extract_strided_slice %18 {offsets = [0, 3], sizes = [32, 1], strides = [1, 1]} : vector<96x7xf32> to vector<32x1xf32>
    %94 = vector.broadcast %93 : vector<32x1xf32> to vector<32x256xf32>
    %95 = arith.mulf %94, %91 : vector<32x256xf32>
    %96 = vector.broadcast %92 : vector<32x1xf32> to vector<32x256xf32>
    %97 = arith.addf %96, %95 : vector<32x256xf32>
    %c3_i32 = arith.constant 3 : i32
    %98 = tpu.dynamic_rotate %91 by %c3_i32 dim 1 : vector<32x256xf32>, i32 -> vector<32x256xf32>
    %c3_i32_27 = arith.constant 3 : i32
    %99 = vector.broadcast %c3_i32_27 : i32 to vector<1x256xi32>
    %100 = arith.cmpi sge, %24, %99 : vector<1x256xi32>
    %101 = vector.extract_strided_slice %18 {offsets = [0, 0], sizes = [32, 1], strides = [1, 1]} : vector<96x7xf32> to vector<32x1xf32>
    %cst_28 = arith.constant 0.000000e+00 : f32
    %102 = vector.shape_cast %100 : vector<1x256xi1> to vector<1x256xi1>
    %103 = vector.broadcast %102 : vector<1x256xi1> to vector<32x256xi1>
    %104 = vector.broadcast %cst_28 : f32 to vector<32x256xf32>
    %105 = arith.select %103, %98, %104 : vector<32x256xi1>, vector<32x256xf32>
    %106 = vector.broadcast %101 : vector<32x1xf32> to vector<32x256xf32>
    %107 = arith.mulf %106, %105 : vector<32x256xf32>
    %108 = arith.addf %97, %107 : vector<32x256xf32>
    %c2_i32 = arith.constant 2 : i32
    %109 = tpu.dynamic_rotate %91 by %c2_i32 dim 1 : vector<32x256xf32>, i32 -> vector<32x256xf32>
    %c2_i32_29 = arith.constant 2 : i32
    %110 = vector.broadcast %c2_i32_29 : i32 to vector<1x256xi32>
    %111 = arith.cmpi sge, %24, %110 : vector<1x256xi32>
    %112 = vector.extract_strided_slice %18 {offsets = [0, 1], sizes = [32, 1], strides = [1, 1]} : vector<96x7xf32> to vector<32x1xf32>
    %cst_30 = arith.constant 0.000000e+00 : f32
    %113 = vector.shape_cast %111 : vector<1x256xi1> to vector<1x256xi1>
    %114 = vector.broadcast %113 : vector<1x256xi1> to vector<32x256xi1>
    %115 = vector.broadcast %cst_30 : f32 to vector<32x256xf32>
    %116 = arith.select %114, %109, %115 : vector<32x256xi1>, vector<32x256xf32>
    %117 = vector.broadcast %112 : vector<32x1xf32> to vector<32x256xf32>
    %118 = arith.mulf %117, %116 : vector<32x256xf32>
    %119 = arith.addf %108, %118 : vector<32x256xf32>
    %c1_i32 = arith.constant 1 : i32
    %120 = tpu.dynamic_rotate %91 by %c1_i32 dim 1 : vector<32x256xf32>, i32 -> vector<32x256xf32>
    %c1_i32_31 = arith.constant 1 : i32
    %121 = vector.broadcast %c1_i32_31 : i32 to vector<1x256xi32>
    %122 = arith.cmpi sge, %24, %121 : vector<1x256xi32>
    %123 = vector.extract_strided_slice %18 {offsets = [0, 2], sizes = [32, 1], strides = [1, 1]} : vector<96x7xf32> to vector<32x1xf32>
    %cst_32 = arith.constant 0.000000e+00 : f32
    %124 = vector.shape_cast %122 : vector<1x256xi1> to vector<1x256xi1>
    %125 = vector.broadcast %124 : vector<1x256xi1> to vector<32x256xi1>
    %126 = vector.broadcast %cst_32 : f32 to vector<32x256xf32>
    %127 = arith.select %125, %120, %126 : vector<32x256xi1>, vector<32x256xf32>
    %128 = vector.broadcast %123 : vector<32x1xf32> to vector<32x256xf32>
    %129 = arith.mulf %128, %127 : vector<32x256xf32>
    %130 = arith.addf %119, %129 : vector<32x256xf32>
    %c255_i32 = arith.constant 255 : i32
    %131 = tpu.dynamic_rotate %91 by %c255_i32 dim 1 : vector<32x256xf32>, i32 -> vector<32x256xf32>
    %c127_i32_33 = arith.constant 127 : i32
    %132 = vector.broadcast %c127_i32_33 : i32 to vector<1x256xi32>
    %133 = arith.cmpi slt, %24, %132 : vector<1x256xi32>
    %134 = vector.extract_strided_slice %18 {offsets = [0, 4], sizes = [32, 1], strides = [1, 1]} : vector<96x7xf32> to vector<32x1xf32>
    %cst_34 = arith.constant 0.000000e+00 : f32
    %135 = vector.shape_cast %133 : vector<1x256xi1> to vector<1x256xi1>
    %136 = vector.broadcast %135 : vector<1x256xi1> to vector<32x256xi1>
    %137 = vector.broadcast %cst_34 : f32 to vector<32x256xf32>
    %138 = arith.select %136, %131, %137 : vector<32x256xi1>, vector<32x256xf32>
    %139 = vector.broadcast %134 : vector<32x1xf32> to vector<32x256xf32>
    %140 = arith.mulf %139, %138 : vector<32x256xf32>
    %141 = arith.addf %130, %140 : vector<32x256xf32>
    %c254_i32 = arith.constant 254 : i32
    %142 = tpu.dynamic_rotate %91 by %c254_i32 dim 1 : vector<32x256xf32>, i32 -> vector<32x256xf32>
    %c126_i32 = arith.constant 126 : i32
    %143 = vector.broadcast %c126_i32 : i32 to vector<1x256xi32>
    %144 = arith.cmpi slt, %24, %143 : vector<1x256xi32>
    %145 = vector.extract_strided_slice %18 {offsets = [0, 5], sizes = [32, 1], strides = [1, 1]} : vector<96x7xf32> to vector<32x1xf32>
    %cst_35 = arith.constant 0.000000e+00 : f32
    %146 = vector.shape_cast %144 : vector<1x256xi1> to vector<1x256xi1>
    %147 = vector.broadcast %146 : vector<1x256xi1> to vector<32x256xi1>
    %148 = vector.broadcast %cst_35 : f32 to vector<32x256xf32>
    %149 = arith.select %147, %142, %148 : vector<32x256xi1>, vector<32x256xf32>
    %150 = vector.broadcast %145 : vector<32x1xf32> to vector<32x256xf32>
    %151 = arith.mulf %150, %149 : vector<32x256xf32>
    %152 = arith.addf %141, %151 : vector<32x256xf32>
    %c253_i32 = arith.constant 253 : i32
    %153 = tpu.dynamic_rotate %91 by %c253_i32 dim 1 : vector<32x256xf32>, i32 -> vector<32x256xf32>
    %c125_i32 = arith.constant 125 : i32
    %154 = vector.broadcast %c125_i32 : i32 to vector<1x256xi32>
    %155 = arith.cmpi slt, %24, %154 : vector<1x256xi32>
    %156 = vector.extract_strided_slice %18 {offsets = [0, 6], sizes = [32, 1], strides = [1, 1]} : vector<96x7xf32> to vector<32x1xf32>
    %cst_36 = arith.constant 0.000000e+00 : f32
    %157 = vector.shape_cast %155 : vector<1x256xi1> to vector<1x256xi1>
    %158 = vector.broadcast %157 : vector<1x256xi1> to vector<32x256xi1>
    %159 = vector.broadcast %cst_36 : f32 to vector<32x256xf32>
    %160 = arith.select %158, %153, %159 : vector<32x256xi1>, vector<32x256xf32>
    %161 = vector.broadcast %156 : vector<32x1xf32> to vector<32x256xf32>
    %162 = arith.mulf %161, %160 : vector<32x256xf32>
    %163 = arith.addf %152, %162 : vector<32x256xf32>
    %164 = vector.extract_strided_slice %29 {offsets = [32, 0], sizes = [32, 256], strides = [1, 1]} : vector<96x256xf32> to vector<32x256xf32>
    %165 = vector.extract_strided_slice %17 {offsets = [32, 0], sizes = [32, 1], strides = [1, 1]} : vector<96x1xf32> to vector<32x1xf32>
    %166 = vector.extract_strided_slice %18 {offsets = [32, 3], sizes = [32, 1], strides = [1, 1]} : vector<96x7xf32> to vector<32x1xf32>
    %167 = vector.broadcast %166 : vector<32x1xf32> to vector<32x256xf32>
    %168 = arith.mulf %167, %164 : vector<32x256xf32>
    %169 = vector.broadcast %165 : vector<32x1xf32> to vector<32x256xf32>
    %170 = arith.addf %169, %168 : vector<32x256xf32>
    %c3_i32_37 = arith.constant 3 : i32
    %171 = tpu.dynamic_rotate %164 by %c3_i32_37 dim 1 : vector<32x256xf32>, i32 -> vector<32x256xf32>
    %c3_i32_38 = arith.constant 3 : i32
    %172 = vector.broadcast %c3_i32_38 : i32 to vector<1x256xi32>
    %173 = arith.cmpi sge, %24, %172 : vector<1x256xi32>
    %174 = vector.extract_strided_slice %18 {offsets = [32, 0], sizes = [32, 1], strides = [1, 1]} : vector<96x7xf32> to vector<32x1xf32>
    %cst_39 = arith.constant 0.000000e+00 : f32
    %175 = vector.shape_cast %173 : vector<1x256xi1> to vector<1x256xi1>
    %176 = vector.broadcast %175 : vector<1x256xi1> to vector<32x256xi1>
    %177 = vector.broadcast %cst_39 : f32 to vector<32x256xf32>
    %178 = arith.select %176, %171, %177 : vector<32x256xi1>, vector<32x256xf32>
    %179 = vector.broadcast %174 : vector<32x1xf32> to vector<32x256xf32>
    %180 = arith.mulf %179, %178 : vector<32x256xf32>
    %181 = arith.addf %170, %180 : vector<32x256xf32>
    %c2_i32_40 = arith.constant 2 : i32
    %182 = tpu.dynamic_rotate %164 by %c2_i32_40 dim 1 : vector<32x256xf32>, i32 -> vector<32x256xf32>
    %c2_i32_41 = arith.constant 2 : i32
    %183 = vector.broadcast %c2_i32_41 : i32 to vector<1x256xi32>
    %184 = arith.cmpi sge, %24, %183 : vector<1x256xi32>
    %185 = vector.extract_strided_slice %18 {offsets = [32, 1], sizes = [32, 1], strides = [1, 1]} : vector<96x7xf32> to vector<32x1xf32>
    %cst_42 = arith.constant 0.000000e+00 : f32
    %186 = vector.shape_cast %184 : vector<1x256xi1> to vector<1x256xi1>
    %187 = vector.broadcast %186 : vector<1x256xi1> to vector<32x256xi1>
    %188 = vector.broadcast %cst_42 : f32 to vector<32x256xf32>
    %189 = arith.select %187, %182, %188 : vector<32x256xi1>, vector<32x256xf32>
    %190 = vector.broadcast %185 : vector<32x1xf32> to vector<32x256xf32>
    %191 = arith.mulf %190, %189 : vector<32x256xf32>
    %192 = arith.addf %181, %191 : vector<32x256xf32>
    %c1_i32_43 = arith.constant 1 : i32
    %193 = tpu.dynamic_rotate %164 by %c1_i32_43 dim 1 : vector<32x256xf32>, i32 -> vector<32x256xf32>
    %c1_i32_44 = arith.constant 1 : i32
    %194 = vector.broadcast %c1_i32_44 : i32 to vector<1x256xi32>
    %195 = arith.cmpi sge, %24, %194 : vector<1x256xi32>
    %196 = vector.extract_strided_slice %18 {offsets = [32, 2], sizes = [32, 1], strides = [1, 1]} : vector<96x7xf32> to vector<32x1xf32>
    %cst_45 = arith.constant 0.000000e+00 : f32
    %197 = vector.shape_cast %195 : vector<1x256xi1> to vector<1x256xi1>
    %198 = vector.broadcast %197 : vector<1x256xi1> to vector<32x256xi1>
    %199 = vector.broadcast %cst_45 : f32 to vector<32x256xf32>
    %200 = arith.select %198, %193, %199 : vector<32x256xi1>, vector<32x256xf32>
    %201 = vector.broadcast %196 : vector<32x1xf32> to vector<32x256xf32>
    %202 = arith.mulf %201, %200 : vector<32x256xf32>
    %203 = arith.addf %192, %202 : vector<32x256xf32>
    %c255_i32_46 = arith.constant 255 : i32
    %204 = tpu.dynamic_rotate %164 by %c255_i32_46 dim 1 : vector<32x256xf32>, i32 -> vector<32x256xf32>
    %c127_i32_47 = arith.constant 127 : i32
    %205 = vector.broadcast %c127_i32_47 : i32 to vector<1x256xi32>
    %206 = arith.cmpi slt, %24, %205 : vector<1x256xi32>
    %207 = vector.extract_strided_slice %18 {offsets = [32, 4], sizes = [32, 1], strides = [1, 1]} : vector<96x7xf32> to vector<32x1xf32>
    %cst_48 = arith.constant 0.000000e+00 : f32
    %208 = vector.shape_cast %206 : vector<1x256xi1> to vector<1x256xi1>
    %209 = vector.broadcast %208 : vector<1x256xi1> to vector<32x256xi1>
    %210 = vector.broadcast %cst_48 : f32 to vector<32x256xf32>
    %211 = arith.select %209, %204, %210 : vector<32x256xi1>, vector<32x256xf32>
    %212 = vector.broadcast %207 : vector<32x1xf32> to vector<32x256xf32>
    %213 = arith.mulf %212, %211 : vector<32x256xf32>
    %214 = arith.addf %203, %213 : vector<32x256xf32>
    %c254_i32_49 = arith.constant 254 : i32
    %215 = tpu.dynamic_rotate %164 by %c254_i32_49 dim 1 : vector<32x256xf32>, i32 -> vector<32x256xf32>
    %c126_i32_50 = arith.constant 126 : i32
    %216 = vector.broadcast %c126_i32_50 : i32 to vector<1x256xi32>
    %217 = arith.cmpi slt, %24, %216 : vector<1x256xi32>
    %218 = vector.extract_strided_slice %18 {offsets = [32, 5], sizes = [32, 1], strides = [1, 1]} : vector<96x7xf32> to vector<32x1xf32>
    %cst_51 = arith.constant 0.000000e+00 : f32
    %219 = vector.shape_cast %217 : vector<1x256xi1> to vector<1x256xi1>
    %220 = vector.broadcast %219 : vector<1x256xi1> to vector<32x256xi1>
    %221 = vector.broadcast %cst_51 : f32 to vector<32x256xf32>
    %222 = arith.select %220, %215, %221 : vector<32x256xi1>, vector<32x256xf32>
    %223 = vector.broadcast %218 : vector<32x1xf32> to vector<32x256xf32>
    %224 = arith.mulf %223, %222 : vector<32x256xf32>
    %225 = arith.addf %214, %224 : vector<32x256xf32>
    %c253_i32_52 = arith.constant 253 : i32
    %226 = tpu.dynamic_rotate %164 by %c253_i32_52 dim 1 : vector<32x256xf32>, i32 -> vector<32x256xf32>
    %c125_i32_53 = arith.constant 125 : i32
    %227 = vector.broadcast %c125_i32_53 : i32 to vector<1x256xi32>
    %228 = arith.cmpi slt, %24, %227 : vector<1x256xi32>
    %229 = vector.extract_strided_slice %18 {offsets = [32, 6], sizes = [32, 1], strides = [1, 1]} : vector<96x7xf32> to vector<32x1xf32>
    %cst_54 = arith.constant 0.000000e+00 : f32
    %230 = vector.shape_cast %228 : vector<1x256xi1> to vector<1x256xi1>
    %231 = vector.broadcast %230 : vector<1x256xi1> to vector<32x256xi1>
    %232 = vector.broadcast %cst_54 : f32 to vector<32x256xf32>
    %233 = arith.select %231, %226, %232 : vector<32x256xi1>, vector<32x256xf32>
    %234 = vector.broadcast %229 : vector<32x1xf32> to vector<32x256xf32>
    %235 = arith.mulf %234, %233 : vector<32x256xf32>
    %236 = arith.addf %225, %235 : vector<32x256xf32>
    %237 = vector.extract_strided_slice %29 {offsets = [64, 0], sizes = [32, 256], strides = [1, 1]} : vector<96x256xf32> to vector<32x256xf32>
    %238 = vector.extract_strided_slice %17 {offsets = [64, 0], sizes = [32, 1], strides = [1, 1]} : vector<96x1xf32> to vector<32x1xf32>
    %239 = vector.extract_strided_slice %18 {offsets = [64, 3], sizes = [32, 1], strides = [1, 1]} : vector<96x7xf32> to vector<32x1xf32>
    %240 = vector.broadcast %239 : vector<32x1xf32> to vector<32x256xf32>
    %241 = arith.mulf %240, %237 : vector<32x256xf32>
    %242 = vector.broadcast %238 : vector<32x1xf32> to vector<32x256xf32>
    %243 = arith.addf %242, %241 : vector<32x256xf32>
    %c3_i32_55 = arith.constant 3 : i32
    %244 = tpu.dynamic_rotate %237 by %c3_i32_55 dim 1 : vector<32x256xf32>, i32 -> vector<32x256xf32>
    %c3_i32_56 = arith.constant 3 : i32
    %245 = vector.broadcast %c3_i32_56 : i32 to vector<1x256xi32>
    %246 = arith.cmpi sge, %24, %245 : vector<1x256xi32>
    %247 = vector.extract_strided_slice %18 {offsets = [64, 0], sizes = [32, 1], strides = [1, 1]} : vector<96x7xf32> to vector<32x1xf32>
    %cst_57 = arith.constant 0.000000e+00 : f32
    %248 = vector.shape_cast %246 : vector<1x256xi1> to vector<1x256xi1>
    %249 = vector.broadcast %248 : vector<1x256xi1> to vector<32x256xi1>
    %250 = vector.broadcast %cst_57 : f32 to vector<32x256xf32>
    %251 = arith.select %249, %244, %250 : vector<32x256xi1>, vector<32x256xf32>
    %252 = vector.broadcast %247 : vector<32x1xf32> to vector<32x256xf32>
    %253 = arith.mulf %252, %251 : vector<32x256xf32>
    %254 = arith.addf %243, %253 : vector<32x256xf32>
    %c2_i32_58 = arith.constant 2 : i32
    %255 = tpu.dynamic_rotate %237 by %c2_i32_58 dim 1 : vector<32x256xf32>, i32 -> vector<32x256xf32>
    %c2_i32_59 = arith.constant 2 : i32
    %256 = vector.broadcast %c2_i32_59 : i32 to vector<1x256xi32>
    %257 = arith.cmpi sge, %24, %256 : vector<1x256xi32>
    %258 = vector.extract_strided_slice %18 {offsets = [64, 1], sizes = [32, 1], strides = [1, 1]} : vector<96x7xf32> to vector<32x1xf32>
    %cst_60 = arith.constant 0.000000e+00 : f32
    %259 = vector.shape_cast %257 : vector<1x256xi1> to vector<1x256xi1>
    %260 = vector.broadcast %259 : vector<1x256xi1> to vector<32x256xi1>
    %261 = vector.broadcast %cst_60 : f32 to vector<32x256xf32>
    %262 = arith.select %260, %255, %261 : vector<32x256xi1>, vector<32x256xf32>
    %263 = vector.broadcast %258 : vector<32x1xf32> to vector<32x256xf32>
    %264 = arith.mulf %263, %262 : vector<32x256xf32>
    %265 = arith.addf %254, %264 : vector<32x256xf32>
    %c1_i32_61 = arith.constant 1 : i32
    %266 = tpu.dynamic_rotate %237 by %c1_i32_61 dim 1 : vector<32x256xf32>, i32 -> vector<32x256xf32>
    %c1_i32_62 = arith.constant 1 : i32
    %267 = vector.broadcast %c1_i32_62 : i32 to vector<1x256xi32>
    %268 = arith.cmpi sge, %24, %267 : vector<1x256xi32>
    %269 = vector.extract_strided_slice %18 {offsets = [64, 2], sizes = [32, 1], strides = [1, 1]} : vector<96x7xf32> to vector<32x1xf32>
    %cst_63 = arith.constant 0.000000e+00 : f32
    %270 = vector.shape_cast %268 : vector<1x256xi1> to vector<1x256xi1>
    %271 = vector.broadcast %270 : vector<1x256xi1> to vector<32x256xi1>
    %272 = vector.broadcast %cst_63 : f32 to vector<32x256xf32>
    %273 = arith.select %271, %266, %272 : vector<32x256xi1>, vector<32x256xf32>
    %274 = vector.broadcast %269 : vector<32x1xf32> to vector<32x256xf32>
    %275 = arith.mulf %274, %273 : vector<32x256xf32>
    %276 = arith.addf %265, %275 : vector<32x256xf32>
    %c255_i32_64 = arith.constant 255 : i32
    %277 = tpu.dynamic_rotate %237 by %c255_i32_64 dim 1 : vector<32x256xf32>, i32 -> vector<32x256xf32>
    %c127_i32_65 = arith.constant 127 : i32
    %278 = vector.broadcast %c127_i32_65 : i32 to vector<1x256xi32>
    %279 = arith.cmpi slt, %24, %278 : vector<1x256xi32>
    %280 = vector.extract_strided_slice %18 {offsets = [64, 4], sizes = [32, 1], strides = [1, 1]} : vector<96x7xf32> to vector<32x1xf32>
    %cst_66 = arith.constant 0.000000e+00 : f32
    %281 = vector.shape_cast %279 : vector<1x256xi1> to vector<1x256xi1>
    %282 = vector.broadcast %281 : vector<1x256xi1> to vector<32x256xi1>
    %283 = vector.broadcast %cst_66 : f32 to vector<32x256xf32>
    %284 = arith.select %282, %277, %283 : vector<32x256xi1>, vector<32x256xf32>
    %285 = vector.broadcast %280 : vector<32x1xf32> to vector<32x256xf32>
    %286 = arith.mulf %285, %284 : vector<32x256xf32>
    %287 = arith.addf %276, %286 : vector<32x256xf32>
    %c254_i32_67 = arith.constant 254 : i32
    %288 = tpu.dynamic_rotate %237 by %c254_i32_67 dim 1 : vector<32x256xf32>, i32 -> vector<32x256xf32>
    %c126_i32_68 = arith.constant 126 : i32
    %289 = vector.broadcast %c126_i32_68 : i32 to vector<1x256xi32>
    %290 = arith.cmpi slt, %24, %289 : vector<1x256xi32>
    %291 = vector.extract_strided_slice %18 {offsets = [64, 5], sizes = [32, 1], strides = [1, 1]} : vector<96x7xf32> to vector<32x1xf32>
    %cst_69 = arith.constant 0.000000e+00 : f32
    %292 = vector.shape_cast %290 : vector<1x256xi1> to vector<1x256xi1>
    %293 = vector.broadcast %292 : vector<1x256xi1> to vector<32x256xi1>
    %294 = vector.broadcast %cst_69 : f32 to vector<32x256xf32>
    %295 = arith.select %293, %288, %294 : vector<32x256xi1>, vector<32x256xf32>
    %296 = vector.broadcast %291 : vector<32x1xf32> to vector<32x256xf32>
    %297 = arith.mulf %296, %295 : vector<32x256xf32>
    %298 = arith.addf %287, %297 : vector<32x256xf32>
    %c253_i32_70 = arith.constant 253 : i32
    %299 = tpu.dynamic_rotate %237 by %c253_i32_70 dim 1 : vector<32x256xf32>, i32 -> vector<32x256xf32>
    %c125_i32_71 = arith.constant 125 : i32
    %300 = vector.broadcast %c125_i32_71 : i32 to vector<1x256xi32>
    %301 = arith.cmpi slt, %24, %300 : vector<1x256xi32>
    %302 = vector.extract_strided_slice %18 {offsets = [64, 6], sizes = [32, 1], strides = [1, 1]} : vector<96x7xf32> to vector<32x1xf32>
    %cst_72 = arith.constant 0.000000e+00 : f32
    %303 = vector.shape_cast %301 : vector<1x256xi1> to vector<1x256xi1>
    %304 = vector.broadcast %303 : vector<1x256xi1> to vector<32x256xi1>
    %305 = vector.broadcast %cst_72 : f32 to vector<32x256xf32>
    %306 = arith.select %304, %299, %305 : vector<32x256xi1>, vector<32x256xf32>
    %307 = vector.broadcast %302 : vector<32x1xf32> to vector<32x256xf32>
    %308 = arith.mulf %307, %306 : vector<32x256xf32>
    %309 = arith.addf %298, %308 : vector<32x256xf32>
    %310 = arith.mulf %163, %236 : vector<32x256xf32>
    %311 = arith.truncf %310 : vector<32x256xf32> to vector<32x256xbf16>
    %c0_73 = arith.constant 0 : index
    %c0_74 = arith.constant 0 : index
    %312 = vector.load %arg8[%c0_73, %c0_74] : memref<32x32xbf16, #tpu.memory_space<vmem>>, vector<32x32xbf16>
    %cst_75 = arith.constant dense<0.000000e+00> : vector<32x256xf32>
    %313 = tpu.matmul %312, %311, %cst_75 {dimension_numbers = #tpu.dot_dimension_numbers<[1], [0], [0], [1], [0, 0, 1, 1], [], []>} : vector<32x32xbf16>, vector<32x256xbf16>, vector<32x256xf32> -> vector<32x256xf32>
    %314 = vector.broadcast %20 : vector<32x1xf32> to vector<32x256xf32>
    %315 = arith.addf %313, %314 : vector<32x256xf32>
    %cst_76 = arith.constant 5.000000e-01 : f32
    %316 = vector.broadcast %cst_76 : f32 to vector<32x256xf32>
    %317 = arith.mulf %316, %315 : vector<32x256xf32>
    %318 = math.tanh %317 : vector<32x256xf32>
    %cst_77 = arith.constant 1.000000e+00 : f32
    %319 = vector.broadcast %cst_77 : f32 to vector<32x256xf32>
    %320 = arith.addf %318, %319 : vector<32x256xf32>
    %cst_78 = arith.constant 5.000000e-01 : f32
    %321 = vector.broadcast %cst_78 : f32 to vector<32x256xf32>
    %322 = arith.mulf %321, %320 : vector<32x256xf32>
    %323 = arith.mulf %315, %322 : vector<32x256xf32>
    %c0_79 = arith.constant 0 : index
    %c0_80 = arith.constant 0 : index
    %324 = vector.load %arg9[%c0_79, %c0_80] : memref<32x32xbf16, #tpu.memory_space<vmem>>, vector<32x32xbf16>
    %325 = arith.truncf %323 : vector<32x256xf32> to vector<32x256xbf16>
    %cst_81 = arith.constant dense<0.000000e+00> : vector<32x256xf32>
    %326 = tpu.matmul %324, %325, %cst_81 {dimension_numbers = #tpu.dot_dimension_numbers<[1], [0], [0], [1], [0, 0, 1, 1], [], []>} : vector<32x32xbf16>, vector<32x256xbf16>, vector<32x256xf32> -> vector<32x256xf32>
    %327 = vector.broadcast %21 : vector<32x1xf32> to vector<32x256xf32>
    %328 = arith.addf %326, %327 : vector<32x256xf32>
    %cst_82 = arith.constant 2.500000e-01 : f32
    %329 = vector.broadcast %cst_82 : f32 to vector<32x256xf32>
    %330 = arith.mulf %328, %329 : vector<32x256xf32>
    %331 = math.tanh %330 : vector<32x256xf32>
    %332 = arith.mulf %331, %309 : vector<32x256xf32>
    %c0_83 = arith.constant 0 : index
    %c0_84 = arith.constant 0 : index
    %333 = vector.load %arg10[%c0_83, %c0_84] : memref<64x32xbf16, #tpu.memory_space<vmem>>, vector<64x32xbf16>
    %334 = arith.truncf %332 : vector<32x256xf32> to vector<32x256xbf16>
    %cst_85 = arith.constant dense<0.000000e+00> : vector<64x256xf32>
    %335 = tpu.matmul %333, %334, %cst_85 {dimension_numbers = #tpu.dot_dimension_numbers<[1], [0], [0], [1], [0, 0, 1, 1], [], []>} : vector<64x32xbf16>, vector<32x256xbf16>, vector<64x256xf32> -> vector<64x256xf32>
    %336 = arith.addf %90, %335 : vector<64x256xf32>
    %337 = vector.extract_strided_slice %336 {offsets = [0, 0], sizes = [64, 128], strides = [1, 1]} : vector<64x256xf32> to vector<64x128xf32>
    %cst_86 = arith.constant dense<0.000000e+00> : vector<64xf32>
    %338 = vector.multi_reduction <add>, %337, %cst_86 [1] : vector<64x128xf32> to vector<64xf32>
    %339 = vector.shape_cast %338 : vector<64xf32> to vector<64x1xf32>
    %340 = arith.mulf %337, %337 : vector<64x128xf32>
    %cst_87 = arith.constant dense<0.000000e+00> : vector<64xf32>
    %341 = vector.multi_reduction <add>, %340, %cst_87 [1] : vector<64x128xf32> to vector<64xf32>
    %342 = vector.shape_cast %341 : vector<64xf32> to vector<64x1xf32>
    %343 = vector.extract_strided_slice %336 {offsets = [0, 128], sizes = [64, 128], strides = [1, 1]} : vector<64x256xf32> to vector<64x128xf32>
    %cst_88 = arith.constant dense<0.000000e+00> : vector<64xf32>
    %344 = vector.multi_reduction <add>, %343, %cst_88 [1] : vector<64x128xf32> to vector<64xf32>
    %345 = vector.shape_cast %344 : vector<64xf32> to vector<64x1xf32>
    %346 = arith.mulf %343, %343 : vector<64x128xf32>
    %cst_89 = arith.constant dense<0.000000e+00> : vector<64xf32>
    %347 = vector.multi_reduction <add>, %346, %cst_89 [1] : vector<64x128xf32> to vector<64xf32>
    %348 = vector.shape_cast %347 : vector<64xf32> to vector<64x1xf32>
    %349 = tpu.iota {dimensions = array<i32: 1>} : vector<1x4xi32>
    %c2_i32_90 = arith.constant 2 : i32
    %350 = vector.broadcast %c2_i32_90 : i32 to vector<1x4xi32>
    %351 = arith.cmpi eq, %349, %350 : vector<1x4xi32>
    %352 = vector.shape_cast %351 : vector<1x4xi1> to vector<1x4xi1>
    %353 = vector.broadcast %352 : vector<1x4xi1> to vector<64x4xi1>
    %354 = vector.shape_cast %345 : vector<64x1xf32> to vector<64x1xf32>
    %355 = vector.broadcast %354 : vector<64x1xf32> to vector<64x4xf32>
    %356 = vector.shape_cast %348 : vector<64x1xf32> to vector<64x1xf32>
    %357 = vector.broadcast %356 : vector<64x1xf32> to vector<64x4xf32>
    %358 = arith.select %353, %355, %357 : vector<64x4xi1>, vector<64x4xf32>
    %c1_i32_91 = arith.constant 1 : i32
    %359 = vector.broadcast %c1_i32_91 : i32 to vector<1x4xi32>
    %360 = arith.cmpi eq, %349, %359 : vector<1x4xi32>
    %361 = vector.shape_cast %360 : vector<1x4xi1> to vector<1x4xi1>
    %362 = vector.broadcast %361 : vector<1x4xi1> to vector<64x4xi1>
    %363 = vector.shape_cast %342 : vector<64x1xf32> to vector<64x1xf32>
    %364 = vector.broadcast %363 : vector<64x1xf32> to vector<64x4xf32>
    %365 = arith.select %362, %364, %358 : vector<64x4xi1>, vector<64x4xf32>
    %c0_i32 = arith.constant 0 : i32
    %366 = vector.broadcast %c0_i32 : i32 to vector<1x4xi32>
    %367 = arith.cmpi eq, %349, %366 : vector<1x4xi32>
    %368 = vector.shape_cast %367 : vector<1x4xi1> to vector<1x4xi1>
    %369 = vector.broadcast %368 : vector<1x4xi1> to vector<64x4xi1>
    %370 = vector.shape_cast %339 : vector<64x1xf32> to vector<64x1xf32>
    %371 = vector.broadcast %370 : vector<64x1xf32> to vector<64x4xf32>
    %372 = arith.select %369, %371, %365 : vector<64x4xi1>, vector<64x4xf32>
    %c0_92 = arith.constant 0 : index
    %c0_93 = arith.constant 0 : index
    %373 = vector.load %arg12[%c0_92, %c0_93] : memref<64x64xf32, #tpu.memory_space<vmem>>, vector<64x64xf32>
    %cst_94 = arith.constant dense<0.000000e+00> : vector<64x4xf32>
    %374 = tpu.matmul %373, %372, %cst_94 {dimension_numbers = #tpu.dot_dimension_numbers<[1], [0], [0], [1], [0, 0, 1, 1], [], []>} : vector<64x64xf32>, vector<64x4xf32>, vector<64x4xf32> -> vector<64x4xf32>
    %cst_95 = arith.constant 0.001953125 : f32
    %375 = vector.broadcast %cst_95 : f32 to vector<64x4xf32>
    %376 = arith.mulf %374, %375 : vector<64x4xf32>
    %377 = vector.extract_strided_slice %376 {offsets = [0, 0], sizes = [64, 1], strides = [1, 1]} : vector<64x4xf32> to vector<64x1xf32>
    %378 = vector.extract_strided_slice %376 {offsets = [0, 1], sizes = [64, 1], strides = [1, 1]} : vector<64x4xf32> to vector<64x1xf32>
    %379 = arith.mulf %377, %377 : vector<64x1xf32>
    %380 = arith.subf %378, %379 : vector<64x1xf32>
    %cst_96 = arith.constant 0.000000e+00 : f32
    %381 = vector.broadcast %cst_96 : f32 to vector<64x1xf32>
    %382 = arith.maximumf %380, %381 : vector<64x1xf32>
    %383 = vector.extract_strided_slice %376 {offsets = [0, 2], sizes = [64, 1], strides = [1, 1]} : vector<64x4xf32> to vector<64x1xf32>
    %384 = vector.extract_strided_slice %376 {offsets = [0, 3], sizes = [64, 1], strides = [1, 1]} : vector<64x4xf32> to vector<64x1xf32>
    %385 = arith.mulf %383, %383 : vector<64x1xf32>
    %386 = arith.subf %384, %385 : vector<64x1xf32>
    %cst_97 = arith.constant 0.000000e+00 : f32
    %387 = vector.broadcast %cst_97 : f32 to vector<64x1xf32>
    %388 = arith.maximumf %386, %387 : vector<64x1xf32>
    %c128_i32_98 = arith.constant 128 : i32
    %389 = vector.broadcast %c128_i32_98 : i32 to vector<1x256xi32>
    %390 = arith.cmpi slt, %22, %389 : vector<1x256xi32>
    %391 = vector.shape_cast %390 : vector<1x256xi1> to vector<1x256xi1>
    %392 = vector.broadcast %391 : vector<1x256xi1> to vector<64x256xi1>
    %393 = vector.shape_cast %377 : vector<64x1xf32> to vector<64x1xf32>
    %394 = vector.broadcast %393 : vector<64x1xf32> to vector<64x256xf32>
    %395 = vector.shape_cast %383 : vector<64x1xf32> to vector<64x1xf32>
    %396 = vector.broadcast %395 : vector<64x1xf32> to vector<64x256xf32>
    %397 = arith.select %392, %394, %396 : vector<64x256xi1>, vector<64x256xf32>
    %c128_i32_99 = arith.constant 128 : i32
    %398 = vector.broadcast %c128_i32_99 : i32 to vector<1x256xi32>
    %399 = arith.cmpi slt, %22, %398 : vector<1x256xi32>
    %400 = vector.shape_cast %399 : vector<1x256xi1> to vector<1x256xi1>
    %401 = vector.broadcast %400 : vector<1x256xi1> to vector<64x256xi1>
    %402 = vector.shape_cast %382 : vector<64x1xf32> to vector<64x1xf32>
    %403 = vector.broadcast %402 : vector<64x1xf32> to vector<64x256xf32>
    %404 = vector.shape_cast %388 : vector<64x1xf32> to vector<64x1xf32>
    %405 = vector.broadcast %404 : vector<64x1xf32> to vector<64x256xf32>
    %406 = arith.select %401, %403, %405 : vector<64x256xi1>, vector<64x256xf32>
    %407 = arith.subf %336, %397 : vector<64x256xf32>
    %cst_100 = arith.constant 9.99999974E-6 : f32
    %408 = vector.broadcast %cst_100 : f32 to vector<64x256xf32>
    %409 = arith.addf %406, %408 : vector<64x256xf32>
    %410 = math.rsqrt %409 : vector<64x256xf32>
    %411 = arith.mulf %407, %410 : vector<64x256xf32>
    %412 = vector.broadcast %11 : vector<64x1xf32> to vector<64x256xf32>
    %413 = arith.mulf %411, %412 : vector<64x256xf32>
    %414 = vector.broadcast %12 : vector<64x1xf32> to vector<64x256xf32>
    %415 = arith.addf %413, %414 : vector<64x256xf32>
    %416 = arith.truncf %415 : vector<64x256xf32> to vector<64x256xbf16>
    %c0_101 = arith.constant 0 : index
    %c0_102 = arith.constant 0 : index
    %c0_103 = arith.constant 0 : index
    %417 = vector.load %arg13[%c0_101, %c0_102, %c0_103] : memref<4x64x64xbf16, #tpu.memory_space<vmem>>, vector<1x64x64xbf16>
    %418 = vector.shape_cast %417 : vector<1x64x64xbf16> to vector<64x64xbf16>
    %cst_104 = arith.constant dense<0.000000e+00> : vector<64x256xf32>
    %419 = tpu.matmul %418, %416, %cst_104 {dimension_numbers = #tpu.dot_dimension_numbers<[1], [0], [0], [1], [0, 0, 1, 1], [], []>} : vector<64x64xbf16>, vector<64x256xbf16>, vector<64x256xf32> -> vector<64x256xf32>
    %c0_105 = arith.constant 0 : index
    %c0_106 = arith.constant 0 : index
    %c0_107 = arith.constant 0 : index
    %420 = vector.load %arg6[%c0_105, %c0_106, %c0_107] : memref<4x64x1xf32, #tpu.memory_space<vmem>>, vector<1x64x1xf32>
    %421 = vector.shape_cast %420 : vector<1x64x1xf32> to vector<64x1xf32>
    %422 = vector.broadcast %421 : vector<64x1xf32> to vector<64x256xf32>
    %423 = arith.addf %419, %422 : vector<64x256xf32>
    %424 = arith.mulf %423, %423 : vector<64x256xf32>
    %425 = arith.mulf %424, %423 : vector<64x256xf32>
    %cst_108 = arith.constant 4.471500e-02 : f32
    %426 = vector.broadcast %cst_108 : f32 to vector<64x256xf32>
    %427 = arith.mulf %426, %425 : vector<64x256xf32>
    %428 = arith.addf %423, %427 : vector<64x256xf32>
    %cst_109 = arith.constant 0.797884583 : f32
    %429 = vector.broadcast %cst_109 : f32 to vector<64x256xf32>
    %430 = arith.mulf %429, %428 : vector<64x256xf32>
    %cst_110 = arith.constant 5.000000e-01 : f32
    %431 = vector.broadcast %cst_110 : f32 to vector<64x256xf32>
    %432 = arith.mulf %431, %423 : vector<64x256xf32>
    %433 = math.tanh %430 : vector<64x256xf32>
    %cst_111 = arith.constant 1.000000e+00 : f32
    %434 = vector.broadcast %cst_111 : f32 to vector<64x256xf32>
    %435 = arith.addf %434, %433 : vector<64x256xf32>
    %436 = arith.mulf %432, %435 : vector<64x256xf32>
    %437 = arith.truncf %436 : vector<64x256xf32> to vector<64x256xbf16>
    %c0_112 = arith.constant 0 : index
    %c0_113 = arith.constant 0 : index
    %438 = vector.load %arg16[%c0_112, %c0_113] : memref<256x256xbf16, #tpu.memory_space<vmem>>, vector<64x256xbf16>
    tpu.vector_store %arg16[%c0_112, %c0_113], %437 {strides = array<i32>} : memref<256x256xbf16, #tpu.memory_space<vmem>>, vector<64x256xbf16>,
    %c1 = arith.constant 1 : index
    %c0_114 = arith.constant 0 : index
    %c0_115 = arith.constant 0 : index
    %439 = vector.load %arg13[%c1, %c0_114, %c0_115] : memref<4x64x64xbf16, #tpu.memory_space<vmem>>, vector<1x64x64xbf16>
    %440 = vector.shape_cast %439 : vector<1x64x64xbf16> to vector<64x64xbf16>
    %cst_116 = arith.constant dense<0.000000e+00> : vector<64x256xf32>
    %441 = tpu.matmul %440, %416, %cst_116 {dimension_numbers = #tpu.dot_dimension_numbers<[1], [0], [0], [1], [0, 0, 1, 1], [], []>} : vector<64x64xbf16>, vector<64x256xbf16>, vector<64x256xf32> -> vector<64x256xf32>
    %c1_117 = arith.constant 1 : index
    %c0_118 = arith.constant 0 : index
    %c0_119 = arith.constant 0 : index
    %442 = vector.load %arg6[%c1_117, %c0_118, %c0_119] : memref<4x64x1xf32, #tpu.memory_space<vmem>>, vector<1x64x1xf32>
    %443 = vector.shape_cast %442 : vector<1x64x1xf32> to vector<64x1xf32>
    %444 = vector.broadcast %443 : vector<64x1xf32> to vector<64x256xf32>
    %445 = arith.addf %441, %444 : vector<64x256xf32>
    %446 = arith.mulf %445, %445 : vector<64x256xf32>
    %447 = arith.mulf %446, %445 : vector<64x256xf32>
    %cst_120 = arith.constant 4.471500e-02 : f32
    %448 = vector.broadcast %cst_120 : f32 to vector<64x256xf32>
    %449 = arith.mulf %448, %447 : vector<64x256xf32>
    %450 = arith.addf %445, %449 : vector<64x256xf32>
    %cst_121 = arith.constant 0.797884583 : f32
    %451 = vector.broadcast %cst_121 : f32 to vector<64x256xf32>
    %452 = arith.mulf %451, %450 : vector<64x256xf32>
    %cst_122 = arith.constant 5.000000e-01 : f32
    %453 = vector.broadcast %cst_122 : f32 to vector<64x256xf32>
    %454 = arith.mulf %453, %445 : vector<64x256xf32>
    %455 = math.tanh %452 : vector<64x256xf32>
    %cst_123 = arith.constant 1.000000e+00 : f32
    %456 = vector.broadcast %cst_123 : f32 to vector<64x256xf32>
    %457 = arith.addf %456, %455 : vector<64x256xf32>
    %458 = arith.mulf %454, %457 : vector<64x256xf32>
    %459 = arith.truncf %458 : vector<64x256xf32> to vector<64x256xbf16>
    %c64 = arith.constant 64 : index
    %c0_124 = arith.constant 0 : index
    %460 = vector.load %arg16[%c64, %c0_124] : memref<256x256xbf16, #tpu.memory_space<vmem>>, vector<64x256xbf16>
    tpu.vector_store %arg16[%c64, %c0_124], %459 {strides = array<i32>} : memref<256x256xbf16, #tpu.memory_space<vmem>>, vector<64x256xbf16>,
    %c2 = arith.constant 2 : index
    %c0_125 = arith.constant 0 : index
    %c0_126 = arith.constant 0 : index
    %461 = vector.load %arg13[%c2, %c0_125, %c0_126] : memref<4x64x64xbf16, #tpu.memory_space<vmem>>, vector<1x64x64xbf16>
    %462 = vector.shape_cast %461 : vector<1x64x64xbf16> to vector<64x64xbf16>
    %cst_127 = arith.constant dense<0.000000e+00> : vector<64x256xf32>
    %463 = tpu.matmul %462, %416, %cst_127 {dimension_numbers = #tpu.dot_dimension_numbers<[1], [0], [0], [1], [0, 0, 1, 1], [], []>} : vector<64x64xbf16>, vector<64x256xbf16>, vector<64x256xf32> -> vector<64x256xf32>
    %c2_128 = arith.constant 2 : index
    %c0_129 = arith.constant 0 : index
    %c0_130 = arith.constant 0 : index
    %464 = vector.load %arg6[%c2_128, %c0_129, %c0_130] : memref<4x64x1xf32, #tpu.memory_space<vmem>>, vector<1x64x1xf32>
    %465 = vector.shape_cast %464 : vector<1x64x1xf32> to vector<64x1xf32>
    %466 = vector.broadcast %465 : vector<64x1xf32> to vector<64x256xf32>
    %467 = arith.addf %463, %466 : vector<64x256xf32>
    %468 = arith.mulf %467, %467 : vector<64x256xf32>
    %469 = arith.mulf %468, %467 : vector<64x256xf32>
    %cst_131 = arith.constant 4.471500e-02 : f32
    %470 = vector.broadcast %cst_131 : f32 to vector<64x256xf32>
    %471 = arith.mulf %470, %469 : vector<64x256xf32>
    %472 = arith.addf %467, %471 : vector<64x256xf32>
    %cst_132 = arith.constant 0.797884583 : f32
    %473 = vector.broadcast %cst_132 : f32 to vector<64x256xf32>
    %474 = arith.mulf %473, %472 : vector<64x256xf32>
    %cst_133 = arith.constant 5.000000e-01 : f32
    %475 = vector.broadcast %cst_133 : f32 to vector<64x256xf32>
    %476 = arith.mulf %475, %467 : vector<64x256xf32>
    %477 = math.tanh %474 : vector<64x256xf32>
    %cst_134 = arith.constant 1.000000e+00 : f32
    %478 = vector.broadcast %cst_134 : f32 to vector<64x256xf32>
    %479 = arith.addf %478, %477 : vector<64x256xf32>
    %480 = arith.mulf %476, %479 : vector<64x256xf32>
    %481 = arith.truncf %480 : vector<64x256xf32> to vector<64x256xbf16>
    %c128 = arith.constant 128 : index
    %c0_135 = arith.constant 0 : index
    %482 = vector.load %arg16[%c128, %c0_135] : memref<256x256xbf16, #tpu.memory_space<vmem>>, vector<64x256xbf16>
    tpu.vector_store %arg16[%c128, %c0_135], %481 {strides = array<i32>} : memref<256x256xbf16, #tpu.memory_space<vmem>>, vector<64x256xbf16>,
    %c3 = arith.constant 3 : index
    %c0_136 = arith.constant 0 : index
    %c0_137 = arith.constant 0 : index
    %483 = vector.load %arg13[%c3, %c0_136, %c0_137] : memref<4x64x64xbf16, #tpu.memory_space<vmem>>, vector<1x64x64xbf16>
    %484 = vector.shape_cast %483 : vector<1x64x64xbf16> to vector<64x64xbf16>
    %cst_138 = arith.constant dense<0.000000e+00> : vector<64x256xf32>
    %485 = tpu.matmul %484, %416, %cst_138 {dimension_numbers = #tpu.dot_dimension_numbers<[1], [0], [0], [1], [0, 0, 1, 1], [], []>} : vector<64x64xbf16>, vector<64x256xbf16>, vector<64x256xf32> -> vector<64x256xf32>
    %c3_139 = arith.constant 3 : index
    %c0_140 = arith.constant 0 : index
    %c0_141 = arith.constant 0 : index
    %486 = vector.load %arg6[%c3_139, %c0_140, %c0_141] : memref<4x64x1xf32, #tpu.memory_space<vmem>>, vector<1x64x1xf32>
    %487 = vector.shape_cast %486 : vector<1x64x1xf32> to vector<64x1xf32>
    %488 = vector.broadcast %487 : vector<64x1xf32> to vector<64x256xf32>
    %489 = arith.addf %485, %488 : vector<64x256xf32>
    %490 = arith.mulf %489, %489 : vector<64x256xf32>
    %491 = arith.mulf %490, %489 : vector<64x256xf32>
    %cst_142 = arith.constant 4.471500e-02 : f32
    %492 = vector.broadcast %cst_142 : f32 to vector<64x256xf32>
    %493 = arith.mulf %492, %491 : vector<64x256xf32>
    %494 = arith.addf %489, %493 : vector<64x256xf32>
    %cst_143 = arith.constant 0.797884583 : f32
    %495 = vector.broadcast %cst_143 : f32 to vector<64x256xf32>
    %496 = arith.mulf %495, %494 : vector<64x256xf32>
    %cst_144 = arith.constant 5.000000e-01 : f32
    %497 = vector.broadcast %cst_144 : f32 to vector<64x256xf32>
    %498 = arith.mulf %497, %489 : vector<64x256xf32>
    %499 = math.tanh %496 : vector<64x256xf32>
    %cst_145 = arith.constant 1.000000e+00 : f32
    %500 = vector.broadcast %cst_145 : f32 to vector<64x256xf32>
    %501 = arith.addf %500, %499 : vector<64x256xf32>
    %502 = arith.mulf %498, %501 : vector<64x256xf32>
    %503 = arith.truncf %502 : vector<64x256xf32> to vector<64x256xbf16>
    %c192 = arith.constant 192 : index
    %c0_146 = arith.constant 0 : index
    %504 = vector.load %arg16[%c192, %c0_146] : memref<256x256xbf16, #tpu.memory_space<vmem>>, vector<64x256xbf16>
    tpu.vector_store %arg16[%c192, %c0_146], %503 {strides = array<i32>} : memref<256x256xbf16, #tpu.memory_space<vmem>>, vector<64x256xbf16>,
    %c0_147 = arith.constant 0 : index
    %c0_148 = arith.constant 0 : index
    %505 = vector.load %arg14[%c0_147, %c0_148] : memref<64x256xbf16, #tpu.memory_space<vmem>>, vector<64x256xbf16>
    %c0_149 = arith.constant 0 : index
    %c0_150 = arith.constant 0 : index
    %506 = vector.load %arg16[%c0_149, %c0_150] : memref<256x256xbf16, #tpu.memory_space<vmem>>, vector<256x256xbf16>
    %cst_151 = arith.constant dense<0.000000e+00> : vector<64x256xf32>
    %507 = tpu.matmul %505, %506, %cst_151 {dimension_numbers = #tpu.dot_dimension_numbers<[1], [0], [0], [1], [0, 0, 1, 1], [], []>} : vector<64x256xbf16>, vector<256x256xbf16>, vector<64x256xf32> -> vector<64x256xf32>
    %508 = vector.broadcast %14 : vector<64x1xf32> to vector<64x256xf32>
    %509 = arith.addf %336, %508 : vector<64x256xf32>
    %510 = arith.addf %509, %507 : vector<64x256xf32>
    %c0_152 = arith.constant 0 : index
    %c0_153 = arith.constant 0 : index
    %c0_154 = arith.constant 0 : index
    %511 = vector.load %arg15[%c0_152, %c0_153, %c0_154] : memref<1x64x256xf32, #tpu.memory_space<vmem>>, vector<1x64x256xf32>
    %512 = vector.shape_cast %511 : vector<1x64x256xf32> to vector<64x256xf32>
    %513 = vector.shape_cast %510 : vector<64x256xf32> to vector<1x64x256xf32>
    tpu.vector_store %arg15[%c0_152, %c0_153, %c0_154], %513 {strides = array<i32>} : memref<1x64x256xf32, #tpu.memory_space<vmem>>, vector<1x64x256xf32>,
    return
  }
  func.func @transform_0(%arg0: i32) -> (i32, i32, i32) {
    %c0_i32 = arith.constant 0 : i32
    %c0_i32_0 = arith.constant 0 : i32
    %c0_i32_1 = arith.constant 0 : i32
    return %arg0, %c0_i32, %c0_i32_0 : i32, i32, i32
  }
  func.func @transform_1(%arg0: i32) -> (i32, i32, i32) {
    %c0_i32 = arith.constant 0 : i32
    %c0_i32_0 = arith.constant 0 : i32
    %c0_i32_1 = arith.constant 0 : i32
    return %arg0, %c0_i32, %c0_i32_0 : i32, i32, i32
  }
  func.func @transform_2(%arg0: i32) -> (i32, i32) {
    %c0_i32 = arith.constant 0 : i32
    %c0_i32_0 = arith.constant 0 : i32
    %c0_i32_1 = arith.constant 0 : i32
    return %c0_i32, %c0_i32_0 : i32, i32
  }
  func.func @transform_3(%arg0: i32) -> (i32, i32) {
    %c0_i32 = arith.constant 0 : i32
    %c0_i32_0 = arith.constant 0 : i32
    %c0_i32_1 = arith.constant 0 : i32
    return %c0_i32, %c0_i32_0 : i32, i32
  }
  func.func @transform_4(%arg0: i32) -> (i32, i32) {
    %c0_i32 = arith.constant 0 : i32
    %c0_i32_0 = arith.constant 0 : i32
    %c0_i32_1 = arith.constant 0 : i32
    return %c0_i32, %c0_i32_0 : i32, i32
  }
  func.func @transform_5(%arg0: i32) -> (i32, i32, i32) {
    %c0_i32 = arith.constant 0 : i32
    %c0_i32_0 = arith.constant 0 : i32
    %c0_i32_1 = arith.constant 0 : i32
    %c0_i32_2 = arith.constant 0 : i32
    return %c0_i32, %c0_i32_0, %c0_i32_1 : i32, i32, i32
  }
  func.func @transform_6(%arg0: i32) -> (i32, i32) {
    %c0_i32 = arith.constant 0 : i32
    %c0_i32_0 = arith.constant 0 : i32
    %c0_i32_1 = arith.constant 0 : i32
    return %c0_i32, %c0_i32_0 : i32, i32
  }
  func.func @transform_7(%arg0: i32) -> (i32, i32) {
    %c0_i32 = arith.constant 0 : i32
    %c0_i32_0 = arith.constant 0 : i32
    %c0_i32_1 = arith.constant 0 : i32
    return %c0_i32, %c0_i32_0 : i32, i32
  }
  func.func @transform_8(%arg0: i32) -> (i32, i32) {
    %c0_i32 = arith.constant 0 : i32
    %c0_i32_0 = arith.constant 0 : i32
    %c0_i32_1 = arith.constant 0 : i32
    return %c0_i32, %c0_i32_0 : i32, i32
  }
  func.func @transform_9(%arg0: i32) -> (i32, i32) {
    %c0_i32 = arith.constant 0 : i32
    %c0_i32_0 = arith.constant 0 : i32
    %c0_i32_1 = arith.constant 0 : i32
    return %c0_i32, %c0_i32_0 : i32, i32
  }
  func.func @transform_10(%arg0: i32) -> (i32, i32) {
    %c0_i32 = arith.constant 0 : i32
    %c0_i32_0 = arith.constant 0 : i32
    %c0_i32_1 = arith.constant 0 : i32
    return %c0_i32, %c0_i32_0 : i32, i32
  }
  func.func @transform_11(%arg0: i32) -> (i32, i32) {
    %c0_i32 = arith.constant 0 : i32
    %c0_i32_0 = arith.constant 0 : i32
    %c0_i32_1 = arith.constant 0 : i32
    return %c0_i32, %c0_i32_0 : i32, i32
  }
  func.func @transform_12(%arg0: i32) -> (i32, i32, i32) {
    %c0_i32 = arith.constant 0 : i32
    %c0_i32_0 = arith.constant 0 : i32
    %c0_i32_1 = arith.constant 0 : i32
    %c0_i32_2 = arith.constant 0 : i32
    return %c0_i32, %c0_i32_0, %c0_i32_1 : i32, i32, i32
  }
  func.func @transform_13(%arg0: i32) -> (i32, i32) {
    %c0_i32 = arith.constant 0 : i32
    %c0_i32_0 = arith.constant 0 : i32
    %c0_i32_1 = arith.constant 0 : i32
    return %c0_i32, %c0_i32_0 : i32, i32
  }
  func.func @transform_14(%arg0: i32) -> (i32, i32, i32) {
    %c0_i32 = arith.constant 0 : i32
    %c0_i32_0 = arith.constant 0 : i32
    %c0_i32_1 = arith.constant 0 : i32
    return %arg0, %c0_i32, %c0_i32_0 : i32, i32, i32
  }
}

</mosaic_0001>

<llo_original>
// kernel: tpu_custom_call.1
$region0: #{tpu_custom_call.1}
  #allocation0 [shape = 'u32[]', space=smem, size = 0x4, offset = 0x4, fixed_abs, tag = 'smem constant byte address 0x4 - core index']
  #allocation1 [shape = 'u32[144,128]{1,0:T(1,128)}', space=vmem, size = 0x12000, scoped, tag = 'internal scratch']
  #allocation2 [shape = 'bf16[256,256]{1,0:T(16,128)(2,1)}', space=vmem, size = 0x20000, scoped, tag = 'scratch operand']
  %s0 = inlined_call_operand.vmem [shape: f32[1,64,256], index: 0, kind: input, shape index: {}]
  %s1 = inlined_call_operand.vmem [shape: f32[1,1,256], index: 1, kind: input, shape index: {}]
  %s2 = inlined_call_operand.vmem [shape: f32[64,10], index: 2, kind: input, shape index: {}]
  %s3 = inlined_call_operand.vmem [shape: f32[96,9], index: 3, kind: input, shape index: {}]
  %s4 = inlined_call_operand.vmem [shape: f32[32,2], index: 4, kind: input, shape index: {}]
  %s5 = inlined_call_operand.vmem [shape: f32[4,64,1], index: 5, kind: input, shape index: {}]
  %s6 = inlined_call_operand.vmem [shape: bf16[96,64], index: 6, kind: input, shape index: {}]
  %s7 = inlined_call_operand.vmem [shape: bf16[32,32], index: 7, kind: input, shape index: {}]
  %s8 = inlined_call_operand.vmem [shape: bf16[32,32], index: 8, kind: input, shape index: {}]
  %s9 = inlined_call_operand.vmem [shape: bf16[64,32], index: 9, kind: input, shape index: {}]
  %s10 = inlined_call_operand.vmem [shape: bf16[64,64], index: 10, kind: input, shape index: {}]
  %s11 = inlined_call_operand.vmem [shape: f32[64,64], index: 11, kind: input, shape index: {}]
  %s12 = inlined_call_operand.vmem [shape: bf16[4,64,64], index: 12, kind: input, shape index: {}]
  %s13 = inlined_call_operand.vmem [shape: bf16[64,256], index: 13, kind: input, shape index: {}]
  %s14 = inlined_call_operand.hbm [shape: f32[1,64,256], index: 14, kind: output, shape index: {}]
  %s15 = sld [smem:[#allocation0]]
  $region66: #{tpu_custom_call.1} parent=0
    _
  %s17 = ssub.s32 1, %s15
  %s18 = scalar_select 0, %s17, %s15
  $region1: #{tpu_custom_call.1} parent=0
    #allocation3 [shape = 'u8[65536]{0}', space=vmem, size = 0x10000, scoped, tag = 'output window, operand 0, single buffered']
    #allocation4 [shape = 's32[1]{0}', space=sflag, size = 0x4, scoped, tag = 'scoped memory for tpu_custom_call.1']
    %19 = vsyncpa [#allocation4], 0
    // Predicated region
    $region2: #{tpu_custom_call.1} parent=1 // pred_check
      _
    $region3: #{tpu_custom_call.1} parent=1 // pred_check_branch
      %21 = sbr.rel (0) target = $region5
    $region4: #{tpu_custom_call.1} parent=1 // pred_region
      _
    $region5: #{tpu_custom_call.1} parent=1 // pred_fallthru
      _
    // Predicated region
    $region6: #{tpu_custom_call.1} parent=1 // pred_check
      _
    $region7: #{tpu_custom_call.1} parent=1 // pred_check_branch
      %23 = sbr.rel (0) target = $region9
    $region8: #{tpu_custom_call.1} parent=1 // pred_region
      _
    $region9: #{tpu_custom_call.1} parent=1 // pred_fallthru
      _
    // Predicated region
    $region10: #{tpu_custom_call.1} parent=1 // pred_check
      _
    $region11: #{tpu_custom_call.1} parent=1 // pred_check_branch
      %25 = sbr.rel (0) target = $region13
    $region12: #{tpu_custom_call.1} parent=1 // pred_region
      _
    $region13: #{tpu_custom_call.1} parent=1 // pred_fallthru
      _
    // Predicated region
    $region14: #{tpu_custom_call.1} parent=1 // pred_check
      _
    $region15: #{tpu_custom_call.1} parent=1 // pred_check_branch
      %27 = sbr.rel (0) target = $region17
    $region16: #{tpu_custom_call.1} parent=1 // pred_region
      _
    $region17: #{tpu_custom_call.1} parent=1 // pred_fallthru
      _
    // Predicated region
    $region18: #{tpu_custom_call.1} parent=1 // pred_check
      _
    $region19: #{tpu_custom_call.1} parent=1 // pred_check_branch
      %29 = sbr.rel (0) target = $region21
    $region20: #{tpu_custom_call.1} parent=1 // pred_region
      _
    $region21: #{tpu_custom_call.1} parent=1 // pred_fallthru
      _
    // Predicated region
    $region22: #{tpu_custom_call.1} parent=1 // pred_check
      _
    $region23: #{tpu_custom_call.1} parent=1 // pred_check_branch
      %31 = sbr.rel (0) target = $region25
    $region24: #{tpu_custom_call.1} parent=1 // pred_region
      _
    $region25: #{tpu_custom_call.1} parent=1 // pred_fallthru
      _
    // Predicated region
    $region26: #{tpu_custom_call.1} parent=1 // pred_check
      _
    $region27: #{tpu_custom_call.1} parent=1 // pred_check_branch
      %33 = sbr.rel (0) target = $region29
    $region28: #{tpu_custom_call.1} parent=1 // pred_region
      _
    $region29: #{tpu_custom_call.1} parent=1 // pred_fallthru
      _
    // Predicated region
    $region30: #{tpu_custom_call.1} parent=1 // pred_check
      _
    $region31: #{tpu_custom_call.1} parent=1 // pred_check_branch
      %35 = sbr.rel (0) target = $region33
    $region32: #{tpu_custom_call.1} parent=1 // pred_region
      _
    $region33: #{tpu_custom_call.1} parent=1 // pred_fallthru
      _
    // Predicated region
    $region34: #{tpu_custom_call.1} parent=1 // pred_check
      _
    $region35: #{tpu_custom_call.1} parent=1 // pred_check_branch
      %37 = sbr.rel (0) target = $region37
    $region36: #{tpu_custom_call.1} parent=1 // pred_region
      _
    $region37: #{tpu_custom_call.1} parent=1 // pred_fallthru
      _
    // Predicated region
    $region38: #{tpu_custom_call.1} parent=1 // pred_check
      _
    $region39: #{tpu_custom_call.1} parent=1 // pred_check_branch
      %39 = sbr.rel (0) target = $region41
    $region40: #{tpu_custom_call.1} parent=1 // pred_region
      _
    $region41: #{tpu_custom_call.1} parent=1 // pred_fallthru
      _
    // Predicated region
    $region42: #{tpu_custom_call.1} parent=1 // pred_check
      _
    $region43: #{tpu_custom_call.1} parent=1 // pred_check_branch
      %41 = sbr.rel (0) target = $region45
    $region44: #{tpu_custom_call.1} parent=1 // pred_region
      _
    $region45: #{tpu_custom_call.1} parent=1 // pred_fallthru
      _
    // Predicated region
    $region46: #{tpu_custom_call.1} parent=1 // pred_check
      _
    $region47: #{tpu_custom_call.1} parent=1 // pred_check_branch
      %43 = sbr.rel (0) target = $region49
    $region48: #{tpu_custom_call.1} parent=1 // pred_region
      _
    $region49: #{tpu_custom_call.1} parent=1 // pred_fallthru
      _
    // Predicated region
    $region50: #{tpu_custom_call.1} parent=1 // pred_check
      _
    $region51: #{tpu_custom_call.1} parent=1 // pred_check_branch
      %45 = sbr.rel (0) target = $region53
    $region52: #{tpu_custom_call.1} parent=1 // pred_region
      _
    $region53: #{tpu_custom_call.1} parent=1 // pred_fallthru
      _
    // Predicated region
    $region54: #{tpu_custom_call.1} parent=1 // pred_check
      _
    $region55: #{tpu_custom_call.1} parent=1 // pred_check_branch
      %47 = sbr.rel (0) target = $region57
    $region56: #{tpu_custom_call.1} parent=1 // pred_region
      _
    $region57: #{tpu_custom_call.1} parent=1 // pred_fallthru
      _
    %v49 = vld [vmem:[%s0] sm:$0xff]
    %v50 = vld [vmem:[%s0 + $0x8] sm:$0xff]
    %v51 = vld [vmem:[%s0 + $0x10] sm:$0xff]
    %v52 = vld [vmem:[%s0 + $0x18] sm:$0xff]
    %v53 = vld [vmem:[%s0 + $0x20] sm:$0xff]
    %v54 = vld [vmem:[%s0 + $0x28] sm:$0xff]
    %v55 = vld [vmem:[%s0 + $0x30] sm:$0xff]
    %v56 = vld [vmem:[%s0 + $0x38] sm:$0xff]
    %v57 = vld [vmem:[%s0 + $0x40] sm:$0xff]
    %v58 = vld [vmem:[%s0 + $0x48] sm:$0xff]
    %v59 = vld [vmem:[%s0 + $0x50] sm:$0xff]
    %v60 = vld [vmem:[%s0 + $0x58] sm:$0xff]
    %v61 = vld [vmem:[%s0 + $0x60] sm:$0xff]
    %v62 = vld [vmem:[%s0 + $0x68] sm:$0xff]
    %v63 = vld [vmem:[%s0 + $0x70] sm:$0xff]
    %v64 = vld [vmem:[%s0 + $0x78] sm:$0xff]
    %v65 = vld [vmem:[%s1] sm:$0x3]
    %v66 = vld [vmem:[%s2] sm:$0xff]
    %v67 = vld [vmem:[%s2 + $0x8] sm:$0xff]
    %v68 = vld [vmem:[%s2 + $0x10] sm:$0xff]
    %v69 = vld [vmem:[%s2 + $0x18] sm:$0xff]
    %v70 = vld [vmem:[%s2 + $0x20] sm:$0xff]
    %v71 = vld [vmem:[%s2 + $0x28] sm:$0xff]
    %v72 = vld [vmem:[%s2 + $0x30] sm:$0xff]
    %v73 = vld [vmem:[%s2 + $0x38] sm:$0xff]
    %v74 = vld [vmem:[%s3] sm:$0xff]
    %v75 = vld [vmem:[%s3 + $0x8] sm:$0xff]
    %v76 = vld [vmem:[%s3 + $0x10] sm:$0xff]
    %v77 = vld [vmem:[%s3 + $0x18] sm:$0xff]
    %v78 = vld [vmem:[%s3 + $0x20] sm:$0xff]
    %v79 = vld [vmem:[%s3 + $0x28] sm:$0xff]
    %v80 = vld [vmem:[%s3 + $0x30] sm:$0xff]
    %v81 = vld [vmem:[%s3 + $0x38] sm:$0xff]
    %v82 = vld [vmem:[%s3 + $0x40] sm:$0xff]
    %v83 = vld [vmem:[%s3 + $0x48] sm:$0xff]
    %v84 = vld [vmem:[%s3 + $0x50] sm:$0xff]
    %v85 = vld [vmem:[%s3 + $0x58] sm:$0xff]
    %v86 = vld [vmem:[%s4] sm:$0xff]
    %v87 = vld [vmem:[%s4 + $0x8] sm:$0xff]
    %v88 = vld [vmem:[%s4 + $0x10] sm:$0xff]
    %v89 = vld [vmem:[%s4 + $0x18] sm:$0xff]
    %v90 = vlaneseq
    %v91 = vand.u32 %v90, 127
    %v92 = vadd.s32 %v91, 128
    %v93 = vand.u32 %v91, 127
    %v94 = vand.u32 %v92, 127
    %v95 = vld [vmem:[%s6] sm:$0xf]
    %v96 = vld [vmem:[%s6 + $0x4] sm:$0xf]
    %v97 = vld [vmem:[%s6 + $0x8] sm:$0xf]
    %v98 = vld [vmem:[%s6 + $0xc] sm:$0xf]
    %v99 = vld [vmem:[%s6 + $0x10] sm:$0xf]
    %v100 = vld [vmem:[%s6 + $0x14] sm:$0xf]
    %v101 = vld [vmem:[%s6 + $0x18] sm:$0xf]
    %v102 = vld [vmem:[%s6 + $0x1c] sm:$0xf]
    %v103 = vld [vmem:[%s6 + $0x20] sm:$0xf]
    %v104 = vld [vmem:[%s6 + $0x24] sm:$0xf]
    %v105 = vld [vmem:[%s6 + $0x28] sm:$0xf]
    %v106 = vld [vmem:[%s6 + $0x2c] sm:$0xf]
    %v107 = vpack.c.bf16 %v51, %v49
    %v108 = vpack.c.bf16 %v52, %v50
    %v109 = vpack.c.bf16 %v55, %v53
    %v110 = vpack.c.bf16 %v56, %v54
    %v111 = vpack.c.bf16 %v59, %v57
    %v112 = vpack.c.bf16 %v60, %v58
    %v113 = vpack.c.bf16 %v63, %v61
    %v114 = vpack.c.bf16 %v64, %v62
    %116 = vset.pattern.permute.xlu0 0
    %117 = vperm.xlu0 %116, %v74
    %v118 = vpop.permute.xlu0 %117
    %121 = vset.pattern.permute.xlu0 0
    %122 = vperm.xlu0 %121, %v75
    %v123 = vpop.permute.xlu0 %122
    %126 = vset.pattern.permute.xlu0 0
    %127 = vperm.xlu0 %126, %v76
    %v128 = vpop.permute.xlu0 %127
    %131 = vset.pattern.permute.xlu0 0
    %132 = vperm.xlu0 %131, %v77
    %v133 = vpop.permute.xlu0 %132
    %136 = vset.pattern.permute.xlu0 0
    %137 = vperm.xlu0 %136, %v78
    %v138 = vpop.permute.xlu0 %137
    %141 = vset.pattern.permute.xlu0 0
    %142 = vperm.xlu0 %141, %v79
    %v143 = vpop.permute.xlu0 %142
    %146 = vset.pattern.permute.xlu0 0
    %147 = vperm.xlu0 %146, %v80
    %v148 = vpop.permute.xlu0 %147
    %151 = vset.pattern.permute.xlu0 0
    %152 = vperm.xlu0 %151, %v81
    %v153 = vpop.permute.xlu0 %152
    %156 = vset.pattern.permute.xlu0 0
    %157 = vperm.xlu0 %156, %v82
    %v158 = vpop.permute.xlu0 %157
    %161 = vset.pattern.permute.xlu0 0
    %162 = vperm.xlu0 %161, %v83
    %v163 = vpop.permute.xlu0 %162
    %166 = vset.pattern.permute.xlu0 0
    %167 = vperm.xlu0 %166, %v84
    %v168 = vpop.permute.xlu0 %167
    %171 = vset.pattern.permute.xlu0 0
    %172 = vperm.xlu0 %171, %v85
    %v173 = vpop.permute.xlu0 %172
    %v187 = vunpack.c.l.b16 %v95
    %v188 = vunpack.c.l.b16 %v96
    %v189 = vunpack.c.l.b16 %v97
    %v190 = vunpack.c.l.b16 %v98
    %v191 = vunpack.c.l.b16 %v99
    %v192 = vunpack.c.l.b16 %v100
    %v193 = vunpack.c.l.b16 %v101
    %v194 = vunpack.c.l.b16 %v102
    %v195 = vunpack.c.l.b16 %v103
    %v196 = vunpack.c.l.b16 %v104
    %v197 = vunpack.c.l.b16 %v105
    %v198 = vunpack.c.l.b16 %v106
    %v199 = vpack.c.b16 %v188, %v187
    %v200 = vpack.c.b16 %v190, %v189
    %v201 = vpack.c.b16 %v192, %v191
    %v202 = vpack.c.b16 %v194, %v193
    %v203 = vpack.c.b16 %v196, %v195
    %v204 = vpack.c.b16 %v198, %v197
    %vm205 = vcmask 523264
    %v207 = vsel %vm205, %v199, 0
    %v210 = vsel %vm205, %v200, 0
    %v213 = vsel %vm205, %v201, 0
    %v216 = vsel %vm205, %v202, 0
    %v219 = vsel %vm205, %v203, 0
    %v222 = vsel %vm205, %v204, 0
    %224 = vmatprep.subr.bf16.mxu0 %v108
    %225 = vmatpush1.bf16.msra.mxu0 %v107
    %226 = vmatprep.subr.bf16.mxu0 %v110
    %227 = vmatpush1.bf16.msra.mxu0 %v109
    %228 = vmatprep.subr.bf16.mxu0 %v112
    %229 = vmatpush1.bf16.msra.mxu0 %v111
    %230 = vmatprep.subr.bf16.mxu0 %v114
    %231 = vmatpush1.bf16.msra.mxu0 %v113
    %232 = vmatprep.subr.bf16.mxu0 0
    %233 = vmatpush1.bf16.msra.mxu0 0
    %234 = vmatprep.subr.bf16.mxu0 0
    %235 = vmatpush1.bf16.msra.mxu0 0
    %236 = vmatprep.subr.bf16.mxu0 0
    %237 = vmatpush1.bf16.msra.mxu0 0
    %238 = vmatprep.subr.bf16.mxu0 0
    %239 = vmatpush1.bf16.msra.mxu0 0
    %240 = vmatprep.subr.bf16.mxu0 0
    %241 = vmatpush1.bf16.msra.mxu0 0
    %242 = vmatprep.subr.bf16.mxu0 0
    %243 = vmatpush1.bf16.msra.mxu0 0
    %244 = vmatprep.subr.bf16.mxu0 0
    %245 = vmatpush1.bf16.msra.mxu0 0
    %246 = vmatprep.subr.bf16.mxu0 0
    %247 = vmatpush1.bf16.msra.mxu0 0
    %248 = vmatprep.subr.bf16.mxu0 0
    %249 = vmatpush1.bf16.msra.mxu0 0
    %250 = vmatprep.subr.bf16.mxu0 0
    %251 = vmatpush1.bf16.msra.mxu0 0
    %252 = vmatprep.subr.bf16.mxu0 0
    %253 = vmatpush1.bf16.msra.mxu0 0
    %254 = vmatprep.subr.bf16.mxu0 0
    %255 = vmatpush1.bf16.msra.mxu0 0
    %256 = vmatprep.mubr.bf16.mxu0 0
    %257 = vmatmul.mubr.bf16.gmra.mrb[0].mxu0 %v207
    %v258 = vpop.f32.mrb[0].mxu0
    %v259 = vadd.f32 %v118, %v258
    %v260 = vpop.f32.mrb[0].mxu0
    %v261 = vadd.f32 %v118, %v260
    %v262 = vpop.f32.mrb[0].mxu0
    %v263 = vadd.f32 %v123, %v262
    %v264 = vpop.f32.mrb[0].mxu0
    %v265 = vadd.f32 %v123, %v264
    %266 = vmatprep.mubr.bf16.mxu0 0
    %267 = vmatmul.mubr.bf16.gmra.mrb[0].mxu0 %v210
    %v268 = vpop.f32.mrb[0].mxu0
    %v269 = vadd.f32 %v128, %v268
    %v270 = vpop.f32.mrb[0].mxu0
    %v271 = vadd.f32 %v128, %v270
    %v272 = vpop.f32.mrb[0].mxu0
    %v273 = vadd.f32 %v133, %v272
    %v274 = vpop.f32.mrb[0].mxu0
    %v275 = vadd.f32 %v133, %v274
    %276 = vmatprep.mubr.bf16.mxu0 0
    %277 = vmatmul.mubr.bf16.gmra.mrb[0].mxu0 %v213
    %v278 = vpop.f32.mrb[0].mxu0
    %v279 = vadd.f32 %v138, %v278
    %v280 = vpop.f32.mrb[0].mxu0
    %v281 = vadd.f32 %v138, %v280
    %v282 = vpop.f32.mrb[0].mxu0
    %v283 = vadd.f32 %v143, %v282
    %v284 = vpop.f32.mrb[0].mxu0
    %v285 = vadd.f32 %v143, %v284
    %286 = vmatprep.mubr.bf16.mxu0 0
    %287 = vmatmul.mubr.bf16.gmra.mrb[0].mxu0 %v216
    %v288 = vpop.f32.mrb[0].mxu0
    %v289 = vadd.f32 %v148, %v288
    %v290 = vpop.f32.mrb[0].mxu0
    %v291 = vadd.f32 %v148, %v290
    %v292 = vpop.f32.mrb[0].mxu0
    %v293 = vadd.f32 %v153, %v292
    %v294 = vpop.f32.mrb[0].mxu0
    %v295 = vadd.f32 %v153, %v294
    %296 = vmatprep.mubr.bf16.mxu0 0
    %297 = vmatmul.mubr.bf16.gmra.mrb[0].mxu0 %v219
    %v298 = vpop.f32.mrb[0].mxu0
    %v299 = vadd.f32 %v158, %v298
    %v300 = vpop.f32.mrb[0].mxu0
    %v301 = vadd.f32 %v158, %v300
    %v302 = vpop.f32.mrb[0].mxu0
    %v303 = vadd.f32 %v163, %v302
    %v304 = vpop.f32.mrb[0].mxu0
    %v305 = vadd.f32 %v163, %v304
    %306 = vmatprep.mubr.bf16.mxu0 0
    %307 = vmatmul.mubr.bf16.gmra.mrb[0].mxu0 %v222
    %v308 = vpop.f32.mrb[0].mxu0
    %v309 = vadd.f32 %v168, %v308
    %v310 = vpop.f32.mrb[0].mxu0
    %v311 = vadd.f32 %v168, %v310
    %v312 = vpop.f32.mrb[0].mxu0
    %v313 = vadd.f32 %v173, %v312
    %v314 = vpop.f32.mrb[0].mxu0
    %v315 = vadd.f32 %v173, %v314
    %316 = vdwg.mxu0
    %v317 = vadd.f32 %v49, %v51
    %v318 = vadd.f32 %v317, %v53
    %v319 = vadd.f32 %v318, %v55
    %v320 = vadd.f32 %v319, %v57
    %v321 = vadd.f32 %v320, %v59
    %v322 = vadd.f32 %v321, %v61
    %v323 = vadd.f32 %v322, %v63
    %v324 = vrot.slane %v323, 4
    %v325 = vadd.f32 %v323, %v324
    %v326 = vrot.slane %v325, 2
    %v327 = vadd.f32 %v325, %v326
    %v328 = vrot.slane %v327, 1
    %v329 = vadd.f32 %v327, %v328
    %v330 = vadd.f32 %v50, %v52
    %v331 = vadd.f32 %v330, %v54
    %v332 = vadd.f32 %v331, %v56
    %v333 = vadd.f32 %v332, %v58
    %v334 = vadd.f32 %v333, %v60
    %v335 = vadd.f32 %v334, %v62
    %v336 = vadd.f32 %v335, %v64
    %v337 = vrot.slane %v336, 4
    %v338 = vadd.f32 %v336, %v337
    %v339 = vrot.slane %v338, 2
    %v340 = vadd.f32 %v338, %v339
    %v341 = vrot.slane %v340, 1
    %v342 = vadd.f32 %v340, %v341
    %v343 = vrcp.pop 64.0
    %v344 = vmul.f32 %v329, %v343
    %v345 = vmul.f32 %v342, %v343
    %v346 = vsub.f32 %v49, %v344
    %v347 = vsub.f32 %v50, %v345
    %v348 = vsub.f32 %v51, %v344
    %v349 = vsub.f32 %v52, %v345
    %v350 = vsub.f32 %v53, %v344
    %v351 = vsub.f32 %v54, %v345
    %v352 = vsub.f32 %v55, %v344
    %v353 = vsub.f32 %v56, %v345
    %v354 = vsub.f32 %v57, %v344
    %v355 = vsub.f32 %v58, %v345
    %v356 = vsub.f32 %v59, %v344
    %v357 = vsub.f32 %v60, %v345
    %v358 = vsub.f32 %v61, %v344
    %v359 = vsub.f32 %v62, %v345
    %v360 = vsub.f32 %v63, %v344
    %v361 = vsub.f32 %v64, %v345
    %v362 = vmul.f32 %v346, %v346
    %v363 = vmul.f32 %v347, %v347
    %v364 = vmul.f32 %v348, %v348
    %v365 = vmul.f32 %v349, %v349
    %v366 = vmul.f32 %v350, %v350
    %v367 = vmul.f32 %v351, %v351
    %v368 = vmul.f32 %v352, %v352
    %v369 = vmul.f32 %v353, %v353
    %v370 = vmul.f32 %v354, %v354
    %v371 = vmul.f32 %v355, %v355
    %v372 = vmul.f32 %v356, %v356
    %v373 = vmul.f32 %v357, %v357
    %v374 = vmul.f32 %v358, %v358
    %v375 = vmul.f32 %v359, %v359
    %v376 = vmul.f32 %v360, %v360
    %v377 = vmul.f32 %v361, %v361
    %v378 = vadd.f32 %v362, %v364
    %v379 = vadd.f32 %v378, %v366
    %v380 = vadd.f32 %v379, %v368
    %v381 = vadd.f32 %v380, %v370
    %v382 = vadd.f32 %v381, %v372
    %v383 = vadd.f32 %v382, %v374
    %v384 = vadd.f32 %v383, %v376
    %v385 = vrot.slane %v384, 4
    %v386 = vadd.f32 %v384, %v385
    %v387 = vrot.slane %v386, 2
    %v388 = vadd.f32 %v386, %v387
    %v389 = vrot.slane %v388, 1
    %v390 = vadd.f32 %v388, %v389
    %v391 = vadd.f32 %v363, %v365
    %v392 = vadd.f32 %v391, %v367
    %v393 = vadd.f32 %v392, %v369
    %v394 = vadd.f32 %v393, %v371
    %v395 = vadd.f32 %v394, %v373
    %v396 = vadd.f32 %v395, %v375
    %v397 = vadd.f32 %v396, %v377
    %v398 = vrot.slane %v397, 4
    %v399 = vadd.f32 %v397, %v398
    %v400 = vrot.slane %v399, 2
    %v401 = vadd.f32 %v399, %v400
    %v402 = vrot.slane %v401, 1
    %v403 = vadd.f32 %v401, %v402
    %v404 = vmul.f32 %v390, %v343
    %v405 = vmul.f32 %v403, %v343
    %v406 = vadd.f32 %v404, 1e-05
    %v407 = vadd.f32 %v405, 1e-05
    %v408 = vrsqrt.pop %v406
    %v409 = vrsqrt.pop %v407
    %v410 = vmul.f32 %v346, %v408
    %v411 = vmul.f32 %v347, %v409
    %v412 = vmul.f32 %v348, %v408
    %v413 = vmul.f32 %v349, %v409
    %v414 = vmul.f32 %v350, %v408
    %v415 = vmul.f32 %v351, %v409
    %v416 = vmul.f32 %v352, %v408
    %v417 = vmul.f32 %v353, %v409
    %v418 = vmul.f32 %v354, %v408
    %v419 = vmul.f32 %v355, %v409
    %v420 = vmul.f32 %v356, %v408
    %v421 = vmul.f32 %v357, %v409
    %v422 = vmul.f32 %v358, %v408
    %v423 = vmul.f32 %v359, %v409
    %v424 = vmul.f32 %v360, %v408
    %v425 = vmul.f32 %v361, %v409
    %427 = vset.pattern.permute.xlu0 0
    %428 = vperm.xlu0 %427, %v66
    %v429 = vpop.permute.xlu0 %428
    %432 = vset.pattern.permute.xlu0 0
    %433 = vperm.xlu0 %432, %v67
    %v434 = vpop.permute.xlu0 %433
    %437 = vset.pattern.permute.xlu0 0
    %438 = vperm.xlu0 %437, %v68
    %v439 = vpop.permute.xlu0 %438
    %442 = vset.pattern.permute.xlu0 0
    %443 = vperm.xlu0 %442, %v69
    %v444 = vpop.permute.xlu0 %443
    %447 = vset.pattern.permute.xlu0 0
    %448 = vperm.xlu0 %447, %v70
    %v449 = vpop.permute.xlu0 %448
    %452 = vset.pattern.permute.xlu0 0
    %453 = vperm.xlu0 %452, %v71
    %v454 = vpop.permute.xlu0 %453
    %457 = vset.pattern.permute.xlu0 0
    %458 = vperm.xlu0 %457, %v72
    %v459 = vpop.permute.xlu0 %458
    %462 = vset.pattern.permute.xlu0 0
    %463 = vperm.xlu0 %462, %v73
    %v464 = vpop.permute.xlu0 %463
    %v466 = vmul.f32 %v410, %v429
    %v467 = vmul.f32 %v411, %v429
    %v468 = vmul.f32 %v412, %v434
    %v469 = vmul.f32 %v413, %v434
    %v470 = vmul.f32 %v414, %v439
    %v471 = vmul.f32 %v415, %v439
    %v472 = vmul.f32 %v416, %v444
    %v473 = vmul.f32 %v417, %v444
    %v474 = vmul.f32 %v418, %v449
    %v475 = vmul.f32 %v419, %v449
    %v476 = vmul.f32 %v420, %v454
    %v477 = vmul.f32 %v421, %v454
    %v478 = vmul.f32 %v422, %v459
    %v479 = vmul.f32 %v423, %v459
    %v480 = vmul.f32 %v424, %v464
    %v481 = vmul.f32 %v425, %v464
    %482 = vset.pattern.permute.xlu0 1
    %483 = vperm.xlu0 %482, %v66
    %v484 = vpop.permute.xlu0 %483
    %486 = vset.pattern.permute.xlu0 1
    %487 = vperm.xlu0 %486, %v67
    %v488 = vpop.permute.xlu0 %487
    %490 = vset.pattern.permute.xlu0 1
    %491 = vperm.xlu0 %490, %v68
    %v492 = vpop.permute.xlu0 %491
    %494 = vset.pattern.permute.xlu0 1
    %495 = vperm.xlu0 %494, %v69
    %v496 = vpop.permute.xlu0 %495
    %498 = vset.pattern.permute.xlu0 1
    %499 = vperm.xlu0 %498, %v70
    %v500 = vpop.permute.xlu0 %499
    %502 = vset.pattern.permute.xlu0 1
    %503 = vperm.xlu0 %502, %v71
    %v504 = vpop.permute.xlu0 %503
    %506 = vset.pattern.permute.xlu0 1
    %507 = vperm.xlu0 %506, %v72
    %v508 = vpop.permute.xlu0 %507
    %510 = vset.pattern.permute.xlu0 1
    %511 = vperm.xlu0 %510, %v73
    %v512 = vpop.permute.xlu0 %511
    %v514 = vadd.f32 %v466, %v484
    %v515 = vadd.f32 %v467, %v484
    %v516 = vadd.f32 %v468, %v488
    %v517 = vadd.f32 %v469, %v488
    %v518 = vadd.f32 %v470, %v492
    %v519 = vadd.f32 %v471, %v492
    %v520 = vadd.f32 %v472, %v496
    %v521 = vadd.f32 %v473, %v496
    %v522 = vadd.f32 %v474, %v500
    %v523 = vadd.f32 %v475, %v500
    %v524 = vadd.f32 %v476, %v504
    %v525 = vadd.f32 %v477, %v504
    %v526 = vadd.f32 %v478, %v508
    %v527 = vadd.f32 %v479, %v508
    %v528 = vadd.f32 %v480, %v512
    %v529 = vadd.f32 %v481, %v512
    %530 = vset.pattern.permute.xlu0 2
    %531 = vperm.xlu0 %530, %v66
    %v532 = vpop.permute.xlu0 %531
    %534 = vset.pattern.permute.xlu0 2
    %535 = vperm.xlu0 %534, %v67
    %v536 = vpop.permute.xlu0 %535
    %538 = vset.pattern.permute.xlu0 2
    %539 = vperm.xlu0 %538, %v68
    %v540 = vpop.permute.xlu0 %539
    %542 = vset.pattern.permute.xlu0 2
    %543 = vperm.xlu0 %542, %v69
    %v544 = vpop.permute.xlu0 %543
    %546 = vset.pattern.permute.xlu0 2
    %547 = vperm.xlu0 %546, %v70
    %v548 = vpop.permute.xlu0 %547
    %550 = vset.pattern.permute.xlu0 2
    %551 = vperm.xlu0 %550, %v71
    %v552 = vpop.permute.xlu0 %551
    %554 = vset.pattern.permute.xlu0 2
    %555 = vperm.xlu0 %554, %v72
    %v556 = vpop.permute.xlu0 %555
    %558 = vset.pattern.permute.xlu0 2
    %559 = vperm.xlu0 %558, %v73
    %v560 = vpop.permute.xlu0 %559
    %v562 = vmul.f32 %v514, %v532
    %v563 = vmul.f32 %v515, %v532
    %v564 = vmul.f32 %v516, %v536
    %v565 = vmul.f32 %v517, %v536
    %v566 = vmul.f32 %v518, %v540
    %v567 = vmul.f32 %v519, %v540
    %v568 = vmul.f32 %v520, %v544
    %v569 = vmul.f32 %v521, %v544
    %v570 = vmul.f32 %v522, %v548
    %v571 = vmul.f32 %v523, %v548
    %v572 = vmul.f32 %v524, %v552
    %v573 = vmul.f32 %v525, %v552
    %v574 = vmul.f32 %v526, %v556
    %v575 = vmul.f32 %v527, %v556
    %v576 = vmul.f32 %v528, %v560
    %v577 = vmul.f32 %v529, %v560
    %578 = vset.pattern.permute.xlu0 3
    %579 = vperm.xlu0 %578, %v66
    %v580 = vpop.permute.xlu0 %579
    %582 = vset.pattern.permute.xlu0 3
    %583 = vperm.xlu0 %582, %v67
    %v584 = vpop.permute.xlu0 %583
    %586 = vset.pattern.permute.xlu0 3
    %587 = vperm.xlu0 %586, %v68
    %v588 = vpop.permute.xlu0 %587
    %590 = vset.pattern.permute.xlu0 3
    %591 = vperm.xlu0 %590, %v69
    %v592 = vpop.permute.xlu0 %591
    %594 = vset.pattern.permute.xlu0 3
    %595 = vperm.xlu0 %594, %v70
    %v596 = vpop.permute.xlu0 %595
    %598 = vset.pattern.permute.xlu0 3
    %599 = vperm.xlu0 %598, %v71
    %v600 = vpop.permute.xlu0 %599
    %602 = vset.pattern.permute.xlu0 3
    %603 = vperm.xlu0 %602, %v72
    %v604 = vpop.permute.xlu0 %603
    %606 = vset.pattern.permute.xlu0 3
    %607 = vperm.xlu0 %606, %v73
    %v608 = vpop.permute.xlu0 %607
    %v610 = vadd.f32 %v562, %v580
    %v611 = vadd.f32 %v563, %v580
    %v612 = vadd.f32 %v564, %v584
    %v613 = vadd.f32 %v565, %v584
    %v614 = vadd.f32 %v566, %v588
    %v615 = vadd.f32 %v567, %v588
    %v616 = vadd.f32 %v568, %v592
    %v617 = vadd.f32 %v569, %v592
    %v618 = vadd.f32 %v570, %v596
    %v619 = vadd.f32 %v571, %v596
    %v620 = vadd.f32 %v572, %v600
    %v621 = vadd.f32 %v573, %v600
    %v622 = vadd.f32 %v574, %v604
    %v623 = vadd.f32 %v575, %v604
    %v624 = vadd.f32 %v576, %v608
    %v625 = vadd.f32 %v577, %v608
    %626 = vadd.xlane.f32.xlu0 %v514
    %v627 = vpop.xlane.xlu0 %626
    %628 = vadd.xlane.f32.xlu0 %v516
    %v629 = vpop.xlane.xlu0 %628
    %630 = vadd.xlane.f32.xlu0 %v518
    %v631 = vpop.xlane.xlu0 %630
    %632 = vadd.xlane.f32.xlu0 %v520
    %v633 = vpop.xlane.xlu0 %632
    %634 = vadd.xlane.f32.xlu0 %v522
    %v635 = vpop.xlane.xlu0 %634
    %636 = vadd.xlane.f32.xlu0 %v524
    %v637 = vpop.xlane.xlu0 %636
    %638 = vadd.xlane.f32.xlu0 %v526
    %v639 = vpop.xlane.xlu0 %638
    %640 = vadd.xlane.f32.xlu0 %v528
    %v641 = vpop.xlane.xlu0 %640
    %v642 = vrcp.pop 128.0
    %v643 = vmul.f32 %v627, %v642
    %v644 = vmul.f32 %v629, %v642
    %v645 = vmul.f32 %v631, %v642
    %v646 = vmul.f32 %v633, %v642
    %v647 = vmul.f32 %v635, %v642
    %v648 = vmul.f32 %v637, %v642
    %v649 = vmul.f32 %v639, %v642
    %v650 = vmul.f32 %v641, %v642
    %v651 = vmul.f32 %v643, %v66
    %v652 = vmul.f32 %v644, %v67
    %v653 = vmul.f32 %v645, %v68
    %v654 = vmul.f32 %v646, %v69
    %v655 = vmul.f32 %v647, %v70
    %v656 = vmul.f32 %v648, %v71
    %v657 = vmul.f32 %v649, %v72
    %v658 = vmul.f32 %v650, %v73
    %659 = vrot.lane.b32.xlu0 %v66, 127
    %v660 = vpop.permute.xlu0 %659
    %661 = vrot.lane.b32.xlu0 %v67, 127
    %v662 = vpop.permute.xlu0 %661
    %663 = vrot.lane.b32.xlu0 %v68, 127
    %v664 = vpop.permute.xlu0 %663
    %665 = vrot.lane.b32.xlu0 %v69, 127
    %v666 = vpop.permute.xlu0 %665
    %667 = vrot.lane.b32.xlu0 %v70, 127
    %v668 = vpop.permute.xlu0 %667
    %669 = vrot.lane.b32.xlu0 %v71, 127
    %v670 = vpop.permute.xlu0 %669
    %671 = vrot.lane.b32.xlu0 %v72, 127
    %v672 = vpop.permute.xlu0 %671
    %673 = vrot.lane.b32.xlu0 %v73, 127
    %v674 = vpop.permute.xlu0 %673
    %v683 = vadd.f32 %v651, %v660
    %v684 = vadd.f32 %v652, %v662
    %v685 = vadd.f32 %v653, %v664
    %v686 = vadd.f32 %v654, %v666
    %v687 = vadd.f32 %v655, %v668
    %v688 = vadd.f32 %v656, %v670
    %v689 = vadd.f32 %v657, %v672
    %v690 = vadd.f32 %v658, %v674
    %v691 = vmax.f32 %v683, 0.0
    %v692 = vmax.f32 %v684, 0.0
    %v693 = vmax.f32 %v685, 0.0
    %v694 = vmax.f32 %v686, 0.0
    %v695 = vmax.f32 %v687, 0.0
    %v696 = vmax.f32 %v688, 0.0
    %v697 = vmax.f32 %v689, 0.0
    %v698 = vmax.f32 %v690, 0.0
    %699 = vadd.xlane.f32.xlu0 %v515
    %v700 = vpop.xlane.xlu0 %699
    %701 = vadd.xlane.f32.xlu0 %v517
    %v702 = vpop.xlane.xlu0 %701
    %703 = vadd.xlane.f32.xlu0 %v519
    %v704 = vpop.xlane.xlu0 %703
    %705 = vadd.xlane.f32.xlu0 %v521
    %v706 = vpop.xlane.xlu0 %705
    %707 = vadd.xlane.f32.xlu0 %v523
    %v708 = vpop.xlane.xlu0 %707
    %709 = vadd.xlane.f32.xlu0 %v525
    %v710 = vpop.xlane.xlu0 %709
    %711 = vadd.xlane.f32.xlu0 %v527
    %v712 = vpop.xlane.xlu0 %711
    %713 = vadd.xlane.f32.xlu0 %v529
    %v714 = vpop.xlane.xlu0 %713
    %v715 = vmul.f32 %v700, %v642
    %v716 = vmul.f32 %v702, %v642
    %v717 = vmul.f32 %v704, %v642
    %v718 = vmul.f32 %v706, %v642
    %v719 = vmul.f32 %v708, %v642
    %v720 = vmul.f32 %v710, %v642
    %v721 = vmul.f32 %v712, %v642
    %v722 = vmul.f32 %v714, %v642
    %v723 = vmul.f32 %v715, %v66
    %v724 = vmul.f32 %v716, %v67
    %v725 = vmul.f32 %v717, %v68
    %v726 = vmul.f32 %v718, %v69
    %v727 = vmul.f32 %v719, %v70
    %v728 = vmul.f32 %v720, %v71
    %v729 = vmul.f32 %v721, %v72
    %v730 = vmul.f32 %v722, %v73
    %v731 = vadd.f32 %v723, %v660
    %v732 = vadd.f32 %v724, %v662
    %v733 = vadd.f32 %v725, %v664
    %v734 = vadd.f32 %v726, %v666
    %v735 = vadd.f32 %v727, %v668
    %v736 = vadd.f32 %v728, %v670
    %v737 = vadd.f32 %v729, %v672
    %v738 = vadd.f32 %v730, %v674
    %v739 = vmax.f32 %v731, 0.0
    %v740 = vmax.f32 %v732, 0.0
    %v741 = vmax.f32 %v733, 0.0
    %v742 = vmax.f32 %v734, 0.0
    %v743 = vmax.f32 %v735, 0.0
    %v744 = vmax.f32 %v736, 0.0
    %v745 = vmax.f32 %v737, 0.0
    %v746 = vmax.f32 %v738, 0.0
    %vm747 = vcmp.lt.s32.totalorder %v91, 128
    %vm748 = vcmp.lt.s32.totalorder %v92, 128
    %v749 = vsel %vm747, 1, 0
    %v750 = vsel %vm748, 1, 0
    %vm751 = vcmp.eq.s32.totalorder %v749, 1
    %vm752 = vcmp.eq.s32.totalorder %v750, 1
    %754 = vset.pattern.permute.xlu0 4
    %755 = vperm.xlu0 %754, %v691
    %v756 = vpop.permute.xlu0 %755
    %759 = vset.pattern.permute.xlu0 4
    %760 = vperm.xlu0 %759, %v692
    %v761 = vpop.permute.xlu0 %760
    %764 = vset.pattern.permute.xlu0 4
    %765 = vperm.xlu0 %764, %v693
    %v766 = vpop.permute.xlu0 %765
    %769 = vset.pattern.permute.xlu0 4
    %770 = vperm.xlu0 %769, %v694
    %v771 = vpop.permute.xlu0 %770
    %774 = vset.pattern.permute.xlu0 4
    %775 = vperm.xlu0 %774, %v695
    %v776 = vpop.permute.xlu0 %775
    %779 = vset.pattern.permute.xlu0 4
    %780 = vperm.xlu0 %779, %v696
    %v781 = vpop.permute.xlu0 %780
    %784 = vset.pattern.permute.xlu0 4
    %785 = vperm.xlu0 %784, %v697
    %v786 = vpop.permute.xlu0 %785
    %789 = vset.pattern.permute.xlu0 4
    %790 = vperm.xlu0 %789, %v698
    %v791 = vpop.permute.xlu0 %790
    %794 = vset.pattern.permute.xlu0 4
    %795 = vperm.xlu0 %794, %v739
    %v796 = vpop.permute.xlu0 %795
    %799 = vset.pattern.permute.xlu0 4
    %800 = vperm.xlu0 %799, %v740
    %v801 = vpop.permute.xlu0 %800
    %804 = vset.pattern.permute.xlu0 4
    %805 = vperm.xlu0 %804, %v741
    %v806 = vpop.permute.xlu0 %805
    %809 = vset.pattern.permute.xlu0 4
    %810 = vperm.xlu0 %809, %v742
    %v811 = vpop.permute.xlu0 %810
    %814 = vset.pattern.permute.xlu0 4
    %815 = vperm.xlu0 %814, %v743
    %v816 = vpop.permute.xlu0 %815
    %819 = vset.pattern.permute.xlu0 4
    %820 = vperm.xlu0 %819, %v744
    %v821 = vpop.permute.xlu0 %820
    %824 = vset.pattern.permute.xlu0 4
    %825 = vperm.xlu0 %824, %v745
    %v826 = vpop.permute.xlu0 %825
    %829 = vset.pattern.permute.xlu0 4
    %830 = vperm.xlu0 %829, %v746
    %v831 = vpop.permute.xlu0 %830
    %v833 = vsel %vm751, %v756, %v796
    %v834 = vsel %vm752, %v756, %v796
    %v835 = vsel %vm751, %v761, %v801
    %v836 = vsel %vm752, %v761, %v801
    %v837 = vsel %vm751, %v766, %v806
    %v838 = vsel %vm752, %v766, %v806
    %v839 = vsel %vm751, %v771, %v811
    %v840 = vsel %vm752, %v771, %v811
    %v841 = vsel %vm751, %v776, %v816
    %v842 = vsel %vm752, %v776, %v816
    %v843 = vsel %vm751, %v781, %v821
    %v844 = vsel %vm752, %v781, %v821
    %v845 = vsel %vm751, %v786, %v826
    %v846 = vsel %vm752, %v786, %v826
    %v847 = vsel %vm751, %v791, %v831
    %v848 = vsel %vm752, %v791, %v831
    %v849 = vmul.f32 %v610, %v833
    %v850 = vmul.f32 %v611, %v834
    %v851 = vmul.f32 %v612, %v835
    %v852 = vmul.f32 %v613, %v836
    %v853 = vmul.f32 %v614, %v837
    %v854 = vmul.f32 %v615, %v838
    %v855 = vmul.f32 %v616, %v839
    %v856 = vmul.f32 %v617, %v840
    %v857 = vmul.f32 %v618, %v841
    %v858 = vmul.f32 %v619, %v842
    %v859 = vmul.f32 %v620, %v843
    %v860 = vmul.f32 %v621, %v844
    %v861 = vmul.f32 %v622, %v845
    %v862 = vmul.f32 %v623, %v846
    %v863 = vmul.f32 %v624, %v847
    %v864 = vmul.f32 %v625, %v848
    %v865 = vld [vmem:[%s10] sm:$0xf]
    %v866 = vld [vmem:[%s10 + $0x4] sm:$0xf]
    %v867 = vld [vmem:[%s10 + $0x8] sm:$0xf]
    %v868 = vld [vmem:[%s10 + $0xc] sm:$0xf]
    %v869 = vld [vmem:[%s10 + $0x10] sm:$0xf]
    %v870 = vld [vmem:[%s10 + $0x14] sm:$0xf]
    %v871 = vld [vmem:[%s10 + $0x18] sm:$0xf]
    %v872 = vld [vmem:[%s10 + $0x1c] sm:$0xf]
    %v873 = vpack.c.bf16 %v851, %v849
    %v874 = vpack.c.bf16 %v852, %v850
    %v875 = vpack.c.bf16 %v855, %v853
    %v876 = vpack.c.bf16 %v856, %v854
    %v877 = vpack.c.bf16 %v859, %v857
    %v878 = vpack.c.bf16 %v860, %v858
    %v879 = vpack.c.bf16 %v863, %v861
    %v880 = vpack.c.bf16 %v864, %v862
    %881 = vset.pattern.permute.xlu0 8
    %882 = vperm.xlu0 %881, %v66
    %v883 = vpop.permute.xlu0 %882
    %885 = vset.pattern.permute.xlu0 8
    %886 = vperm.xlu0 %885, %v67
    %v887 = vpop.permute.xlu0 %886
    %889 = vset.pattern.permute.xlu0 8
    %890 = vperm.xlu0 %889, %v68
    %v891 = vpop.permute.xlu0 %890
    %893 = vset.pattern.permute.xlu0 8
    %894 = vperm.xlu0 %893, %v69
    %v895 = vpop.permute.xlu0 %894
    %897 = vset.pattern.permute.xlu0 8
    %898 = vperm.xlu0 %897, %v70
    %v899 = vpop.permute.xlu0 %898
    %901 = vset.pattern.permute.xlu0 8
    %902 = vperm.xlu0 %901, %v71
    %v903 = vpop.permute.xlu0 %902
    %905 = vset.pattern.permute.xlu0 8
    %906 = vperm.xlu0 %905, %v72
    %v907 = vpop.permute.xlu0 %906
    %909 = vset.pattern.permute.xlu0 8
    %910 = vperm.xlu0 %909, %v73
    %v911 = vpop.permute.xlu0 %910
    %v921 = vunpack.c.l.b16 %v865
    %v922 = vunpack.c.l.b16 %v866
    %v923 = vunpack.c.l.b16 %v867
    %v924 = vunpack.c.l.b16 %v868
    %v925 = vunpack.c.l.b16 %v869
    %v926 = vunpack.c.l.b16 %v870
    %v927 = vunpack.c.l.b16 %v871
    %v928 = vunpack.c.l.b16 %v872
    %v929 = vpack.c.b16 %v922, %v921
    %v930 = vpack.c.b16 %v924, %v923
    %v931 = vpack.c.b16 %v926, %v925
    %v932 = vpack.c.b16 %v928, %v927
    %v934 = vsel %vm205, %v929, 0
    %v937 = vsel %vm205, %v930, 0
    %v940 = vsel %vm205, %v931, 0
    %v943 = vsel %vm205, %v932, 0
    %945 = vmatprep.subr.bf16.mxu0 %v874
    %946 = vmatpush1.bf16.msra.mxu0 %v873
    %947 = vmatprep.subr.bf16.mxu0 %v876
    %948 = vmatpush1.bf16.msra.mxu0 %v875
    %949 = vmatprep.subr.bf16.mxu0 %v878
    %950 = vmatpush1.bf16.msra.mxu0 %v877
    %951 = vmatprep.subr.bf16.mxu0 %v880
    %952 = vmatpush1.bf16.msra.mxu0 %v879
    %953 = vmatprep.subr.bf16.mxu0 0
    %954 = vmatpush1.bf16.msra.mxu0 0
    %955 = vmatprep.subr.bf16.mxu0 0
    %956 = vmatpush1.bf16.msra.mxu0 0
    %957 = vmatprep.subr.bf16.mxu0 0
    %958 = vmatpush1.bf16.msra.mxu0 0
    %959 = vmatprep.subr.bf16.mxu0 0
    %960 = vmatpush1.bf16.msra.mxu0 0
    %961 = vmatprep.subr.bf16.mxu0 0
    %962 = vmatpush1.bf16.msra.mxu0 0
    %963 = vmatprep.subr.bf16.mxu0 0
    %964 = vmatpush1.bf16.msra.mxu0 0
    %965 = vmatprep.subr.bf16.mxu0 0
    %966 = vmatpush1.bf16.msra.mxu0 0
    %967 = vmatprep.subr.bf16.mxu0 0
    %968 = vmatpush1.bf16.msra.mxu0 0
    %969 = vmatprep.subr.bf16.mxu0 0
    %970 = vmatpush1.bf16.msra.mxu0 0
    %971 = vmatprep.subr.bf16.mxu0 0
    %972 = vmatpush1.bf16.msra.mxu0 0
    %973 = vmatprep.subr.bf16.mxu0 0
    %974 = vmatpush1.bf16.msra.mxu0 0
    %975 = vmatprep.subr.bf16.mxu0 0
    %976 = vmatpush1.bf16.msra.mxu0 0
    %977 = vmatprep.mubr.bf16.mxu0 0
    %978 = vmatmul.mubr.bf16.gmra.mrb[0].mxu0 %v934
    %v979 = vpop.f32.mrb[0].mxu0
    %v980 = vadd.f32 %v883, %v979
    %v981 = vpop.f32.mrb[0].mxu0
    %v982 = vadd.f32 %v883, %v981
    %v983 = vpop.f32.mrb[0].mxu0
    %v984 = vadd.f32 %v887, %v983
    %v985 = vpop.f32.mrb[0].mxu0
    %v986 = vadd.f32 %v887, %v985
    %987 = vmatprep.mubr.bf16.mxu0 0
    %988 = vmatmul.mubr.bf16.gmra.mrb[0].mxu0 %v937
    %v989 = vpop.f32.mrb[0].mxu0
    %v990 = vadd.f32 %v891, %v989
    %v991 = vpop.f32.mrb[0].mxu0
    %v992 = vadd.f32 %v891, %v991
    %v993 = vpop.f32.mrb[0].mxu0
    %v994 = vadd.f32 %v895, %v993
    %v995 = vpop.f32.mrb[0].mxu0
    %v996 = vadd.f32 %v895, %v995
    %997 = vmatprep.mubr.bf16.mxu0 0
    %998 = vmatmul.mubr.bf16.gmra.mrb[0].mxu0 %v940
    %v999 = vpop.f32.mrb[0].mxu0
    %v1000 = vadd.f32 %v899, %v999
    %v1001 = vpop.f32.mrb[0].mxu0
    %v1002 = vadd.f32 %v899, %v1001
    %v1003 = vpop.f32.mrb[0].mxu0
    %v1004 = vadd.f32 %v903, %v1003
    %v1005 = vpop.f32.mrb[0].mxu0
    %v1006 = vadd.f32 %v903, %v1005
    %1007 = vmatprep.mubr.bf16.mxu0 0
    %1008 = vmatmul.mubr.bf16.gmra.mrb[0].mxu0 %v943
    %v1009 = vpop.f32.mrb[0].mxu0
    %v1010 = vadd.f32 %v907, %v1009
    %v1011 = vpop.f32.mrb[0].mxu0
    %v1012 = vadd.f32 %v907, %v1011
    %v1013 = vpop.f32.mrb[0].mxu0
    %v1014 = vadd.f32 %v911, %v1013
    %v1015 = vpop.f32.mrb[0].mxu0
    %v1016 = vadd.f32 %v911, %v1015
    %1017 = vdwg.mxu0
    %v1018 = vadd.f32 %v980, %v514
    %v1019 = vadd.f32 %v982, %v515
    %v1020 = vadd.f32 %v984, %v516
    %v1021 = vadd.f32 %v986, %v517
    %v1022 = vadd.f32 %v990, %v518
    %v1023 = vadd.f32 %v992, %v519
    %v1024 = vadd.f32 %v994, %v520
    %v1025 = vadd.f32 %v996, %v521
    %v1026 = vadd.f32 %v1000, %v522
    %v1027 = vadd.f32 %v1002, %v523
    %v1028 = vadd.f32 %v1004, %v524
    %v1029 = vadd.f32 %v1006, %v525
    %v1030 = vadd.f32 %v1010, %v526
    %v1031 = vadd.f32 %v1012, %v527
    %v1032 = vadd.f32 %v1014, %v528
    %v1033 = vadd.f32 %v1016, %v529
    %v1035 = vlaneseq
    %v1036 = vshrl.u32 %v1035, 7
    %v1037 = vsub.s32 0, %v1036
    %v1038 = vrot.slane %v65, %v1037
    %v1039 = vlaneseq
    %v1040 = vshrl.u32 %v1039, 7
    %v1041 = vsub.s32 1, %v1040
    %v1042 = vrot.slane %v65, %v1041
    %v1045 = vmul.f32 %v49, %v1038
    %v1046 = vmul.f32 %v50, %v1042
    %v1047 = vmul.f32 %v51, %v1038
    %v1048 = vmul.f32 %v52, %v1042
    %v1049 = vmul.f32 %v53, %v1038
    %v1050 = vmul.f32 %v54, %v1042
    %v1051 = vmul.f32 %v55, %v1038
    %v1052 = vmul.f32 %v56, %v1042
    %v1053 = vmul.f32 %v57, %v1038
    %v1054 = vmul.f32 %v58, %v1042
    %v1055 = vmul.f32 %v59, %v1038
    %v1056 = vmul.f32 %v60, %v1042
    %v1057 = vmul.f32 %v61, %v1038
    %v1058 = vmul.f32 %v62, %v1042
    %v1059 = vmul.f32 %v63, %v1038
    %v1060 = vmul.f32 %v64, %v1042
    %v1061 = vadd.f32 %v1045, %v1018
    %v1062 = vadd.f32 %v1046, %v1019
    %v1063 = vadd.f32 %v1047, %v1020
    %v1064 = vadd.f32 %v1048, %v1021
    %v1065 = vadd.f32 %v1049, %v1022
    %v1066 = vadd.f32 %v1050, %v1023
    %v1067 = vadd.f32 %v1051, %v1024
    %v1068 = vadd.f32 %v1052, %v1025
    %v1069 = vadd.f32 %v1053, %v1026
    %v1070 = vadd.f32 %v1054, %v1027
    %v1071 = vadd.f32 %v1055, %v1028
    %v1072 = vadd.f32 %v1056, %v1029
    %v1073 = vadd.f32 %v1057, %v1030
    %v1074 = vadd.f32 %v1058, %v1031
    %v1075 = vadd.f32 %v1059, %v1032
    %v1076 = vadd.f32 %v1060, %v1033
    %1077 = vset.pattern.permute.xlu0 5
    %1078 = vperm.xlu0 %1077, %v74
    %v1079 = vpop.permute.xlu0 %1078
    %1081 = vset.pattern.permute.xlu0 5
    %1082 = vperm.xlu0 %1081, %v75
    %v1083 = vpop.permute.xlu0 %1082
    %1085 = vset.pattern.permute.xlu0 5
    %1086 = vperm.xlu0 %1085, %v76
    %v1087 = vpop.permute.xlu0 %1086
    %1089 = vset.pattern.permute.xlu0 5
    %1090 = vperm.xlu0 %1089, %v77
    %v1091 = vpop.permute.xlu0 %1090
    %v1093 = vmul.f32 %v1079, %v259
    %v1094 = vmul.f32 %v1079, %v261
    %v1095 = vmul.f32 %v1083, %v263
    %v1096 = vmul.f32 %v1083, %v265
    %v1097 = vmul.f32 %v1087, %v269
    %v1098 = vmul.f32 %v1087, %v271
    %v1099 = vmul.f32 %v1091, %v273
    %v1100 = vmul.f32 %v1091, %v275
    %1101 = vset.pattern.permute.xlu0 1
    %1102 = vperm.xlu0 %1101, %v74
    %v1103 = vpop.permute.xlu0 %1102
    %1105 = vset.pattern.permute.xlu0 1
    %1106 = vperm.xlu0 %1105, %v75
    %v1107 = vpop.permute.xlu0 %1106
    %1109 = vset.pattern.permute.xlu0 1
    %1110 = vperm.xlu0 %1109, %v76
    %v1111 = vpop.permute.xlu0 %1110
    %1113 = vset.pattern.permute.xlu0 1
    %1114 = vperm.xlu0 %1113, %v77
    %v1115 = vpop.permute.xlu0 %1114
    %v1117 = vadd.f32 %v1103, %v1093
    %v1118 = vadd.f32 %v1103, %v1094
    %v1119 = vadd.f32 %v1107, %v1095
    %v1120 = vadd.f32 %v1107, %v1096
    %v1121 = vadd.f32 %v1111, %v1097
    %v1122 = vadd.f32 %v1111, %v1098
    %v1123 = vadd.f32 %v1115, %v1099
    %v1124 = vadd.f32 %v1115, %v1100
    %1125 = vrot.lane.b32.xlu0 %v259, 3
    %v1126 = vpop.permute.xlu0 %1125
    %1127 = vrot.lane.b32.xlu0 %v263, 3
    %v1128 = vpop.permute.xlu0 %1127
    %1129 = vrot.lane.b32.xlu0 %v269, 3
    %v1130 = vpop.permute.xlu0 %1129
    %1131 = vrot.lane.b32.xlu0 %v273, 3
    %v1132 = vpop.permute.xlu0 %1131
    %1133 = vrot.lane.b32.xlu0 %v261, 3
    %v1134 = vpop.permute.xlu0 %1133
    %1135 = vrot.lane.b32.xlu0 %v265, 3
    %v1136 = vpop.permute.xlu0 %1135
    %1137 = vrot.lane.b32.xlu0 %v271, 3
    %v1138 = vpop.permute.xlu0 %1137
    %1139 = vrot.lane.b32.xlu0 %v275, 3
    %v1140 = vpop.permute.xlu0 %1139
    %vm1141 = vcmp.lt.s32.totalorder %v91, 3
    %v1142 = vsel %vm1141, %v1126, %v1134
    %v1143 = vsel %vm1141, %v1128, %v1136
    %v1144 = vsel %vm1141, %v1130, %v1138
    %v1145 = vsel %vm1141, %v1132, %v1140
    %v1146 = vsel %vm1141, %v1134, %v1126
    %v1147 = vsel %vm1141, %v1136, %v1128
    %v1148 = vsel %vm1141, %v1138, %v1130
    %v1149 = vsel %vm1141, %v1140, %v1132
    %vm1150 = vcmp.ge.s32.totalorder %v93, 3
    %vm1151 = vcmp.ge.s32.totalorder %v94, 3
    %v1152 = vsel %vm1150, 1, 0
    %v1153 = vsel %vm1151, 1, 0
    %vm1154 = vcmp.eq.s32.totalorder %v1152, 1
    %vm1155 = vcmp.eq.s32.totalorder %v1153, 1
    %v1156 = vsel %vm1154, %v1146, 0.0
    %v1157 = vsel %vm1155, %v1142, 0.0
    %v1158 = vsel %vm1154, %v1147, 0.0
    %v1159 = vsel %vm1155, %v1143, 0.0
    %v1160 = vsel %vm1154, %v1148, 0.0
    %v1161 = vsel %vm1155, %v1144, 0.0
    %v1162 = vsel %vm1154, %v1149, 0.0
    %v1163 = vsel %vm1155, %v1145, 0.0
    %1164 = vset.pattern.permute.xlu0 2
    %1165 = vperm.xlu0 %1164, %v74
    %v1166 = vpop.permute.xlu0 %1165
    %1168 = vset.pattern.permute.xlu0 2
    %1169 = vperm.xlu0 %1168, %v75
    %v1170 = vpop.permute.xlu0 %1169
    %1172 = vset.pattern.permute.xlu0 2
    %1173 = vperm.xlu0 %1172, %v76
    %v1174 = vpop.permute.xlu0 %1173
    %1176 = vset.pattern.permute.xlu0 2
    %1177 = vperm.xlu0 %1176, %v77
    %v1178 = vpop.permute.xlu0 %1177
    %v1180 = vmul.f32 %v1166, %v1156
    %v1181 = vmul.f32 %v1166, %v1157
    %v1182 = vmul.f32 %v1170, %v1158
    %v1183 = vmul.f32 %v1170, %v1159
    %v1184 = vmul.f32 %v1174, %v1160
    %v1185 = vmul.f32 %v1174, %v1161
    %v1186 = vmul.f32 %v1178, %v1162
    %v1187 = vmul.f32 %v1178, %v1163
    %v1188 = vadd.f32 %v1117, %v1180
    %v1189 = vadd.f32 %v1118, %v1181
    %v1190 = vadd.f32 %v1119, %v1182
    %v1191 = vadd.f32 %v1120, %v1183
    %v1192 = vadd.f32 %v1121, %v1184
    %v1193 = vadd.f32 %v1122, %v1185
    %v1194 = vadd.f32 %v1123, %v1186
    %v1195 = vadd.f32 %v1124, %v1187
    %1196 = vrot.lane.b32.xlu0 %v259, 2
    %v1197 = vpop.permute.xlu0 %1196
    %1198 = vrot.lane.b32.xlu0 %v263, 2
    %v1199 = vpop.permute.xlu0 %1198
    %1200 = vrot.lane.b32.xlu0 %v269, 2
    %v1201 = vpop.permute.xlu0 %1200
    %1202 = vrot.lane.b32.xlu0 %v273, 2
    %v1203 = vpop.permute.xlu0 %1202
    %1204 = vrot.lane.b32.xlu0 %v261, 2
    %v1205 = vpop.permute.xlu0 %1204
    %1206 = vrot.lane.b32.xlu0 %v265, 2
    %v1207 = vpop.permute.xlu0 %1206
    %1208 = vrot.lane.b32.xlu0 %v271, 2
    %v1209 = vpop.permute.xlu0 %1208
    %1210 = vrot.lane.b32.xlu0 %v275, 2
    %v1211 = vpop.permute.xlu0 %1210
    %vm1212 = vcmp.lt.s32.totalorder %v91, 2
    %v1213 = vsel %vm1212, %v1197, %v1205
    %v1214 = vsel %vm1212, %v1199, %v1207
    %v1215 = vsel %vm1212, %v1201, %v1209
    %v1216 = vsel %vm1212, %v1203, %v1211
    %v1217 = vsel %vm1212, %v1205, %v1197
    %v1218 = vsel %vm1212, %v1207, %v1199
    %v1219 = vsel %vm1212, %v1209, %v1201
    %v1220 = vsel %vm1212, %v1211, %v1203
    %vm1221 = vcmp.ge.s32.totalorder %v93, 2
    %vm1222 = vcmp.ge.s32.totalorder %v94, 2
    %v1223 = vsel %vm1221, 1, 0
    %v1224 = vsel %vm1222, 1, 0
    %vm1225 = vcmp.eq.s32.totalorder %v1223, 1
    %vm1226 = vcmp.eq.s32.totalorder %v1224, 1
    %v1227 = vsel %vm1225, %v1217, 0.0
    %v1228 = vsel %vm1226, %v1213, 0.0
    %v1229 = vsel %vm1225, %v1218, 0.0
    %v1230 = vsel %vm1226, %v1214, 0.0
    %v1231 = vsel %vm1225, %v1219, 0.0
    %v1232 = vsel %vm1226, %v1215, 0.0
    %v1233 = vsel %vm1225, %v1220, 0.0
    %v1234 = vsel %vm1226, %v1216, 0.0
    %1235 = vset.pattern.permute.xlu0 3
    %1236 = vperm.xlu0 %1235, %v74
    %v1237 = vpop.permute.xlu0 %1236
    %1239 = vset.pattern.permute.xlu0 3
    %1240 = vperm.xlu0 %1239, %v75
    %v1241 = vpop.permute.xlu0 %1240
    %1243 = vset.pattern.permute.xlu0 3
    %1244 = vperm.xlu0 %1243, %v76
    %v1245 = vpop.permute.xlu0 %1244
    %1247 = vset.pattern.permute.xlu0 3
    %1248 = vperm.xlu0 %1247, %v77
    %v1249 = vpop.permute.xlu0 %1248
    %v1251 = vmul.f32 %v1237, %v1227
    %v1252 = vmul.f32 %v1237, %v1228
    %v1253 = vmul.f32 %v1241, %v1229
    %v1254 = vmul.f32 %v1241, %v1230
    %v1255 = vmul.f32 %v1245, %v1231
    %v1256 = vmul.f32 %v1245, %v1232
    %v1257 = vmul.f32 %v1249, %v1233
    %v1258 = vmul.f32 %v1249, %v1234
    %v1259 = vadd.f32 %v1188, %v1251
    %v1260 = vadd.f32 %v1189, %v1252
    %v1261 = vadd.f32 %v1190, %v1253
    %v1262 = vadd.f32 %v1191, %v1254
    %v1263 = vadd.f32 %v1192, %v1255
    %v1264 = vadd.f32 %v1193, %v1256
    %v1265 = vadd.f32 %v1194, %v1257
    %v1266 = vadd.f32 %v1195, %v1258
    %1267 = vrot.lane.b32.xlu0 %v259, 1
    %v1268 = vpop.permute.xlu0 %1267
    %1269 = vrot.lane.b32.xlu0 %v263, 1
    %v1270 = vpop.permute.xlu0 %1269
    %1271 = vrot.lane.b32.xlu0 %v269, 1
    %v1272 = vpop.permute.xlu0 %1271
    %1273 = vrot.lane.b32.xlu0 %v273, 1
    %v1274 = vpop.permute.xlu0 %1273
    %1275 = vrot.lane.b32.xlu0 %v261, 1
    %v1276 = vpop.permute.xlu0 %1275
    %1277 = vrot.lane.b32.xlu0 %v265, 1
    %v1278 = vpop.permute.xlu0 %1277
    %1279 = vrot.lane.b32.xlu0 %v271, 1
    %v1280 = vpop.permute.xlu0 %1279
    %1281 = vrot.lane.b32.xlu0 %v275, 1
    %v1282 = vpop.permute.xlu0 %1281
    %vm1283 = vcmp.lt.s32.totalorder %v91, 1
    %v1284 = vsel %vm1283, %v1268, %v1276
    %v1285 = vsel %vm1283, %v1270, %v1278
    %v1286 = vsel %vm1283, %v1272, %v1280
    %v1287 = vsel %vm1283, %v1274, %v1282
    %v1288 = vsel %vm1283, %v1276, %v1268
    %v1289 = vsel %vm1283, %v1278, %v1270
    %v1290 = vsel %vm1283, %v1280, %v1272
    %v1291 = vsel %vm1283, %v1282, %v1274
    %vm1292 = vcmp.ge.s32.totalorder %v93, 1
    %vm1293 = vcmp.ge.s32.totalorder %v94, 1
    %v1294 = vsel %vm1292, 1, 0
    %v1295 = vsel %vm1293, 1, 0
    %vm1296 = vcmp.eq.s32.totalorder %v1294, 1
    %vm1297 = vcmp.eq.s32.totalorder %v1295, 1
    %v1298 = vsel %vm1296, %v1288, 0.0
    %v1299 = vsel %vm1297, %v1284, 0.0
    %v1300 = vsel %vm1296, %v1289, 0.0
    %v1301 = vsel %vm1297, %v1285, 0.0
    %v1302 = vsel %vm1296, %v1290, 0.0
    %v1303 = vsel %vm1297, %v1286, 0.0
    %v1304 = vsel %vm1296, %v1291, 0.0
    %v1305 = vsel %vm1297, %v1287, 0.0
    %1306 = vset.pattern.permute.xlu0 4
    %1307 = vperm.xlu0 %1306, %v74
    %v1308 = vpop.permute.xlu0 %1307
    %1310 = vset.pattern.permute.xlu0 4
    %1311 = vperm.xlu0 %1310, %v75
    %v1312 = vpop.permute.xlu0 %1311
    %1314 = vset.pattern.permute.xlu0 4
    %1315 = vperm.xlu0 %1314, %v76
    %v1316 = vpop.permute.xlu0 %1315
    %1318 = vset.pattern.permute.xlu0 4
    %1319 = vperm.xlu0 %1318, %v77
    %v1320 = vpop.permute.xlu0 %1319
    %v1322 = vmul.f32 %v1308, %v1298
    %v1323 = vmul.f32 %v1308, %v1299
    %v1324 = vmul.f32 %v1312, %v1300
    %v1325 = vmul.f32 %v1312, %v1301
    %v1326 = vmul.f32 %v1316, %v1302
    %v1327 = vmul.f32 %v1316, %v1303
    %v1328 = vmul.f32 %v1320, %v1304
    %v1329 = vmul.f32 %v1320, %v1305
    %v1330 = vadd.f32 %v1259, %v1322
    %v1331 = vadd.f32 %v1260, %v1323
    %v1332 = vadd.f32 %v1261, %v1324
    %v1333 = vadd.f32 %v1262, %v1325
    %v1334 = vadd.f32 %v1263, %v1326
    %v1335 = vadd.f32 %v1264, %v1327
    %v1336 = vadd.f32 %v1265, %v1328
    %v1337 = vadd.f32 %v1266, %v1329
    %1338 = vrot.lane.b32.xlu0 %v259, 127
    %v1339 = vpop.permute.xlu0 %1338
    %1340 = vrot.lane.b32.xlu0 %v263, 127
    %v1341 = vpop.permute.xlu0 %1340
    %1342 = vrot.lane.b32.xlu0 %v269, 127
    %v1343 = vpop.permute.xlu0 %1342
    %1344 = vrot.lane.b32.xlu0 %v273, 127
    %v1345 = vpop.permute.xlu0 %1344
    %1346 = vrot.lane.b32.xlu0 %v261, 127
    %v1347 = vpop.permute.xlu0 %1346
    %1348 = vrot.lane.b32.xlu0 %v265, 127
    %v1349 = vpop.permute.xlu0 %1348
    %1350 = vrot.lane.b32.xlu0 %v271, 127
    %v1351 = vpop.permute.xlu0 %1350
    %1352 = vrot.lane.b32.xlu0 %v275, 127
    %v1353 = vpop.permute.xlu0 %1352
    %vm1354 = vcmp.lt.s32.totalorder %v91, 127
    %v1355 = vsel %vm1354, %v1339, %v1347
    %v1356 = vsel %vm1354, %v1341, %v1349
    %v1357 = vsel %vm1354, %v1343, %v1351
    %v1358 = vsel %vm1354, %v1345, %v1353
    %v1359 = vsel %vm1354, %v1347, %v1339
    %v1360 = vsel %vm1354, %v1349, %v1341
    %v1361 = vsel %vm1354, %v1351, %v1343
    %v1362 = vsel %vm1354, %v1353, %v1345
    %vm1363 = vcmp.lt.s32.totalorder %v93, 127
    %vm1364 = vcmp.lt.s32.totalorder %v94, 127
    %v1365 = vsel %vm1363, 1, 0
    %v1366 = vsel %vm1364, 1, 0
    %vm1367 = vcmp.eq.s32.totalorder %v1365, 1
    %vm1368 = vcmp.eq.s32.totalorder %v1366, 1
    %v1369 = vsel %vm1367, %v1355, 0.0
    %v1370 = vsel %vm1368, %v1359, 0.0
    %v1371 = vsel %vm1367, %v1356, 0.0
    %v1372 = vsel %vm1368, %v1360, 0.0
    %v1373 = vsel %vm1367, %v1357, 0.0
    %v1374 = vsel %vm1368, %v1361, 0.0
    %v1375 = vsel %vm1367, %v1358, 0.0
    %v1376 = vsel %vm1368, %v1362, 0.0
    %1377 = vset.pattern.permute.xlu0 6
    %1378 = vperm.xlu0 %1377, %v74
    %v1379 = vpop.permute.xlu0 %1378
    %1381 = vset.pattern.permute.xlu0 6
    %1382 = vperm.xlu0 %1381, %v75
    %v1383 = vpop.permute.xlu0 %1382
    %1385 = vset.pattern.permute.xlu0 6
    %1386 = vperm.xlu0 %1385, %v76
    %v1387 = vpop.permute.xlu0 %1386
    %1389 = vset.pattern.permute.xlu0 6
    %1390 = vperm.xlu0 %1389, %v77
    %v1391 = vpop.permute.xlu0 %1390
    %v1393 = vmul.f32 %v1379, %v1369
    %v1394 = vmul.f32 %v1379, %v1370
    %v1395 = vmul.f32 %v1383, %v1371
    %v1396 = vmul.f32 %v1383, %v1372
    %v1397 = vmul.f32 %v1387, %v1373
    %v1398 = vmul.f32 %v1387, %v1374
    %v1399 = vmul.f32 %v1391, %v1375
    %v1400 = vmul.f32 %v1391, %v1376
    %v1401 = vadd.f32 %v1330, %v1393
    %v1402 = vadd.f32 %v1331, %v1394
    %v1403 = vadd.f32 %v1332, %v1395
    %v1404 = vadd.f32 %v1333, %v1396
    %v1405 = vadd.f32 %v1334, %v1397
    %v1406 = vadd.f32 %v1335, %v1398
    %v1407 = vadd.f32 %v1336, %v1399
    %v1408 = vadd.f32 %v1337, %v1400
    %1409 = vrot.lane.b32.xlu0 %v259, 126
    %v1410 = vpop.permute.xlu0 %1409
    %1411 = vrot.lane.b32.xlu0 %v263, 126
    %v1412 = vpop.permute.xlu0 %1411
    %1413 = vrot.lane.b32.xlu0 %v269, 126
    %v1414 = vpop.permute.xlu0 %1413
    %1415 = vrot.lane.b32.xlu0 %v273, 126
    %v1416 = vpop.permute.xlu0 %1415
    %1417 = vrot.lane.b32.xlu0 %v261, 126
    %v1418 = vpop.permute.xlu0 %1417
    %1419 = vrot.lane.b32.xlu0 %v265, 126
    %v1420 = vpop.permute.xlu0 %1419
    %1421 = vrot.lane.b32.xlu0 %v271, 126
    %v1422 = vpop.permute.xlu0 %1421
    %1423 = vrot.lane.b32.xlu0 %v275, 126
    %v1424 = vpop.permute.xlu0 %1423
    %vm1425 = vcmp.lt.s32.totalorder %v91, 126
    %v1426 = vsel %vm1425, %v1410, %v1418
    %v1427 = vsel %vm1425, %v1412, %v1420
    %v1428 = vsel %vm1425, %v1414, %v1422
    %v1429 = vsel %vm1425, %v1416, %v1424
    %v1430 = vsel %vm1425, %v1418, %v1410
    %v1431 = vsel %vm1425, %v1420, %v1412
    %v1432 = vsel %vm1425, %v1422, %v1414
    %v1433 = vsel %vm1425, %v1424, %v1416
    %vm1434 = vcmp.lt.s32.totalorder %v93, 126
    %vm1435 = vcmp.lt.s32.totalorder %v94, 126
    %v1436 = vsel %vm1434, 1, 0
    %v1437 = vsel %vm1435, 1, 0
    %vm1438 = vcmp.eq.s32.totalorder %v1436, 1
    %vm1439 = vcmp.eq.s32.totalorder %v1437, 1
    %v1440 = vsel %vm1438, %v1426, 0.0
    %v1441 = vsel %vm1439, %v1430, 0.0
    %v1442 = vsel %vm1438, %v1427, 0.0
    %v1443 = vsel %vm1439, %v1431, 0.0
    %v1444 = vsel %vm1438, %v1428, 0.0
    %v1445 = vsel %vm1439, %v1432, 0.0
    %v1446 = vsel %vm1438, %v1429, 0.0
    %v1447 = vsel %vm1439, %v1433, 0.0
    %1448 = vset.pattern.permute.xlu0 7
    %1449 = vperm.xlu0 %1448, %v74
    %v1450 = vpop.permute.xlu0 %1449
    %1452 = vset.pattern.permute.xlu0 7
    %1453 = vperm.xlu0 %1452, %v75
    %v1454 = vpop.permute.xlu0 %1453
    %1456 = vset.pattern.permute.xlu0 7
    %1457 = vperm.xlu0 %1456, %v76
    %v1458 = vpop.permute.xlu0 %1457
    %1460 = vset.pattern.permute.xlu0 7
    %1461 = vperm.xlu0 %1460, %v77
    %v1462 = vpop.permute.xlu0 %1461
    %v1464 = vmul.f32 %v1450, %v1440
    %v1465 = vmul.f32 %v1450, %v1441
    %v1466 = vmul.f32 %v1454, %v1442
    %v1467 = vmul.f32 %v1454, %v1443
    %v1468 = vmul.f32 %v1458, %v1444
    %v1469 = vmul.f32 %v1458, %v1445
    %v1470 = vmul.f32 %v1462, %v1446
    %v1471 = vmul.f32 %v1462, %v1447
    %v1472 = vadd.f32 %v1401, %v1464
    %v1473 = vadd.f32 %v1402, %v1465
    %v1474 = vadd.f32 %v1403, %v1466
    %v1475 = vadd.f32 %v1404, %v1467
    %v1476 = vadd.f32 %v1405, %v1468
    %v1477 = vadd.f32 %v1406, %v1469
    %v1478 = vadd.f32 %v1407, %v1470
    %v1479 = vadd.f32 %v1408, %v1471
    %1480 = vrot.lane.b32.xlu0 %v259, 125
    %v1481 = vpop.permute.xlu0 %1480
    %1482 = vrot.lane.b32.xlu0 %v263, 125
    %v1483 = vpop.permute.xlu0 %1482
    %1484 = vrot.lane.b32.xlu0 %v269, 125
    %v1485 = vpop.permute.xlu0 %1484
    %1486 = vrot.lane.b32.xlu0 %v273, 125
    %v1487 = vpop.permute.xlu0 %1486
    %1488 = vrot.lane.b32.xlu0 %v261, 125
    %v1489 = vpop.permute.xlu0 %1488
    %1490 = vrot.lane.b32.xlu0 %v265, 125
    %v1491 = vpop.permute.xlu0 %1490
    %1492 = vrot.lane.b32.xlu0 %v271, 125
    %v1493 = vpop.permute.xlu0 %1492
    %1494 = vrot.lane.b32.xlu0 %v275, 125
    %v1495 = vpop.permute.xlu0 %1494
    %vm1496 = vcmp.lt.s32.totalorder %v91, 125
    %v1497 = vsel %vm1496, %v1481, %v1489
    %v1498 = vsel %vm1496, %v1483, %v1491
    %v1499 = vsel %vm1496, %v1485, %v1493
    %v1500 = vsel %vm1496, %v1487, %v1495
    %v1501 = vsel %vm1496, %v1489, %v1481
    %v1502 = vsel %vm1496, %v1491, %v1483
    %v1503 = vsel %vm1496, %v1493, %v1485
    %v1504 = vsel %vm1496, %v1495, %v1487
    %vm1505 = vcmp.lt.s32.totalorder %v93, 125
    %vm1506 = vcmp.lt.s32.totalorder %v94, 125
    %v1507 = vsel %vm1505, 1, 0
    %v1508 = vsel %vm1506, 1, 0
    %vm1509 = vcmp.eq.s32.totalorder %v1507, 1
    %vm1510 = vcmp.eq.s32.totalorder %v1508, 1
    %v1511 = vsel %vm1509, %v1497, 0.0
    %v1512 = vsel %vm1510, %v1501, 0.0
    %v1513 = vsel %vm1509, %v1498, 0.0
    %v1514 = vsel %vm1510, %v1502, 0.0
    %v1515 = vsel %vm1509, %v1499, 0.0
    %v1516 = vsel %vm1510, %v1503, 0.0
    %v1517 = vsel %vm1509, %v1500, 0.0
    %v1518 = vsel %vm1510, %v1504, 0.0
    %1519 = vset.pattern.permute.xlu0 8
    %1520 = vperm.xlu0 %1519, %v74
    %v1521 = vpop.permute.xlu0 %1520
    %1523 = vset.pattern.permute.xlu0 8
    %1524 = vperm.xlu0 %1523, %v75
    %v1525 = vpop.permute.xlu0 %1524
    %1527 = vset.pattern.permute.xlu0 8
    %1528 = vperm.xlu0 %1527, %v76
    %v1529 = vpop.permute.xlu0 %1528
    %1531 = vset.pattern.permute.xlu0 8
    %1532 = vperm.xlu0 %1531, %v77
    %v1533 = vpop.permute.xlu0 %1532
    %v1535 = vmul.f32 %v1521, %v1511
    %v1536 = vmul.f32 %v1521, %v1512
    %v1537 = vmul.f32 %v1525, %v1513
    %v1538 = vmul.f32 %v1525, %v1514
    %v1539 = vmul.f32 %v1529, %v1515
    %v1540 = vmul.f32 %v1529, %v1516
    %v1541 = vmul.f32 %v1533, %v1517
    %v1542 = vmul.f32 %v1533, %v1518
    %v1543 = vadd.f32 %v1472, %v1535
    %v1544 = vadd.f32 %v1473, %v1536
    %v1545 = vadd.f32 %v1474, %v1537
    %v1546 = vadd.f32 %v1475, %v1538
    %v1547 = vadd.f32 %v1476, %v1539
    %v1548 = vadd.f32 %v1477, %v1540
    %v1549 = vadd.f32 %v1478, %v1541
    %v1550 = vadd.f32 %v1479, %v1542
    %1551 = vset.pattern.permute.xlu0 5
    %1552 = vperm.xlu0 %1551, %v78
    %v1553 = vpop.permute.xlu0 %1552
    %1555 = vset.pattern.permute.xlu0 5
    %1556 = vperm.xlu0 %1555, %v79
    %v1557 = vpop.permute.xlu0 %1556
    %1559 = vset.pattern.permute.xlu0 5
    %1560 = vperm.xlu0 %1559, %v80
    %v1561 = vpop.permute.xlu0 %1560
    %1563 = vset.pattern.permute.xlu0 5
    %1564 = vperm.xlu0 %1563, %v81
    %v1565 = vpop.permute.xlu0 %1564
    %v1567 = vmul.f32 %v1553, %v279
    %v1568 = vmul.f32 %v1553, %v281
    %v1569 = vmul.f32 %v1557, %v283
    %v1570 = vmul.f32 %v1557, %v285
    %v1571 = vmul.f32 %v1561, %v289
    %v1572 = vmul.f32 %v1561, %v291
    %v1573 = vmul.f32 %v1565, %v293
    %v1574 = vmul.f32 %v1565, %v295
    %1575 = vset.pattern.permute.xlu0 1
    %1576 = vperm.xlu0 %1575, %v78
    %v1577 = vpop.permute.xlu0 %1576
    %1579 = vset.pattern.permute.xlu0 1
    %1580 = vperm.xlu0 %1579, %v79
    %v1581 = vpop.permute.xlu0 %1580
    %1583 = vset.pattern.permute.xlu0 1
    %1584 = vperm.xlu0 %1583, %v80
    %v1585 = vpop.permute.xlu0 %1584
    %1587 = vset.pattern.permute.xlu0 1
    %1588 = vperm.xlu0 %1587, %v81
    %v1589 = vpop.permute.xlu0 %1588
    %v1591 = vadd.f32 %v1577, %v1567
    %v1592 = vadd.f32 %v1577, %v1568
    %v1593 = vadd.f32 %v1581, %v1569
    %v1594 = vadd.f32 %v1581, %v1570
    %v1595 = vadd.f32 %v1585, %v1571
    %v1596 = vadd.f32 %v1585, %v1572
    %v1597 = vadd.f32 %v1589, %v1573
    %v1598 = vadd.f32 %v1589, %v1574
    %1599 = vrot.lane.b32.xlu0 %v279, 3
    %v1600 = vpop.permute.xlu0 %1599
    %1601 = vrot.lane.b32.xlu0 %v283, 3
    %v1602 = vpop.permute.xlu0 %1601
    %1603 = vrot.lane.b32.xlu0 %v289, 3
    %v1604 = vpop.permute.xlu0 %1603
    %1605 = vrot.lane.b32.xlu0 %v293, 3
    %v1606 = vpop.permute.xlu0 %1605
    %1607 = vrot.lane.b32.xlu0 %v281, 3
    %v1608 = vpop.permute.xlu0 %1607
    %1609 = vrot.lane.b32.xlu0 %v285, 3
    %v1610 = vpop.permute.xlu0 %1609
    %1611 = vrot.lane.b32.xlu0 %v291, 3
    %v1612 = vpop.permute.xlu0 %1611
    %1613 = vrot.lane.b32.xlu0 %v295, 3
    %v1614 = vpop.permute.xlu0 %1613
    %v1615 = vsel %vm1141, %v1600, %v1608
    %v1616 = vsel %vm1141, %v1602, %v1610
    %v1617 = vsel %vm1141, %v1604, %v1612
    %v1618 = vsel %vm1141, %v1606, %v1614
    %v1619 = vsel %vm1141, %v1608, %v1600
    %v1620 = vsel %vm1141, %v1610, %v1602
    %v1621 = vsel %vm1141, %v1612, %v1604
    %v1622 = vsel %vm1141, %v1614, %v1606
    %v1623 = vsel %vm1154, %v1619, 0.0
    %v1624 = vsel %vm1155, %v1615, 0.0
    %v1625 = vsel %vm1154, %v1620, 0.0
    %v1626 = vsel %vm1155, %v1616, 0.0
    %v1627 = vsel %vm1154, %v1621, 0.0
    %v1628 = vsel %vm1155, %v1617, 0.0
    %v1629 = vsel %vm1154, %v1622, 0.0
    %v1630 = vsel %vm1155, %v1618, 0.0
    %1631 = vset.pattern.permute.xlu0 2
    %1632 = vperm.xlu0 %1631, %v78
    %v1633 = vpop.permute.xlu0 %1632
    %1635 = vset.pattern.permute.xlu0 2
    %1636 = vperm.xlu0 %1635, %v79
    %v1637 = vpop.permute.xlu0 %1636
    %1639 = vset.pattern.permute.xlu0 2
    %1640 = vperm.xlu0 %1639, %v80
    %v1641 = vpop.permute.xlu0 %1640
    %1643 = vset.pattern.permute.xlu0 2
    %1644 = vperm.xlu0 %1643, %v81
    %v1645 = vpop.permute.xlu0 %1644
    %v1647 = vmul.f32 %v1633, %v1623
    %v1648 = vmul.f32 %v1633, %v1624
    %v1649 = vmul.f32 %v1637, %v1625
    %v1650 = vmul.f32 %v1637, %v1626
    %v1651 = vmul.f32 %v1641, %v1627
    %v1652 = vmul.f32 %v1641, %v1628
    %v1653 = vmul.f32 %v1645, %v1629
    %v1654 = vmul.f32 %v1645, %v1630
    %v1655 = vadd.f32 %v1591, %v1647
    %v1656 = vadd.f32 %v1592, %v1648
    %v1657 = vadd.f32 %v1593, %v1649
    %v1658 = vadd.f32 %v1594, %v1650
    %v1659 = vadd.f32 %v1595, %v1651
    %v1660 = vadd.f32 %v1596, %v1652
    %v1661 = vadd.f32 %v1597, %v1653
    %v1662 = vadd.f32 %v1598, %v1654
    %1663 = vrot.lane.b32.xlu0 %v279, 2
    %v1664 = vpop.permute.xlu0 %1663
    %1665 = vrot.lane.b32.xlu0 %v283, 2
    %v1666 = vpop.permute.xlu0 %1665
    %1667 = vrot.lane.b32.xlu0 %v289, 2
    %v1668 = vpop.permute.xlu0 %1667
    %1669 = vrot.lane.b32.xlu0 %v293, 2
    %v1670 = vpop.permute.xlu0 %1669
    %1671 = vrot.lane.b32.xlu0 %v281, 2
    %v1672 = vpop.permute.xlu0 %1671
    %1673 = vrot.lane.b32.xlu0 %v285, 2
    %v1674 = vpop.permute.xlu0 %1673
    %1675 = vrot.lane.b32.xlu0 %v291, 2
    %v1676 = vpop.permute.xlu0 %1675
    %1677 = vrot.lane.b32.xlu0 %v295, 2
    %v1678 = vpop.permute.xlu0 %1677
    %v1679 = vsel %vm1212, %v1664, %v1672
    %v1680 = vsel %vm1212, %v1666, %v1674
    %v1681 = vsel %vm1212, %v1668, %v1676
    %v1682 = vsel %vm1212, %v1670, %v1678
    %v1683 = vsel %vm1212, %v1672, %v1664
    %v1684 = vsel %vm1212, %v1674, %v1666
    %v1685 = vsel %vm1212, %v1676, %v1668
    %v1686 = vsel %vm1212, %v1678, %v1670
    %v1687 = vsel %vm1225, %v1683, 0.0
    %v1688 = vsel %vm1226, %v1679, 0.0
    %v1689 = vsel %vm1225, %v1684, 0.0
    %v1690 = vsel %vm1226, %v1680, 0.0
    %v1691 = vsel %vm1225, %v1685, 0.0
    %v1692 = vsel %vm1226, %v1681, 0.0
    %v1693 = vsel %vm1225, %v1686, 0.0
    %v1694 = vsel %vm1226, %v1682, 0.0
    %1695 = vset.pattern.permute.xlu0 3
    %1696 = vperm.xlu0 %1695, %v78
    %v1697 = vpop.permute.xlu0 %1696
    %1699 = vset.pattern.permute.xlu0 3
    %1700 = vperm.xlu0 %1699, %v79
    %v1701 = vpop.permute.xlu0 %1700
    %1703 = vset.pattern.permute.xlu0 3
    %1704 = vperm.xlu0 %1703, %v80
    %v1705 = vpop.permute.xlu0 %1704
    %1707 = vset.pattern.permute.xlu0 3
    %1708 = vperm.xlu0 %1707, %v81
    %v1709 = vpop.permute.xlu0 %1708
    %v1711 = vmul.f32 %v1697, %v1687
    %v1712 = vmul.f32 %v1697, %v1688
    %v1713 = vmul.f32 %v1701, %v1689
    %v1714 = vmul.f32 %v1701, %v1690
    %v1715 = vmul.f32 %v1705, %v1691
    %v1716 = vmul.f32 %v1705, %v1692
    %v1717 = vmul.f32 %v1709, %v1693
    %v1718 = vmul.f32 %v1709, %v1694
    %v1719 = vadd.f32 %v1655, %v1711
    %v1720 = vadd.f32 %v1656, %v1712
    %v1721 = vadd.f32 %v1657, %v1713
    %v1722 = vadd.f32 %v1658, %v1714
    %v1723 = vadd.f32 %v1659, %v1715
    %v1724 = vadd.f32 %v1660, %v1716
    %v1725 = vadd.f32 %v1661, %v1717
    %v1726 = vadd.f32 %v1662, %v1718
    %1727 = vrot.lane.b32.xlu0 %v279, 1
    %v1728 = vpop.permute.xlu0 %1727
    %1729 = vrot.lane.b32.xlu0 %v283, 1
    %v1730 = vpop.permute.xlu0 %1729
    %1731 = vrot.lane.b32.xlu0 %v289, 1
    %v1732 = vpop.permute.xlu0 %1731
    %1733 = vrot.lane.b32.xlu0 %v293, 1
    %v1734 = vpop.permute.xlu0 %1733
    %1735 = vrot.lane.b32.xlu0 %v281, 1
    %v1736 = vpop.permute.xlu0 %1735
    %1737 = vrot.lane.b32.xlu0 %v285, 1
    %v1738 = vpop.permute.xlu0 %1737
    %1739 = vrot.lane.b32.xlu0 %v291, 1
    %v1740 = vpop.permute.xlu0 %1739
    %1741 = vrot.lane.b32.xlu0 %v295, 1
    %v1742 = vpop.permute.xlu0 %1741
    %v1743 = vsel %vm1283, %v1728, %v1736
    %v1744 = vsel %vm1283, %v1730, %v1738
    %v1745 = vsel %vm1283, %v1732, %v1740
    %v1746 = vsel %vm1283, %v1734, %v1742
    %v1747 = vsel %vm1283, %v1736, %v1728
    %v1748 = vsel %vm1283, %v1738, %v1730
    %v1749 = vsel %vm1283, %v1740, %v1732
    %v1750 = vsel %vm1283, %v1742, %v1734
    %v1751 = vsel %vm1296, %v1747, 0.0
    %v1752 = vsel %vm1297, %v1743, 0.0
    %v1753 = vsel %vm1296, %v1748, 0.0
    %v1754 = vsel %vm1297, %v1744, 0.0
    %v1755 = vsel %vm1296, %v1749, 0.0
    %v1756 = vsel %vm1297, %v1745, 0.0
    %v1757 = vsel %vm1296, %v1750, 0.0
    %v1758 = vsel %vm1297, %v1746, 0.0
    %1759 = vset.pattern.permute.xlu0 4
    %1760 = vperm.xlu0 %1759, %v78
    %v1761 = vpop.permute.xlu0 %1760
    %1763 = vset.pattern.permute.xlu0 4
    %1764 = vperm.xlu0 %1763, %v79
    %v1765 = vpop.permute.xlu0 %1764
    %1767 = vset.pattern.permute.xlu0 4
    %1768 = vperm.xlu0 %1767, %v80
    %v1769 = vpop.permute.xlu0 %1768
    %1771 = vset.pattern.permute.xlu0 4
    %1772 = vperm.xlu0 %1771, %v81
    %v1773 = vpop.permute.xlu0 %1772
    %v1775 = vmul.f32 %v1761, %v1751
    %v1776 = vmul.f32 %v1761, %v1752
    %v1777 = vmul.f32 %v1765, %v1753
    %v1778 = vmul.f32 %v1765, %v1754
    %v1779 = vmul.f32 %v1769, %v1755
    %v1780 = vmul.f32 %v1769, %v1756
    %v1781 = vmul.f32 %v1773, %v1757
    %v1782 = vmul.f32 %v1773, %v1758
    %v1783 = vadd.f32 %v1719, %v1775
    %v1784 = vadd.f32 %v1720, %v1776
    %v1785 = vadd.f32 %v1721, %v1777
    %v1786 = vadd.f32 %v1722, %v1778
    %v1787 = vadd.f32 %v1723, %v1779
    %v1788 = vadd.f32 %v1724, %v1780
    %v1789 = vadd.f32 %v1725, %v1781
    %v1790 = vadd.f32 %v1726, %v1782
    %1791 = vrot.lane.b32.xlu0 %v279, 127
    %v1792 = vpop.permute.xlu0 %1791
    %1793 = vrot.lane.b32.xlu0 %v283, 127
    %v1794 = vpop.permute.xlu0 %1793
    %1795 = vrot.lane.b32.xlu0 %v289, 127
    %v1796 = vpop.permute.xlu0 %1795
    %1797 = vrot.lane.b32.xlu0 %v293, 127
    %v1798 = vpop.permute.xlu0 %1797
    %1799 = vrot.lane.b32.xlu0 %v281, 127
    %v1800 = vpop.permute.xlu0 %1799
    %1801 = vrot.lane.b32.xlu0 %v285, 127
    %v1802 = vpop.permute.xlu0 %1801
    %1803 = vrot.lane.b32.xlu0 %v291, 127
    %v1804 = vpop.permute.xlu0 %1803
    %1805 = vrot.lane.b32.xlu0 %v295, 127
    %v1806 = vpop.permute.xlu0 %1805
    %v1807 = vsel %vm1354, %v1792, %v1800
    %v1808 = vsel %vm1354, %v1794, %v1802
    %v1809 = vsel %vm1354, %v1796, %v1804
    %v1810 = vsel %vm1354, %v1798, %v1806
    %v1811 = vsel %vm1354, %v1800, %v1792
    %v1812 = vsel %vm1354, %v1802, %v1794
    %v1813 = vsel %vm1354, %v1804, %v1796
    %v1814 = vsel %vm1354, %v1806, %v1798
    %v1815 = vsel %vm1367, %v1807, 0.0
    %v1816 = vsel %vm1368, %v1811, 0.0
    %v1817 = vsel %vm1367, %v1808, 0.0
    %v1818 = vsel %vm1368, %v1812, 0.0
    %v1819 = vsel %vm1367, %v1809, 0.0
    %v1820 = vsel %vm1368, %v1813, 0.0
    %v1821 = vsel %vm1367, %v1810, 0.0
    %v1822 = vsel %vm1368, %v1814, 0.0
    %1823 = vset.pattern.permute.xlu0 6
    %1824 = vperm.xlu0 %1823, %v78
    %v1825 = vpop.permute.xlu0 %1824
    %1827 = vset.pattern.permute.xlu0 6
    %1828 = vperm.xlu0 %1827, %v79
    %v1829 = vpop.permute.xlu0 %1828
    %1831 = vset.pattern.permute.xlu0 6
    %1832 = vperm.xlu0 %1831, %v80
    %v1833 = vpop.permute.xlu0 %1832
    %1835 = vset.pattern.permute.xlu0 6
    %1836 = vperm.xlu0 %1835, %v81
    %v1837 = vpop.permute.xlu0 %1836
    %v1839 = vmul.f32 %v1825, %v1815
    %v1840 = vmul.f32 %v1825, %v1816
    %v1841 = vmul.f32 %v1829, %v1817
    %v1842 = vmul.f32 %v1829, %v1818
    %v1843 = vmul.f32 %v1833, %v1819
    %v1844 = vmul.f32 %v1833, %v1820
    %v1845 = vmul.f32 %v1837, %v1821
    %v1846 = vmul.f32 %v1837, %v1822
    %v1847 = vadd.f32 %v1783, %v1839
    %v1848 = vadd.f32 %v1784, %v1840
    %v1849 = vadd.f32 %v1785, %v1841
    %v1850 = vadd.f32 %v1786, %v1842
    %v1851 = vadd.f32 %v1787, %v1843
    %v1852 = vadd.f32 %v1788, %v1844
    %v1853 = vadd.f32 %v1789, %v1845
    %v1854 = vadd.f32 %v1790, %v1846
    %1855 = vrot.lane.b32.xlu0 %v279, 126
    %v1856 = vpop.permute.xlu0 %1855
    %1857 = vrot.lane.b32.xlu0 %v283, 126
    %v1858 = vpop.permute.xlu0 %1857
    %1859 = vrot.lane.b32.xlu0 %v289, 126
    %v1860 = vpop.permute.xlu0 %1859
    %1861 = vrot.lane.b32.xlu0 %v293, 126
    %v1862 = vpop.permute.xlu0 %1861
    %1863 = vrot.lane.b32.xlu0 %v281, 126
    %v1864 = vpop.permute.xlu0 %1863
    %1865 = vrot.lane.b32.xlu0 %v285, 126
    %v1866 = vpop.permute.xlu0 %1865
    %1867 = vrot.lane.b32.xlu0 %v291, 126
    %v1868 = vpop.permute.xlu0 %1867
    %1869 = vrot.lane.b32.xlu0 %v295, 126
    %v1870 = vpop.permute.xlu0 %1869
    %v1871 = vsel %vm1425, %v1856, %v1864
    %v1872 = vsel %vm1425, %v1858, %v1866
    %v1873 = vsel %vm1425, %v1860, %v1868
    %v1874 = vsel %vm1425, %v1862, %v1870
    %v1875 = vsel %vm1425, %v1864, %v1856
    %v1876 = vsel %vm1425, %v1866, %v1858
    %v1877 = vsel %vm1425, %v1868, %v1860
    %v1878 = vsel %vm1425, %v1870, %v1862
    %v1879 = vsel %vm1438, %v1871, 0.0
    %v1880 = vsel %vm1439, %v1875, 0.0
    %v1881 = vsel %vm1438, %v1872, 0.0
    %v1882 = vsel %vm1439, %v1876, 0.0
    %v1883 = vsel %vm1438, %v1873, 0.0
    %v1884 = vsel %vm1439, %v1877, 0.0
    %v1885 = vsel %vm1438, %v1874, 0.0
    %v1886 = vsel %vm1439, %v1878, 0.0
    %1887 = vset.pattern.permute.xlu0 7
    %1888 = vperm.xlu0 %1887, %v78
    %v1889 = vpop.permute.xlu0 %1888
    %1891 = vset.pattern.permute.xlu0 7
    %1892 = vperm.xlu0 %1891, %v79
    %v1893 = vpop.permute.xlu0 %1892
    %1895 = vset.pattern.permute.xlu0 7
    %1896 = vperm.xlu0 %1895, %v80
    %v1897 = vpop.permute.xlu0 %1896
    %1899 = vset.pattern.permute.xlu0 7
    %1900 = vperm.xlu0 %1899, %v81
    %v1901 = vpop.permute.xlu0 %1900
    %v1903 = vmul.f32 %v1889, %v1879
    %v1904 = vmul.f32 %v1889, %v1880
    %v1905 = vmul.f32 %v1893, %v1881
    %v1906 = vmul.f32 %v1893, %v1882
    %v1907 = vmul.f32 %v1897, %v1883
    %v1908 = vmul.f32 %v1897, %v1884
    %v1909 = vmul.f32 %v1901, %v1885
    %v1910 = vmul.f32 %v1901, %v1886
    %v1911 = vadd.f32 %v1847, %v1903
    %v1912 = vadd.f32 %v1848, %v1904
    %v1913 = vadd.f32 %v1849, %v1905
    %v1914 = vadd.f32 %v1850, %v1906
    %v1915 = vadd.f32 %v1851, %v1907
    %v1916 = vadd.f32 %v1852, %v1908
    %v1917 = vadd.f32 %v1853, %v1909
    %v1918 = vadd.f32 %v1854, %v1910
    %1919 = vrot.lane.b32.xlu0 %v279, 125
    %v1920 = vpop.permute.xlu0 %1919
    %1921 = vrot.lane.b32.xlu0 %v283, 125
    %v1922 = vpop.permute.xlu0 %1921
    %1923 = vrot.lane.b32.xlu0 %v289, 125
    %v1924 = vpop.permute.xlu0 %1923
    %1925 = vrot.lane.b32.xlu0 %v293, 125
    %v1926 = vpop.permute.xlu0 %1925
    %1927 = vrot.lane.b32.xlu0 %v281, 125
    %v1928 = vpop.permute.xlu0 %1927
    %1929 = vrot.lane.b32.xlu0 %v285, 125
    %v1930 = vpop.permute.xlu0 %1929
    %1931 = vrot.lane.b32.xlu0 %v291, 125
    %v1932 = vpop.permute.xlu0 %1931
    %1933 = vrot.lane.b32.xlu0 %v295, 125
    %v1934 = vpop.permute.xlu0 %1933
    %v1935 = vsel %vm1496, %v1920, %v1928
    %v1936 = vsel %vm1496, %v1922, %v1930
    %v1937 = vsel %vm1496, %v1924, %v1932
    %v1938 = vsel %vm1496, %v1926, %v1934
    %v1939 = vsel %vm1496, %v1928, %v1920
    %v1940 = vsel %vm1496, %v1930, %v1922
    %v1941 = vsel %vm1496, %v1932, %v1924
    %v1942 = vsel %vm1496, %v1934, %v1926
    %v1943 = vsel %vm1509, %v1935, 0.0
    %v1944 = vsel %vm1510, %v1939, 0.0
    %v1945 = vsel %vm1509, %v1936, 0.0
    %v1946 = vsel %vm1510, %v1940, 0.0
    %v1947 = vsel %vm1509, %v1937, 0.0
    %v1948 = vsel %vm1510, %v1941, 0.0
    %v1949 = vsel %vm1509, %v1938, 0.0
    %v1950 = vsel %vm1510, %v1942, 0.0
    %1951 = vset.pattern.permute.xlu0 8
    %1952 = vperm.xlu0 %1951, %v78
    %v1953 = vpop.permute.xlu0 %1952
    %1955 = vset.pattern.permute.xlu0 8
    %1956 = vperm.xlu0 %1955, %v79
    %v1957 = vpop.permute.xlu0 %1956
    %1959 = vset.pattern.permute.xlu0 8
    %1960 = vperm.xlu0 %1959, %v80
    %v1961 = vpop.permute.xlu0 %1960
    %1963 = vset.pattern.permute.xlu0 8
    %1964 = vperm.xlu0 %1963, %v81
    %v1965 = vpop.permute.xlu0 %1964
    %v1967 = vmul.f32 %v1953, %v1943
    %v1968 = vmul.f32 %v1953, %v1944
    %v1969 = vmul.f32 %v1957, %v1945
    %v1970 = vmul.f32 %v1957, %v1946
    %v1971 = vmul.f32 %v1961, %v1947
    %v1972 = vmul.f32 %v1961, %v1948
    %v1973 = vmul.f32 %v1965, %v1949
    %v1974 = vmul.f32 %v1965, %v1950
    %v1975 = vadd.f32 %v1911, %v1967
    %v1976 = vadd.f32 %v1912, %v1968
    %v1977 = vadd.f32 %v1913, %v1969
    %v1978 = vadd.f32 %v1914, %v1970
    %v1979 = vadd.f32 %v1915, %v1971
    %v1980 = vadd.f32 %v1916, %v1972
    %v1981 = vadd.f32 %v1917, %v1973
    %v1982 = vadd.f32 %v1918, %v1974
    %1983 = vset.pattern.permute.xlu0 5
    %1984 = vperm.xlu0 %1983, %v82
    %v1985 = vpop.permute.xlu0 %1984
    %1987 = vset.pattern.permute.xlu0 5
    %1988 = vperm.xlu0 %1987, %v83
    %v1989 = vpop.permute.xlu0 %1988
    %1991 = vset.pattern.permute.xlu0 5
    %1992 = vperm.xlu0 %1991, %v84
    %v1993 = vpop.permute.xlu0 %1992
    %1995 = vset.pattern.permute.xlu0 5
    %1996 = vperm.xlu0 %1995, %v85
    %v1997 = vpop.permute.xlu0 %1996
    %v1999 = vmul.f32 %v1985, %v299
    %v2000 = vmul.f32 %v1985, %v301
    %v2001 = vmul.f32 %v1989, %v303
    %v2002 = vmul.f32 %v1989, %v305
    %v2003 = vmul.f32 %v1993, %v309
    %v2004 = vmul.f32 %v1993, %v311
    %v2005 = vmul.f32 %v1997, %v313
    %v2006 = vmul.f32 %v1997, %v315
    %2007 = vset.pattern.permute.xlu0 1
    %2008 = vperm.xlu0 %2007, %v82
    %v2009 = vpop.permute.xlu0 %2008
    %2011 = vset.pattern.permute.xlu0 1
    %2012 = vperm.xlu0 %2011, %v83
    %v2013 = vpop.permute.xlu0 %2012
    %2015 = vset.pattern.permute.xlu0 1
    %2016 = vperm.xlu0 %2015, %v84
    %v2017 = vpop.permute.xlu0 %2016
    %2019 = vset.pattern.permute.xlu0 1
    %2020 = vperm.xlu0 %2019, %v85
    %v2021 = vpop.permute.xlu0 %2020
    %v2023 = vadd.f32 %v2009, %v1999
    %v2024 = vadd.f32 %v2009, %v2000
    %v2025 = vadd.f32 %v2013, %v2001
    %v2026 = vadd.f32 %v2013, %v2002
    %v2027 = vadd.f32 %v2017, %v2003
    %v2028 = vadd.f32 %v2017, %v2004
    %v2029 = vadd.f32 %v2021, %v2005
    %v2030 = vadd.f32 %v2021, %v2006
    %2031 = vrot.lane.b32.xlu0 %v299, 3
    %v2032 = vpop.permute.xlu0 %2031
    %2033 = vrot.lane.b32.xlu0 %v303, 3
    %v2034 = vpop.permute.xlu0 %2033
    %2035 = vrot.lane.b32.xlu0 %v309, 3
    %v2036 = vpop.permute.xlu0 %2035
    %2037 = vrot.lane.b32.xlu0 %v313, 3
    %v2038 = vpop.permute.xlu0 %2037
    %2039 = vrot.lane.b32.xlu0 %v301, 3
    %v2040 = vpop.permute.xlu0 %2039
    %2041 = vrot.lane.b32.xlu0 %v305, 3
    %v2042 = vpop.permute.xlu0 %2041
    %2043 = vrot.lane.b32.xlu0 %v311, 3
    %v2044 = vpop.permute.xlu0 %2043
    %2045 = vrot.lane.b32.xlu0 %v315, 3
    %v2046 = vpop.permute.xlu0 %2045
    %v2047 = vsel %vm1141, %v2032, %v2040
    %v2048 = vsel %vm1141, %v2034, %v2042
    %v2049 = vsel %vm1141, %v2036, %v2044
    %v2050 = vsel %vm1141, %v2038, %v2046
    %v2051 = vsel %vm1141, %v2040, %v2032
    %v2052 = vsel %vm1141, %v2042, %v2034
    %v2053 = vsel %vm1141, %v2044, %v2036
    %v2054 = vsel %vm1141, %v2046, %v2038
    %v2055 = vsel %vm1154, %v2051, 0.0
    %v2056 = vsel %vm1155, %v2047, 0.0
    %v2057 = vsel %vm1154, %v2052, 0.0
    %v2058 = vsel %vm1155, %v2048, 0.0
    %v2059 = vsel %vm1154, %v2053, 0.0
    %v2060 = vsel %vm1155, %v2049, 0.0
    %v2061 = vsel %vm1154, %v2054, 0.0
    %v2062 = vsel %vm1155, %v2050, 0.0
    %2063 = vset.pattern.permute.xlu0 2
    %2064 = vperm.xlu0 %2063, %v82
    %v2065 = vpop.permute.xlu0 %2064
    %2067 = vset.pattern.permute.xlu0 2
    %2068 = vperm.xlu0 %2067, %v83
    %v2069 = vpop.permute.xlu0 %2068
    %2071 = vset.pattern.permute.xlu0 2
    %2072 = vperm.xlu0 %2071, %v84
    %v2073 = vpop.permute.xlu0 %2072
    %2075 = vset.pattern.permute.xlu0 2
    %2076 = vperm.xlu0 %2075, %v85
    %v2077 = vpop.permute.xlu0 %2076
    %v2079 = vmul.f32 %v2065, %v2055
    %v2080 = vmul.f32 %v2065, %v2056
    %v2081 = vmul.f32 %v2069, %v2057
    %v2082 = vmul.f32 %v2069, %v2058
    %v2083 = vmul.f32 %v2073, %v2059
    %v2084 = vmul.f32 %v2073, %v2060
    %v2085 = vmul.f32 %v2077, %v2061
    %v2086 = vmul.f32 %v2077, %v2062
    %v2087 = vadd.f32 %v2023, %v2079
    %v2088 = vadd.f32 %v2024, %v2080
    %v2089 = vadd.f32 %v2025, %v2081
    %v2090 = vadd.f32 %v2026, %v2082
    %v2091 = vadd.f32 %v2027, %v2083
    %v2092 = vadd.f32 %v2028, %v2084
    %v2093 = vadd.f32 %v2029, %v2085
    %v2094 = vadd.f32 %v2030, %v2086
    %2095 = vrot.lane.b32.xlu0 %v299, 2
    %v2096 = vpop.permute.xlu0 %2095
    %2097 = vrot.lane.b32.xlu0 %v303, 2
    %v2098 = vpop.permute.xlu0 %2097
    %2099 = vrot.lane.b32.xlu0 %v309, 2
    %v2100 = vpop.permute.xlu0 %2099
    %2101 = vrot.lane.b32.xlu0 %v313, 2
    %v2102 = vpop.permute.xlu0 %2101
    %2103 = vrot.lane.b32.xlu0 %v301, 2
    %v2104 = vpop.permute.xlu0 %2103
    %2105 = vrot.lane.b32.xlu0 %v305, 2
    %v2106 = vpop.permute.xlu0 %2105
    %2107 = vrot.lane.b32.xlu0 %v311, 2
    %v2108 = vpop.permute.xlu0 %2107
    %2109 = vrot.lane.b32.xlu0 %v315, 2
    %v2110 = vpop.permute.xlu0 %2109
    %v2111 = vsel %vm1212, %v2096, %v2104
    %v2112 = vsel %vm1212, %v2098, %v2106
    %v2113 = vsel %vm1212, %v2100, %v2108
    %v2114 = vsel %vm1212, %v2102, %v2110
    %v2115 = vsel %vm1212, %v2104, %v2096
    %v2116 = vsel %vm1212, %v2106, %v2098
    %v2117 = vsel %vm1212, %v2108, %v2100
    %v2118 = vsel %vm1212, %v2110, %v2102
    %v2119 = vsel %vm1225, %v2115, 0.0
    %v2120 = vsel %vm1226, %v2111, 0.0
    %v2121 = vsel %vm1225, %v2116, 0.0
    %v2122 = vsel %vm1226, %v2112, 0.0
    %v2123 = vsel %vm1225, %v2117, 0.0
    %v2124 = vsel %vm1226, %v2113, 0.0
    %v2125 = vsel %vm1225, %v2118, 0.0
    %v2126 = vsel %vm1226, %v2114, 0.0
    %2127 = vset.pattern.permute.xlu0 3
    %2128 = vperm.xlu0 %2127, %v82
    %v2129 = vpop.permute.xlu0 %2128
    %2131 = vset.pattern.permute.xlu0 3
    %2132 = vperm.xlu0 %2131, %v83
    %v2133 = vpop.permute.xlu0 %2132
    %2135 = vset.pattern.permute.xlu0 3
    %2136 = vperm.xlu0 %2135, %v84
    %v2137 = vpop.permute.xlu0 %2136
    %2139 = vset.pattern.permute.xlu0 3
    %2140 = vperm.xlu0 %2139, %v85
    %v2141 = vpop.permute.xlu0 %2140
    %v2143 = vmul.f32 %v2129, %v2119
    %v2144 = vmul.f32 %v2129, %v2120
    %v2145 = vmul.f32 %v2133, %v2121
    %v2146 = vmul.f32 %v2133, %v2122
    %v2147 = vmul.f32 %v2137, %v2123
    %v2148 = vmul.f32 %v2137, %v2124
    %v2149 = vmul.f32 %v2141, %v2125
    %v2150 = vmul.f32 %v2141, %v2126
    %v2151 = vadd.f32 %v2087, %v2143
    %v2152 = vadd.f32 %v2088, %v2144
    %v2153 = vadd.f32 %v2089, %v2145
    %v2154 = vadd.f32 %v2090, %v2146
    %v2155 = vadd.f32 %v2091, %v2147
    %v2156 = vadd.f32 %v2092, %v2148
    %v2157 = vadd.f32 %v2093, %v2149
    %v2158 = vadd.f32 %v2094, %v2150
    %2159 = vrot.lane.b32.xlu0 %v299, 1
    %v2160 = vpop.permute.xlu0 %2159
    %2161 = vrot.lane.b32.xlu0 %v303, 1
    %v2162 = vpop.permute.xlu0 %2161
    %2163 = vrot.lane.b32.xlu0 %v309, 1
    %v2164 = vpop.permute.xlu0 %2163
    %2165 = vrot.lane.b32.xlu0 %v313, 1
    %v2166 = vpop.permute.xlu0 %2165
    %2167 = vrot.lane.b32.xlu0 %v301, 1
    %v2168 = vpop.permute.xlu0 %2167
    %2169 = vrot.lane.b32.xlu0 %v305, 1
    %v2170 = vpop.permute.xlu0 %2169
    %2171 = vrot.lane.b32.xlu0 %v311, 1
    %v2172 = vpop.permute.xlu0 %2171
    %2173 = vrot.lane.b32.xlu0 %v315, 1
    %v2174 = vpop.permute.xlu0 %2173
    %v2175 = vsel %vm1283, %v2160, %v2168
    %v2176 = vsel %vm1283, %v2162, %v2170
    %v2177 = vsel %vm1283, %v2164, %v2172
    %v2178 = vsel %vm1283, %v2166, %v2174
    %v2179 = vsel %vm1283, %v2168, %v2160
    %v2180 = vsel %vm1283, %v2170, %v2162
    %v2181 = vsel %vm1283, %v2172, %v2164
    %v2182 = vsel %vm1283, %v2174, %v2166
    %v2183 = vsel %vm1296, %v2179, 0.0
    %v2184 = vsel %vm1297, %v2175, 0.0
    %v2185 = vsel %vm1296, %v2180, 0.0
    %v2186 = vsel %vm1297, %v2176, 0.0
    %v2187 = vsel %vm1296, %v2181, 0.0
    %v2188 = vsel %vm1297, %v2177, 0.0
    %v2189 = vsel %vm1296, %v2182, 0.0
    %v2190 = vsel %vm1297, %v2178, 0.0
    %2191 = vset.pattern.permute.xlu0 4
    %2192 = vperm.xlu0 %2191, %v82
    %v2193 = vpop.permute.xlu0 %2192
    %2195 = vset.pattern.permute.xlu0 4
    %2196 = vperm.xlu0 %2195, %v83
    %v2197 = vpop.permute.xlu0 %2196
    %2199 = vset.pattern.permute.xlu0 4
    %2200 = vperm.xlu0 %2199, %v84
    %v2201 = vpop.permute.xlu0 %2200
    %2203 = vset.pattern.permute.xlu0 4
    %2204 = vperm.xlu0 %2203, %v85
    %v2205 = vpop.permute.xlu0 %2204
    %v2207 = vmul.f32 %v2193, %v2183
    %v2208 = vmul.f32 %v2193, %v2184
    %v2209 = vmul.f32 %v2197, %v2185
    %v2210 = vmul.f32 %v2197, %v2186
    %v2211 = vmul.f32 %v2201, %v2187
    %v2212 = vmul.f32 %v2201, %v2188
    %v2213 = vmul.f32 %v2205, %v2189
    %v2214 = vmul.f32 %v2205, %v2190
    %v2215 = vadd.f32 %v2151, %v2207
    %v2216 = vadd.f32 %v2152, %v2208
    %v2217 = vadd.f32 %v2153, %v2209
    %v2218 = vadd.f32 %v2154, %v2210
    %v2219 = vadd.f32 %v2155, %v2211
    %v2220 = vadd.f32 %v2156, %v2212
    %v2221 = vadd.f32 %v2157, %v2213
    %v2222 = vadd.f32 %v2158, %v2214
    %2223 = vrot.lane.b32.xlu0 %v299, 127
    %v2224 = vpop.permute.xlu0 %2223
    %2225 = vrot.lane.b32.xlu0 %v303, 127
    %v2226 = vpop.permute.xlu0 %2225
    %2227 = vrot.lane.b32.xlu0 %v309, 127
    %v2228 = vpop.permute.xlu0 %2227
    %2229 = vrot.lane.b32.xlu0 %v313, 127
    %v2230 = vpop.permute.xlu0 %2229
    %2231 = vrot.lane.b32.xlu0 %v301, 127
    %v2232 = vpop.permute.xlu0 %2231
    %2233 = vrot.lane.b32.xlu0 %v305, 127
    %v2234 = vpop.permute.xlu0 %2233
    %2235 = vrot.lane.b32.xlu0 %v311, 127
    %v2236 = vpop.permute.xlu0 %2235
    %2237 = vrot.lane.b32.xlu0 %v315, 127
    %v2238 = vpop.permute.xlu0 %2237
    %v2239 = vsel %vm1354, %v2224, %v2232
    %v2240 = vsel %vm1354, %v2226, %v2234
    %v2241 = vsel %vm1354, %v2228, %v2236
    %v2242 = vsel %vm1354, %v2230, %v2238
    %v2243 = vsel %vm1354, %v2232, %v2224
    %v2244 = vsel %vm1354, %v2234, %v2226
    %v2245 = vsel %vm1354, %v2236, %v2228
    %v2246 = vsel %vm1354, %v2238, %v2230
    %v2247 = vsel %vm1367, %v2239, 0.0
    %v2248 = vsel %vm1368, %v2243, 0.0
    %v2249 = vsel %vm1367, %v2240, 0.0
    %v2250 = vsel %vm1368, %v2244, 0.0
    %v2251 = vsel %vm1367, %v2241, 0.0
    %v2252 = vsel %vm1368, %v2245, 0.0
    %v2253 = vsel %vm1367, %v2242, 0.0
    %v2254 = vsel %vm1368, %v2246, 0.0
    %2255 = vset.pattern.permute.xlu0 6
    %2256 = vperm.xlu0 %2255, %v82
    %v2257 = vpop.permute.xlu0 %2256
    %2259 = vset.pattern.permute.xlu0 6
    %2260 = vperm.xlu0 %2259, %v83
    %v2261 = vpop.permute.xlu0 %2260
    %2263 = vset.pattern.permute.xlu0 6
    %2264 = vperm.xlu0 %2263, %v84
    %v2265 = vpop.permute.xlu0 %2264
    %2267 = vset.pattern.permute.xlu0 6
    %2268 = vperm.xlu0 %2267, %v85
    %v2269 = vpop.permute.xlu0 %2268
    %v2271 = vmul.f32 %v2257, %v2247
    %v2272 = vmul.f32 %v2257, %v2248
    %v2273 = vmul.f32 %v2261, %v2249
    %v2274 = vmul.f32 %v2261, %v2250
    %v2275 = vmul.f32 %v2265, %v2251
    %v2276 = vmul.f32 %v2265, %v2252
    %v2277 = vmul.f32 %v2269, %v2253
    %v2278 = vmul.f32 %v2269, %v2254
    %v2279 = vadd.f32 %v2215, %v2271
    %v2280 = vadd.f32 %v2216, %v2272
    %v2281 = vadd.f32 %v2217, %v2273
    %v2282 = vadd.f32 %v2218, %v2274
    %v2283 = vadd.f32 %v2219, %v2275
    %v2284 = vadd.f32 %v2220, %v2276
    %v2285 = vadd.f32 %v2221, %v2277
    %v2286 = vadd.f32 %v2222, %v2278
    %2287 = vrot.lane.b32.xlu0 %v299, 126
    %v2288 = vpop.permute.xlu0 %2287
    %2289 = vrot.lane.b32.xlu0 %v303, 126
    %v2290 = vpop.permute.xlu0 %2289
    %2291 = vrot.lane.b32.xlu0 %v309, 126
    %v2292 = vpop.permute.xlu0 %2291
    %2293 = vrot.lane.b32.xlu0 %v313, 126
    %v2294 = vpop.permute.xlu0 %2293
    %2295 = vrot.lane.b32.xlu0 %v301, 126
    %v2296 = vpop.permute.xlu0 %2295
    %2297 = vrot.lane.b32.xlu0 %v305, 126
    %v2298 = vpop.permute.xlu0 %2297
    %2299 = vrot.lane.b32.xlu0 %v311, 126
    %v2300 = vpop.permute.xlu0 %2299
    %2301 = vrot.lane.b32.xlu0 %v315, 126
    %v2302 = vpop.permute.xlu0 %2301
    %v2303 = vsel %vm1425, %v2288, %v2296
    %v2304 = vsel %vm1425, %v2290, %v2298
    %v2305 = vsel %vm1425, %v2292, %v2300
    %v2306 = vsel %vm1425, %v2294, %v2302
    %v2307 = vsel %vm1425, %v2296, %v2288
    %v2308 = vsel %vm1425, %v2298, %v2290
    %v2309 = vsel %vm1425, %v2300, %v2292
    %v2310 = vsel %vm1425, %v2302, %v2294
    %v2311 = vsel %vm1438, %v2303, 0.0
    %v2312 = vsel %vm1439, %v2307, 0.0
    %v2313 = vsel %vm1438, %v2304, 0.0
    %v2314 = vsel %vm1439, %v2308, 0.0
    %v2315 = vsel %vm1438, %v2305, 0.0
    %v2316 = vsel %vm1439, %v2309, 0.0
    %v2317 = vsel %vm1438, %v2306, 0.0
    %v2318 = vsel %vm1439, %v2310, 0.0
    %2319 = vset.pattern.permute.xlu0 7
    %2320 = vperm.xlu0 %2319, %v82
    %v2321 = vpop.permute.xlu0 %2320
    %2323 = vset.pattern.permute.xlu0 7
    %2324 = vperm.xlu0 %2323, %v83
    %v2325 = vpop.permute.xlu0 %2324
    %2327 = vset.pattern.permute.xlu0 7
    %2328 = vperm.xlu0 %2327, %v84
    %v2329 = vpop.permute.xlu0 %2328
    %2331 = vset.pattern.permute.xlu0 7
    %2332 = vperm.xlu0 %2331, %v85
    %v2333 = vpop.permute.xlu0 %2332
    %v2335 = vmul.f32 %v2321, %v2311
    %v2336 = vmul.f32 %v2321, %v2312
    %v2337 = vmul.f32 %v2325, %v2313
    %v2338 = vmul.f32 %v2325, %v2314
    %v2339 = vmul.f32 %v2329, %v2315
    %v2340 = vmul.f32 %v2329, %v2316
    %v2341 = vmul.f32 %v2333, %v2317
    %v2342 = vmul.f32 %v2333, %v2318
    %v2343 = vadd.f32 %v2279, %v2335
    %v2344 = vadd.f32 %v2280, %v2336
    %v2345 = vadd.f32 %v2281, %v2337
    %v2346 = vadd.f32 %v2282, %v2338
    %v2347 = vadd.f32 %v2283, %v2339
    %v2348 = vadd.f32 %v2284, %v2340
    %v2349 = vadd.f32 %v2285, %v2341
    %v2350 = vadd.f32 %v2286, %v2342
    %2351 = vrot.lane.b32.xlu0 %v299, 125
    %v2352 = vpop.permute.xlu0 %2351
    %2353 = vrot.lane.b32.xlu0 %v303, 125
    %v2354 = vpop.permute.xlu0 %2353
    %2355 = vrot.lane.b32.xlu0 %v309, 125
    %v2356 = vpop.permute.xlu0 %2355
    %2357 = vrot.lane.b32.xlu0 %v313, 125
    %v2358 = vpop.permute.xlu0 %2357
    %2359 = vrot.lane.b32.xlu0 %v301, 125
    %v2360 = vpop.permute.xlu0 %2359
    %2361 = vrot.lane.b32.xlu0 %v305, 125
    %v2362 = vpop.permute.xlu0 %2361
    %2363 = vrot.lane.b32.xlu0 %v311, 125
    %v2364 = vpop.permute.xlu0 %2363
    %2365 = vrot.lane.b32.xlu0 %v315, 125
    %v2366 = vpop.permute.xlu0 %2365
    %v2367 = vsel %vm1496, %v2352, %v2360
    %v2368 = vsel %vm1496, %v2354, %v2362
    %v2369 = vsel %vm1496, %v2356, %v2364
    %v2370 = vsel %vm1496, %v2358, %v2366
    %v2371 = vsel %vm1496, %v2360, %v2352
    %v2372 = vsel %vm1496, %v2362, %v2354
    %v2373 = vsel %vm1496, %v2364, %v2356
    %v2374 = vsel %vm1496, %v2366, %v2358
    %v2375 = vsel %vm1509, %v2367, 0.0
    %v2376 = vsel %vm1510, %v2371, 0.0
    %v2377 = vsel %vm1509, %v2368, 0.0
    %v2378 = vsel %vm1510, %v2372, 0.0
    %v2379 = vsel %vm1509, %v2369, 0.0
    %v2380 = vsel %vm1510, %v2373, 0.0
    %v2381 = vsel %vm1509, %v2370, 0.0
    %v2382 = vsel %vm1510, %v2374, 0.0
    %2383 = vset.pattern.permute.xlu0 8
    %2384 = vperm.xlu0 %2383, %v82
    %v2385 = vpop.permute.xlu0 %2384
    %2387 = vset.pattern.permute.xlu0 8
    %2388 = vperm.xlu0 %2387, %v83
    %v2389 = vpop.permute.xlu0 %2388
    %2391 = vset.pattern.permute.xlu0 8
    %2392 = vperm.xlu0 %2391, %v84
    %v2393 = vpop.permute.xlu0 %2392
    %2395 = vset.pattern.permute.xlu0 8
    %2396 = vperm.xlu0 %2395, %v85
    %v2397 = vpop.permute.xlu0 %2396
    %v2399 = vmul.f32 %v2385, %v2375
    %v2400 = vmul.f32 %v2385, %v2376
    %v2401 = vmul.f32 %v2389, %v2377
    %v2402 = vmul.f32 %v2389, %v2378
    %v2403 = vmul.f32 %v2393, %v2379
    %v2404 = vmul.f32 %v2393, %v2380
    %v2405 = vmul.f32 %v2397, %v2381
    %v2406 = vmul.f32 %v2397, %v2382
    %v2407 = vadd.f32 %v2343, %v2399
    %v2408 = vadd.f32 %v2344, %v2400
    %v2409 = vadd.f32 %v2345, %v2401
    %v2410 = vadd.f32 %v2346, %v2402
    %v2411 = vadd.f32 %v2347, %v2403
    %v2412 = vadd.f32 %v2348, %v2404
    %v2413 = vadd.f32 %v2349, %v2405
    %v2414 = vadd.f32 %v2350, %v2406
    %v2415 = vmul.f32 %v1543, %v1975
    %v2416 = vmul.f32 %v1544, %v1976
    %v2417 = vmul.f32 %v1545, %v1977
    %v2418 = vmul.f32 %v1546, %v1978
    %v2419 = vmul.f32 %v1547, %v1979
    %v2420 = vmul.f32 %v1548, %v1980
    %v2421 = vmul.f32 %v1549, %v1981
    %v2422 = vmul.f32 %v1550, %v1982
    %v2423 = vpack.c.bf16 %v2417, %v2415
    %v2424 = vpack.c.bf16 %v2418, %v2416
    %v2425 = vpack.c.bf16 %v2421, %v2419
    %v2426 = vpack.c.bf16 %v2422, %v2420
    %v2427 = vld [vmem:[%s7] sm:$0xf]
    %v2428 = vld [vmem:[%s7 + $0x4] sm:$0xf]
    %v2429 = vld [vmem:[%s7 + $0x8] sm:$0xf]
    %v2430 = vld [vmem:[%s7 + $0xc] sm:$0xf]
    %2432 = vset.pattern.permute.xlu0 0
    %2433 = vperm.xlu0 %2432, %v86
    %v2434 = vpop.permute.xlu0 %2433
    %2437 = vset.pattern.permute.xlu0 0
    %2438 = vperm.xlu0 %2437, %v87
    %v2439 = vpop.permute.xlu0 %2438
    %2442 = vset.pattern.permute.xlu0 0
    %2443 = vperm.xlu0 %2442, %v88
    %v2444 = vpop.permute.xlu0 %2443
    %2447 = vset.pattern.permute.xlu0 0
    %2448 = vperm.xlu0 %2447, %v89
    %v2449 = vpop.permute.xlu0 %2448
    %v2455 = vunpack.c.l.b16 %v2427
    %v2456 = vunpack.c.l.b16 %v2428
    %v2457 = vunpack.c.l.b16 %v2429
    %v2458 = vunpack.c.l.b16 %v2430
    %v2459 = vpack.c.b16 %v2456, %v2455
    %v2460 = vpack.c.b16 %v2458, %v2457
    %vm2461 = vcmask 261120
    %v2463 = vsel %vm2461, %v2459, 0
    %v2466 = vsel %vm2461, %v2460, 0
    %2468 = vmatprep.subr.bf16.mxu0 %v2424
    %2469 = vmatpush1.bf16.msra.mxu0 %v2423
    %2470 = vmatprep.subr.bf16.mxu0 %v2426
    %2471 = vmatpush1.bf16.msra.mxu0 %v2425
    %2472 = vmatprep.subr.bf16.mxu0 0
    %2473 = vmatpush1.bf16.msra.mxu0 0
    %2474 = vmatprep.subr.bf16.mxu0 0
    %2475 = vmatpush1.bf16.msra.mxu0 0
    %2476 = vmatprep.subr.bf16.mxu0 0
    %2477 = vmatpush1.bf16.msra.mxu0 0
    %2478 = vmatprep.subr.bf16.mxu0 0
    %2479 = vmatpush1.bf16.msra.mxu0 0
    %2480 = vmatprep.subr.bf16.mxu0 0
    %2481 = vmatpush1.bf16.msra.mxu0 0
    %2482 = vmatprep.subr.bf16.mxu0 0
    %2483 = vmatpush1.bf16.msra.mxu0 0
    %2484 = vmatprep.subr.bf16.mxu0 0
    %2485 = vmatpush1.bf16.msra.mxu0 0
    %2486 = vmatprep.subr.bf16.mxu0 0
    %2487 = vmatpush1.bf16.msra.mxu0 0
    %2488 = vmatprep.subr.bf16.mxu0 0
    %2489 = vmatpush1.bf16.msra.mxu0 0
    %2490 = vmatprep.subr.bf16.mxu0 0
    %2491 = vmatpush1.bf16.msra.mxu0 0
    %2492 = vmatprep.subr.bf16.mxu0 0
    %2493 = vmatpush1.bf16.msra.mxu0 0
    %2494 = vmatprep.subr.bf16.mxu0 0
    %2495 = vmatpush1.bf16.msra.mxu0 0
    %2496 = vmatprep.subr.bf16.mxu0 0
    %2497 = vmatpush1.bf16.msra.mxu0 0
    %2498 = vmatprep.subr.bf16.mxu0 0
    %2499 = vmatpush1.bf16.msra.mxu0 0
    %2500 = vmatprep.mubr.bf16.mxu0 0
    %2501 = vmatmul.mubr.bf16.gmra.mrb[0].mxu0 %v2463
    %v2502 = vpop.f32.mrb[0].mxu0
    %v2503 = vadd.f32 %v2434, %v2502
    %v2504 = vpop.f32.mrb[0].mxu0
    %v2505 = vadd.f32 %v2434, %v2504
    %v2506 = vpop.f32.mrb[0].mxu0
    %v2507 = vadd.f32 %v2439, %v2506
    %v2508 = vpop.f32.mrb[0].mxu0
    %v2509 = vadd.f32 %v2439, %v2508
    %2510 = vmatprep.mubr.bf16.mxu0 0
    %2511 = vmatmul.mubr.bf16.gmra.mrb[0].mxu0 %v2466
    %v2512 = vpop.f32.mrb[0].mxu0
    %v2513 = vadd.f32 %v2444, %v2512
    %v2514 = vpop.f32.mrb[0].mxu0
    %v2515 = vadd.f32 %v2444, %v2514
    %v2516 = vpop.f32.mrb[0].mxu0
    %v2517 = vadd.f32 %v2449, %v2516
    %v2518 = vpop.f32.mrb[0].mxu0
    %v2519 = vadd.f32 %v2449, %v2518
    %2520 = vdwg.mxu0
    %v2521 = vmul.f32 %v2503, 0.5
    %v2522 = vmul.f32 %v2505, 0.5
    %v2523 = vmul.f32 %v2507, 0.5
    %v2524 = vmul.f32 %v2509, 0.5
    %v2525 = vmul.f32 %v2513, 0.5
    %v2526 = vmul.f32 %v2515, 0.5
    %v2527 = vmul.f32 %v2517, 0.5
    %v2528 = vmul.f32 %v2519, 0.5
    %v2529 = vtanh.pop %v2521
    %v2530 = vtanh.pop %v2522
    %v2531 = vtanh.pop %v2523
    %v2532 = vtanh.pop %v2524
    %v2533 = vtanh.pop %v2525
    %v2534 = vtanh.pop %v2526
    %v2535 = vtanh.pop %v2527
    %v2536 = vtanh.pop %v2528
    %v2537 = vadd.f32 %v2529, 1.0
    %v2538 = vadd.f32 %v2530, 1.0
    %v2539 = vadd.f32 %v2531, 1.0
    %v2540 = vadd.f32 %v2532, 1.0
    %v2541 = vadd.f32 %v2533, 1.0
    %v2542 = vadd.f32 %v2534, 1.0
    %v2543 = vadd.f32 %v2535, 1.0
    %v2544 = vadd.f32 %v2536, 1.0
    %v2545 = vmul.f32 %v2537, 0.5
    %v2546 = vmul.f32 %v2538, 0.5
    %v2547 = vmul.f32 %v2539, 0.5
    %v2548 = vmul.f32 %v2540, 0.5
    %v2549 = vmul.f32 %v2541, 0.5
    %v2550 = vmul.f32 %v2542, 0.5
    %v2551 = vmul.f32 %v2543, 0.5
    %v2552 = vmul.f32 %v2544, 0.5
    %v2553 = vmul.f32 %v2503, %v2545
    %v2554 = vmul.f32 %v2505, %v2546
    %v2555 = vmul.f32 %v2507, %v2547
    %v2556 = vmul.f32 %v2509, %v2548
    %v2557 = vmul.f32 %v2513, %v2549
    %v2558 = vmul.f32 %v2515, %v2550
    %v2559 = vmul.f32 %v2517, %v2551
    %v2560 = vmul.f32 %v2519, %v2552
    %v2561 = vld [vmem:[%s8] sm:$0xf]
    %v2562 = vld [vmem:[%s8 + $0x4] sm:$0xf]
    %v2563 = vld [vmem:[%s8 + $0x8] sm:$0xf]
    %v2564 = vld [vmem:[%s8 + $0xc] sm:$0xf]
    %v2565 = vpack.c.bf16 %v2555, %v2553
    %v2566 = vpack.c.bf16 %v2556, %v2554
    %v2567 = vpack.c.bf16 %v2559, %v2557
    %v2568 = vpack.c.bf16 %v2560, %v2558
    %2569 = vset.pattern.permute.xlu0 1
    %2570 = vperm.xlu0 %2569, %v86
    %v2571 = vpop.permute.xlu0 %2570
    %2573 = vset.pattern.permute.xlu0 1
    %2574 = vperm.xlu0 %2573, %v87
    %v2575 = vpop.permute.xlu0 %2574
    %2577 = vset.pattern.permute.xlu0 1
    %2578 = vperm.xlu0 %2577, %v88
    %v2579 = vpop.permute.xlu0 %2578
    %2581 = vset.pattern.permute.xlu0 1
    %2582 = vperm.xlu0 %2581, %v89
    %v2583 = vpop.permute.xlu0 %2582
    %v2589 = vunpack.c.l.b16 %v2561
    %v2590 = vunpack.c.l.b16 %v2562
    %v2591 = vunpack.c.l.b16 %v2563
    %v2592 = vunpack.c.l.b16 %v2564
    %v2593 = vpack.c.b16 %v2590, %v2589
    %v2594 = vpack.c.b16 %v2592, %v2591
    %v2596 = vsel %vm2461, %v2593, 0
    %v2599 = vsel %vm2461, %v2594, 0
    %2601 = vmatprep.subr.bf16.mxu0 %v2566
    %2602 = vmatpush1.bf16.msra.mxu0 %v2565
    %2603 = vmatprep.subr.bf16.mxu0 %v2568
    %2604 = vmatpush1.bf16.msra.mxu0 %v2567
    %2605 = vmatprep.subr.bf16.mxu0 0
    %2606 = vmatpush1.bf16.msra.mxu0 0
    %2607 = vmatprep.subr.bf16.mxu0 0
    %2608 = vmatpush1.bf16.msra.mxu0 0
    %2609 = vmatprep.subr.bf16.mxu0 0
    %2610 = vmatpush1.bf16.msra.mxu0 0
    %2611 = vmatprep.subr.bf16.mxu0 0
    %2612 = vmatpush1.bf16.msra.mxu0 0
    %2613 = vmatprep.subr.bf16.mxu0 0
    %2614 = vmatpush1.bf16.msra.mxu0 0
    %2615 = vmatprep.subr.bf16.mxu0 0
    %2616 = vmatpush1.bf16.msra.mxu0 0
    %2617 = vmatprep.subr.bf16.mxu0 0
    %2618 = vmatpush1.bf16.msra.mxu0 0
    %2619 = vmatprep.subr.bf16.mxu0 0
    %2620 = vmatpush1.bf16.msra.mxu0 0
    %2621 = vmatprep.subr.bf16.mxu0 0
    %2622 = vmatpush1.bf16.msra.mxu0 0
    %2623 = vmatprep.subr.bf16.mxu0 0
    %2624 = vmatpush1.bf16.msra.mxu0 0
    %2625 = vmatprep.subr.bf16.mxu0 0
    %2626 = vmatpush1.bf16.msra.mxu0 0
    %2627 = vmatprep.subr.bf16.mxu0 0
    %2628 = vmatpush1.bf16.msra.mxu0 0
    %2629 = vmatprep.subr.bf16.mxu0 0
    %2630 = vmatpush1.bf16.msra.mxu0 0
    %2631 = vmatprep.subr.bf16.mxu0 0
    %2632 = vmatpush1.bf16.msra.mxu0 0
    %2633 = vmatprep.mubr.bf16.mxu0 0
    %2634 = vmatmul.mubr.bf16.gmra.mrb[0].mxu0 %v2596
    %v2635 = vpop.f32.mrb[0].mxu0
    %v2636 = vadd.f32 %v2571, %v2635
    %v2637 = vpop.f32.mrb[0].mxu0
    %v2638 = vadd.f32 %v2571, %v2637
    %v2639 = vpop.f32.mrb[0].mxu0
    %v2640 = vadd.f32 %v2575, %v2639
    %v2641 = vpop.f32.mrb[0].mxu0
    %v2642 = vadd.f32 %v2575, %v2641
    %2643 = vmatprep.mubr.bf16.mxu0 0
    %2644 = vmatmul.mubr.bf16.gmra.mrb[0].mxu0 %v2599
    %v2645 = vpop.f32.mrb[0].mxu0
    %v2646 = vadd.f32 %v2579, %v2645
    %v2647 = vpop.f32.mrb[0].mxu0
    %v2648 = vadd.f32 %v2579, %v2647
    %v2649 = vpop.f32.mrb[0].mxu0
    %v2650 = vadd.f32 %v2583, %v2649
    %v2651 = vpop.f32.mrb[0].mxu0
    %v2652 = vadd.f32 %v2583, %v2651
    %2653 = vdwg.mxu0
    %v2654 = vmul.f32 %v2636, 0.25
    %v2655 = vmul.f32 %v2638, 0.25
    %v2656 = vmul.f32 %v2640, 0.25
    %v2657 = vmul.f32 %v2642, 0.25
    %v2658 = vmul.f32 %v2646, 0.25
    %v2659 = vmul.f32 %v2648, 0.25
    %v2660 = vmul.f32 %v2650, 0.25
    %v2661 = vmul.f32 %v2652, 0.25
    %v2662 = vtanh.pop %v2654
    %v2663 = vtanh.pop %v2655
    %v2664 = vtanh.pop %v2656
    %v2665 = vtanh.pop %v2657
    %v2666 = vtanh.pop %v2658
    %v2667 = vtanh.pop %v2659
    %v2668 = vtanh.pop %v2660
    %v2669 = vtanh.pop %v2661
    %v2670 = vmul.f32 %v2662, %v2407
    %v2671 = vmul.f32 %v2663, %v2408
    %v2672 = vmul.f32 %v2664, %v2409
    %v2673 = vmul.f32 %v2665, %v2410
    %v2674 = vmul.f32 %v2666, %v2411
    %v2675 = vmul.f32 %v2667, %v2412
    %v2676 = vmul.f32 %v2668, %v2413
    %v2677 = vmul.f32 %v2669, %v2414
    %v2678 = vld [vmem:[%s9] sm:$0xf]
    %v2679 = vld [vmem:[%s9 + $0x4] sm:$0xf]
    %v2680 = vld [vmem:[%s9 + $0x8] sm:$0xf]
    %v2681 = vld [vmem:[%s9 + $0xc] sm:$0xf]
    %v2682 = vld [vmem:[%s9 + $0x10] sm:$0xf]
    %v2683 = vld [vmem:[%s9 + $0x14] sm:$0xf]
    %v2684 = vld [vmem:[%s9 + $0x18] sm:$0xf]
    %v2685 = vld [vmem:[%s9 + $0x1c] sm:$0xf]
    %v2686 = vpack.c.bf16 %v2672, %v2670
    %v2687 = vpack.c.bf16 %v2673, %v2671
    %v2688 = vpack.c.bf16 %v2676, %v2674
    %v2689 = vpack.c.bf16 %v2677, %v2675
    %v2698 = vunpack.c.l.b16 %v2678
    %v2699 = vunpack.c.l.b16 %v2679
    %v2700 = vunpack.c.l.b16 %v2680
    %v2701 = vunpack.c.l.b16 %v2681
    %v2702 = vunpack.c.l.b16 %v2682
    %v2703 = vunpack.c.l.b16 %v2683
    %v2704 = vunpack.c.l.b16 %v2684
    %v2705 = vunpack.c.l.b16 %v2685
    %v2706 = vpack.c.b16 %v2699, %v2698
    %v2707 = vpack.c.b16 %v2701, %v2700
    %v2708 = vpack.c.b16 %v2703, %v2702
    %v2709 = vpack.c.b16 %v2705, %v2704
    %v2711 = vsel %vm2461, %v2706, 0
    %v2714 = vsel %vm2461, %v2707, 0
    %v2717 = vsel %vm2461, %v2708, 0
    %v2720 = vsel %vm2461, %v2709, 0
    %2722 = vmatprep.subr.bf16.mxu0 %v2687
    %2723 = vmatpush1.bf16.msra.mxu0 %v2686
    %2724 = vmatprep.subr.bf16.mxu0 %v2689
    %2725 = vmatpush1.bf16.msra.mxu0 %v2688
    %2726 = vmatprep.subr.bf16.mxu0 0
    %2727 = vmatpush1.bf16.msra.mxu0 0
    %2728 = vmatprep.subr.bf16.mxu0 0
    %2729 = vmatpush1.bf16.msra.mxu0 0
    %2730 = vmatprep.subr.bf16.mxu0 0
    %2731 = vmatpush1.bf16.msra.mxu0 0
    %2732 = vmatprep.subr.bf16.mxu0 0
    %2733 = vmatpush1.bf16.msra.mxu0 0
    %2734 = vmatprep.subr.bf16.mxu0 0
    %2735 = vmatpush1.bf16.msra.mxu0 0
    %2736 = vmatprep.subr.bf16.mxu0 0
    %2737 = vmatpush1.bf16.msra.mxu0 0
    %2738 = vmatprep.subr.bf16.mxu0 0
    %2739 = vmatpush1.bf16.msra.mxu0 0
    %2740 = vmatprep.subr.bf16.mxu0 0
    %2741 = vmatpush1.bf16.msra.mxu0 0
    %2742 = vmatprep.subr.bf16.mxu0 0
    %2743 = vmatpush1.bf16.msra.mxu0 0
    %2744 = vmatprep.subr.bf16.mxu0 0
    %2745 = vmatpush1.bf16.msra.mxu0 0
    %2746 = vmatprep.subr.bf16.mxu0 0
    %2747 = vmatpush1.bf16.msra.mxu0 0
    %2748 = vmatprep.subr.bf16.mxu0 0
    %2749 = vmatpush1.bf16.msra.mxu0 0
    %2750 = vmatprep.subr.bf16.mxu0 0
    %2751 = vmatpush1.bf16.msra.mxu0 0
    %2752 = vmatprep.subr.bf16.mxu0 0
    %2753 = vmatpush1.bf16.msra.mxu0 0
    %2754 = vmatprep.mubr.bf16.mxu0 0
    %2755 = vmatmul.mubr.bf16.gmra.mrb[0].mxu0 %v2711
    %v2756 = vpop.f32.mrb[0].mxu0
    %v2757 = vadd.f32 0.0, %v2756
    %v2758 = vpop.f32.mrb[0].mxu0
    %v2759 = vadd.f32 0.0, %v2758
    %v2760 = vpop.f32.mrb[0].mxu0
    %v2761 = vadd.f32 0.0, %v2760
    %v2762 = vpop.f32.mrb[0].mxu0
    %v2763 = vadd.f32 0.0, %v2762
    %2764 = vmatprep.mubr.bf16.mxu0 0
    %2765 = vmatmul.mubr.bf16.gmra.mrb[0].mxu0 %v2714
    %v2766 = vpop.f32.mrb[0].mxu0
    %v2767 = vadd.f32 0.0, %v2766
    %v2768 = vpop.f32.mrb[0].mxu0
    %v2769 = vadd.f32 0.0, %v2768
    %v2770 = vpop.f32.mrb[0].mxu0
    %v2771 = vadd.f32 0.0, %v2770
    %v2772 = vpop.f32.mrb[0].mxu0
    %v2773 = vadd.f32 0.0, %v2772
    %2774 = vmatprep.mubr.bf16.mxu0 0
    %2775 = vmatmul.mubr.bf16.gmra.mrb[0].mxu0 %v2717
    %v2776 = vpop.f32.mrb[0].mxu0
    %v2777 = vadd.f32 0.0, %v2776
    %v2778 = vpop.f32.mrb[0].mxu0
    %v2779 = vadd.f32 0.0, %v2778
    %v2780 = vpop.f32.mrb[0].mxu0
    %v2781 = vadd.f32 0.0, %v2780
    %v2782 = vpop.f32.mrb[0].mxu0
    %v2783 = vadd.f32 0.0, %v2782
    %2784 = vmatprep.mubr.bf16.mxu0 0
    %2785 = vmatmul.mubr.bf16.gmra.mrb[0].mxu0 %v2720
    %v2786 = vpop.f32.mrb[0].mxu0
    %v2787 = vadd.f32 0.0, %v2786
    %v2788 = vpop.f32.mrb[0].mxu0
    %v2789 = vadd.f32 0.0, %v2788
    %v2790 = vpop.f32.mrb[0].mxu0
    %v2791 = vadd.f32 0.0, %v2790
    %v2792 = vpop.f32.mrb[0].mxu0
    %v2793 = vadd.f32 0.0, %v2792
    %2794 = vdwg.mxu0
    %v2795 = vadd.f32 %v1061, %v2757
    %v2796 = vadd.f32 %v1062, %v2759
    %v2797 = vadd.f32 %v1063, %v2761
    %v2798 = vadd.f32 %v1064, %v2763
    %v2799 = vadd.f32 %v1065, %v2767
    %v2800 = vadd.f32 %v1066, %v2769
    %v2801 = vadd.f32 %v1067, %v2771
    %v2802 = vadd.f32 %v1068, %v2773
    %v2803 = vadd.f32 %v1069, %v2777
    %v2804 = vadd.f32 %v1070, %v2779
    %v2805 = vadd.f32 %v1071, %v2781
    %v2806 = vadd.f32 %v1072, %v2783
    %v2807 = vadd.f32 %v1073, %v2787
    %v2808 = vadd.f32 %v1074, %v2789
    %v2809 = vadd.f32 %v1075, %v2791
    %v2810 = vadd.f32 %v1076, %v2793
    %2811 = vadd.xlane.f32.xlu0 %v2795
    %v2812 = vpop.xlane.xlu0 %2811
    %2813 = vadd.xlane.f32.xlu0 %v2797
    %v2814 = vpop.xlane.xlu0 %2813
    %2815 = vadd.xlane.f32.xlu0 %v2799
    %v2816 = vpop.xlane.xlu0 %2815
    %2817 = vadd.xlane.f32.xlu0 %v2801
    %v2818 = vpop.xlane.xlu0 %2817
    %2819 = vadd.xlane.f32.xlu0 %v2803
    %v2820 = vpop.xlane.xlu0 %2819
    %2821 = vadd.xlane.f32.xlu0 %v2805
    %v2822 = vpop.xlane.xlu0 %2821
    %2823 = vadd.xlane.f32.xlu0 %v2807
    %v2824 = vpop.xlane.xlu0 %2823
    %2825 = vadd.xlane.f32.xlu0 %v2809
    %v2826 = vpop.xlane.xlu0 %2825
    %v2827 = vmul.f32 %v2795, %v2795
    %v2828 = vmul.f32 %v2797, %v2797
    %v2829 = vmul.f32 %v2799, %v2799
    %v2830 = vmul.f32 %v2801, %v2801
    %v2831 = vmul.f32 %v2803, %v2803
    %v2832 = vmul.f32 %v2805, %v2805
    %v2833 = vmul.f32 %v2807, %v2807
    %v2834 = vmul.f32 %v2809, %v2809
    %2835 = vadd.xlane.f32.xlu0 %v2827
    %v2836 = vpop.xlane.xlu0 %2835
    %2837 = vadd.xlane.f32.xlu0 %v2828
    %v2838 = vpop.xlane.xlu0 %2837
    %2839 = vadd.xlane.f32.xlu0 %v2829
    %v2840 = vpop.xlane.xlu0 %2839
    %2841 = vadd.xlane.f32.xlu0 %v2830
    %v2842 = vpop.xlane.xlu0 %2841
    %2843 = vadd.xlane.f32.xlu0 %v2831
    %v2844 = vpop.xlane.xlu0 %2843
    %2845 = vadd.xlane.f32.xlu0 %v2832
    %v2846 = vpop.xlane.xlu0 %2845
    %2847 = vadd.xlane.f32.xlu0 %v2833
    %v2848 = vpop.xlane.xlu0 %2847
    %2849 = vadd.xlane.f32.xlu0 %v2834
    %v2850 = vpop.xlane.xlu0 %2849
    %2851 = vadd.xlane.f32.xlu0 %v2796
    %v2852 = vpop.xlane.xlu0 %2851
    %2853 = vadd.xlane.f32.xlu0 %v2798
    %v2854 = vpop.xlane.xlu0 %2853
    %2855 = vadd.xlane.f32.xlu0 %v2800
    %v2856 = vpop.xlane.xlu0 %2855
    %2857 = vadd.xlane.f32.xlu0 %v2802
    %v2858 = vpop.xlane.xlu0 %2857
    %2859 = vadd.xlane.f32.xlu0 %v2804
    %v2860 = vpop.xlane.xlu0 %2859
    %2861 = vadd.xlane.f32.xlu0 %v2806
    %v2862 = vpop.xlane.xlu0 %2861
    %2863 = vadd.xlane.f32.xlu0 %v2808
    %v2864 = vpop.xlane.xlu0 %2863
    %2865 = vadd.xlane.f32.xlu0 %v2810
    %v2866 = vpop.xlane.xlu0 %2865
    %v2867 = vmul.f32 %v2796, %v2796
    %v2868 = vmul.f32 %v2798, %v2798
    %v2869 = vmul.f32 %v2800, %v2800
    %v2870 = vmul.f32 %v2802, %v2802
    %v2871 = vmul.f32 %v2804, %v2804
    %v2872 = vmul.f32 %v2806, %v2806
    %v2873 = vmul.f32 %v2808, %v2808
    %v2874 = vmul.f32 %v2810, %v2810
    %2875 = vadd.xlane.f32.xlu0 %v2867
    %v2876 = vpop.xlane.xlu0 %2875
    %2877 = vadd.xlane.f32.xlu0 %v2868
    %v2878 = vpop.xlane.xlu0 %2877
    %2879 = vadd.xlane.f32.xlu0 %v2869
    %v2880 = vpop.xlane.xlu0 %2879
    %2881 = vadd.xlane.f32.xlu0 %v2870
    %v2882 = vpop.xlane.xlu0 %2881
    %2883 = vadd.xlane.f32.xlu0 %v2871
    %v2884 = vpop.xlane.xlu0 %2883
    %2885 = vadd.xlane.f32.xlu0 %v2872
    %v2886 = vpop.xlane.xlu0 %2885
    %2887 = vadd.xlane.f32.xlu0 %v2873
    %v2888 = vpop.xlane.xlu0 %2887
    %2889 = vadd.xlane.f32.xlu0 %v2874
    %v2890 = vpop.xlane.xlu0 %2889
    %vm2891 = vcmp.eq.s32.totalorder %v91, 2
    %v2892 = vsel %vm2891, 1, 0
    %vm2893 = vcmp.eq.s32.totalorder %v2892, 1
    %v2894 = vsel %vm2893, %v2852, %v2876
    %v2895 = vsel %vm2893, %v2854, %v2878
    %v2896 = vsel %vm2893, %v2856, %v2880
    %v2897 = vsel %vm2893, %v2858, %v2882
    %v2898 = vsel %vm2893, %v2860, %v2884
    %v2899 = vsel %vm2893, %v2862, %v2886
    %v2900 = vsel %vm2893, %v2864, %v2888
    %v2901 = vsel %vm2893, %v2866, %v2890
    %vm2902 = vcmp.eq.s32.totalorder %v91, 1
    %v2903 = vsel %vm2902, 1, 0
    %vm2904 = vcmp.eq.s32.totalorder %v2903, 1
    %v2905 = vsel %vm2904, %v2836, %v2894
    %v2906 = vsel %vm2904, %v2838, %v2895
    %v2907 = vsel %vm2904, %v2840, %v2896
    %v2908 = vsel %vm2904, %v2842, %v2897
    %v2909 = vsel %vm2904, %v2844, %v2898
    %v2910 = vsel %vm2904, %v2846, %v2899
    %v2911 = vsel %vm2904, %v2848, %v2900
    %v2912 = vsel %vm2904, %v2850, %v2901
    %vm2913 = vcmp.eq.s32.totalorder %v91, 0
    %v2914 = vsel %vm2913, 1, 0
    %vm2915 = vcmp.eq.s32.totalorder %v2914, 1
    %v2916 = vsel %vm2915, %v2812, %v2905
    %v2917 = vsel %vm2915, %v2814, %v2906
    %v2918 = vsel %vm2915, %v2816, %v2907
    %v2919 = vsel %vm2915, %v2818, %v2908
    %v2920 = vsel %vm2915, %v2820, %v2909
    %v2921 = vsel %vm2915, %v2822, %v2910
    %v2922 = vsel %vm2915, %v2824, %v2911
    %v2923 = vsel %vm2915, %v2826, %v2912
    %v2924 = vld [vmem:[%s11] sm:$0xff]
    %v2925 = vld [vmem:[%s11 + $0x8] sm:$0xff]
    %v2926 = vld [vmem:[%s11 + $0x10] sm:$0xff]
    %v2927 = vld [vmem:[%s11 + $0x18] sm:$0xff]
    %v2928 = vld [vmem:[%s11 + $0x20] sm:$0xff]
    %v2929 = vld [vmem:[%s11 + $0x28] sm:$0xff]
    %v2930 = vld [vmem:[%s11 + $0x30] sm:$0xff]
    %v2931 = vld [vmem:[%s11 + $0x38] sm:$0xff]
    %v2933 = vsel %vm205, %v2924, 0
    %v2936 = vsel %vm205, %v2925, 0
    %v2939 = vsel %vm205, %v2926, 0
    %v2942 = vsel %vm205, %v2927, 0
    %v2945 = vsel %vm205, %v2928, 0
    %v2948 = vsel %vm205, %v2929, 0
    %v2951 = vsel %vm205, %v2930, 0
    %v2954 = vsel %vm205, %v2931, 0
    %2956 = vmatprep.subr.mxu0 0.0
    %2957 = vmatpush1.msra.mxu0 %v2916
    %2958 = vmatprep.subr.mxu0 0.0
    %2959 = vmatpush1.msra.mxu0 %v2917
    %2960 = vmatprep.subr.mxu0 0.0
    %2961 = vmatpush1.msra.mxu0 %v2918
    %2962 = vmatprep.subr.mxu0 0.0
    %2963 = vmatpush1.msra.mxu0 %v2919
    %2964 = vmatprep.subr.mxu0 0.0
    %2965 = vmatpush1.msra.mxu0 %v2920
    %2966 = vmatprep.subr.mxu0 0.0
    %2967 = vmatpush1.msra.mxu0 %v2921
    %2968 = vmatprep.subr.mxu0 0.0
    %2969 = vmatpush1.msra.mxu0 %v2922
    %2970 = vmatprep.subr.mxu0 0.0
    %2971 = vmatpush1.msra.mxu0 %v2923
    %2972 = vmatprep.subr.mxu0 0.0
    %2973 = vmatpush1.msra.mxu0 0.0
    %2974 = vmatprep.subr.mxu0 0.0
    %2975 = vmatpush1.msra.mxu0 0.0
    %2976 = vmatprep.subr.mxu0 0.0
    %2977 = vmatpush1.msra.mxu0 0.0
    %2978 = vmatprep.subr.mxu0 0.0
    %2979 = vmatpush1.msra.mxu0 0.0
    %2980 = vmatprep.subr.mxu0 0.0
    %2981 = vmatpush1.msra.mxu0 0.0
    %2982 = vmatprep.subr.mxu0 0.0
    %2983 = vmatpush1.msra.mxu0 0.0
    %2984 = vmatprep.subr.mxu0 0.0
    %2985 = vmatpush1.msra.mxu0 0.0
    %2986 = vmatprep.subr.mxu0 0.0
    %2987 = vmatpush1.msra.mxu0 0.0
    %2988 = vmatprep.subr.mxu0 0.0
    %2989 = vmatpush1.msra.mxu0 0.0
    %2990 = vmatprep.subr.mxu0 0.0
    %2991 = vmatpush1.msra.mxu0 0.0
    %2992 = vmatprep.subr.mxu0 0.0
    %2993 = vmatpush1.msra.mxu0 0.0
    %2994 = vmatprep.subr.mxu0 0.0
    %2995 = vmatpush1.msra.mxu0 0.0
    %2996 = vmatprep.subr.mxu0 0.0
    %2997 = vmatpush1.msra.mxu0 0.0
    %2998 = vmatprep.subr.mxu0 0.0
    %2999 = vmatpush1.msra.mxu0 0.0
    %3000 = vmatprep.subr.mxu0 0.0
    %3001 = vmatpush1.msra.mxu0 0.0
    %3002 = vmatprep.subr.mxu0 0.0
    %3003 = vmatpush1.msra.mxu0 0.0
    %3004 = vmatprep.subr.mxu0 0.0
    %3005 = vmatpush1.msra.mxu0 0.0
    %3006 = vmatprep.subr.mxu0 0.0
    %3007 = vmatpush1.msra.mxu0 0.0
    %3008 = vmatprep.subr.mxu0 0.0
    %3009 = vmatpush1.msra.mxu0 0.0
    %3010 = vmatprep.subr.mxu0 0.0
    %3011 = vmatpush1.msra.mxu0 0.0
    %3012 = vmatprep.subr.mxu0 0.0
    %3013 = vmatpush1.msra.mxu0 0.0
    %3014 = vmatprep.subr.mxu0 0.0
    %3015 = vmatpush1.msra.mxu0 0.0
    %3016 = vmatprep.subr.mxu0 0.0
    %3017 = vmatpush1.msra.mxu0 0.0
    %3018 = vmatprep.subr.mxu0 0.0
    %3019 = vmatpush1.msra.mxu0 0.0
    %3020 = vmatprep.mubr.f32.mxu0 0.0
    %3021 = vmatmul.mubr.f32.gmra.mrb[0].mxu0 %v2933
    %v3022 = vpop.f32.mrb[0].mxu0
    %v3023 = vadd.f32 0.0, %v3022
    %v3024 = vpop.f32.mrb[0].mxu0
    %3025 = vmatprep.mubr.f32.mxu0 0.0
    %3026 = vmatmul.mubr.f32.gmra.mrb[0].mxu0 %v2936
    %v3027 = vpop.f32.mrb[0].mxu0
    %v3028 = vadd.f32 0.0, %v3027
    %v3029 = vpop.f32.mrb[0].mxu0
    %3030 = vmatprep.mubr.f32.mxu0 0.0
    %3031 = vmatmul.mubr.f32.gmra.mrb[0].mxu0 %v2939
    %v3032 = vpop.f32.mrb[0].mxu0
    %v3033 = vadd.f32 0.0, %v3032
    %v3034 = vpop.f32.mrb[0].mxu0
    %3035 = vmatprep.mubr.f32.mxu0 0.0
    %3036 = vmatmul.mubr.f32.gmra.mrb[0].mxu0 %v2942
    %v3037 = vpop.f32.mrb[0].mxu0
    %v3038 = vadd.f32 0.0, %v3037
    %v3039 = vpop.f32.mrb[0].mxu0
    %3040 = vmatprep.mubr.f32.mxu0 0.0
    %3041 = vmatmul.mubr.f32.gmra.mrb[0].mxu0 %v2945
    %v3042 = vpop.f32.mrb[0].mxu0
    %v3043 = vadd.f32 0.0, %v3042
    %v3044 = vpop.f32.mrb[0].mxu0
    %3045 = vmatprep.mubr.f32.mxu0 0.0
    %3046 = vmatmul.mubr.f32.gmra.mrb[0].mxu0 %v2948
    %v3047 = vpop.f32.mrb[0].mxu0
    %v3048 = vadd.f32 0.0, %v3047
    %v3049 = vpop.f32.mrb[0].mxu0
    %3050 = vmatprep.mubr.f32.mxu0 0.0
    %3051 = vmatmul.mubr.f32.gmra.mrb[0].mxu0 %v2951
    %v3052 = vpop.f32.mrb[0].mxu0
    %v3053 = vadd.f32 0.0, %v3052
    %v3054 = vpop.f32.mrb[0].mxu0
    %3055 = vmatprep.mubr.f32.mxu0 0.0
    %3056 = vmatmul.mubr.f32.gmra.mrb[0].mxu0 %v2954
    %v3057 = vpop.f32.mrb[0].mxu0
    %v3058 = vadd.f32 0.0, %v3057
    %v3059 = vpop.f32.mrb[0].mxu0
    %3060 = vdwg.mxu0
    %v3061 = vmul.f32 %v3023, 0.001953125
    %v3062 = vmul.f32 %v3028, 0.001953125
    %v3063 = vmul.f32 %v3033, 0.001953125
    %v3064 = vmul.f32 %v3038, 0.001953125
    %v3065 = vmul.f32 %v3043, 0.001953125
    %v3066 = vmul.f32 %v3048, 0.001953125
    %v3067 = vmul.f32 %v3053, 0.001953125
    %v3068 = vmul.f32 %v3058, 0.001953125
    %v3069 = vmul.f32 %v3061, %v3061
    %v3070 = vmul.f32 %v3062, %v3062
    %v3071 = vmul.f32 %v3063, %v3063
    %v3072 = vmul.f32 %v3064, %v3064
    %v3073 = vmul.f32 %v3065, %v3065
    %v3074 = vmul.f32 %v3066, %v3066
    %v3075 = vmul.f32 %v3067, %v3067
    %v3076 = vmul.f32 %v3068, %v3068
    %3085 = vrot.lane.b32.xlu0 %v3069, 1
    %v3086 = vpop.permute.xlu0 %3085
    %3087 = vrot.lane.b32.xlu0 %v3070, 1
    %v3088 = vpop.permute.xlu0 %3087
    %3089 = vrot.lane.b32.xlu0 %v3071, 1
    %v3090 = vpop.permute.xlu0 %3089
    %3091 = vrot.lane.b32.xlu0 %v3072, 1
    %v3092 = vpop.permute.xlu0 %3091
    %3093 = vrot.lane.b32.xlu0 %v3073, 1
    %v3094 = vpop.permute.xlu0 %3093
    %3095 = vrot.lane.b32.xlu0 %v3074, 1
    %v3096 = vpop.permute.xlu0 %3095
    %3097 = vrot.lane.b32.xlu0 %v3075, 1
    %v3098 = vpop.permute.xlu0 %3097
    %3099 = vrot.lane.b32.xlu0 %v3076, 1
    %v3100 = vpop.permute.xlu0 %3099
    %v3109 = vsub.f32 %v3061, %v3086
    %v3110 = vsub.f32 %v3062, %v3088
    %v3111 = vsub.f32 %v3063, %v3090
    %v3112 = vsub.f32 %v3064, %v3092
    %v3113 = vsub.f32 %v3065, %v3094
    %v3114 = vsub.f32 %v3066, %v3096
    %v3115 = vsub.f32 %v3067, %v3098
    %v3116 = vsub.f32 %v3068, %v3100
    %v3117 = vmax.f32 %v3109, 0.0
    %v3118 = vmax.f32 %v3110, 0.0
    %v3119 = vmax.f32 %v3111, 0.0
    %v3120 = vmax.f32 %v3112, 0.0
    %v3121 = vmax.f32 %v3113, 0.0
    %v3122 = vmax.f32 %v3114, 0.0
    %v3123 = vmax.f32 %v3115, 0.0
    %v3124 = vmax.f32 %v3116, 0.0
    %3126 = vset.pattern.permute.xlu0 0
    %3127 = vperm.xlu0 %3126, %v3061
    %v3128 = vpop.permute.xlu0 %3127
    %3131 = vset.pattern.permute.xlu0 0
    %3132 = vperm.xlu0 %3131, %v3062
    %v3133 = vpop.permute.xlu0 %3132
    %3136 = vset.pattern.permute.xlu0 0
    %3137 = vperm.xlu0 %3136, %v3063
    %v3138 = vpop.permute.xlu0 %3137
    %3141 = vset.pattern.permute.xlu0 0
    %3142 = vperm.xlu0 %3141, %v3064
    %v3143 = vpop.permute.xlu0 %3142
    %3146 = vset.pattern.permute.xlu0 0
    %3147 = vperm.xlu0 %3146, %v3065
    %v3148 = vpop.permute.xlu0 %3147
    %3151 = vset.pattern.permute.xlu0 0
    %3152 = vperm.xlu0 %3151, %v3066
    %v3153 = vpop.permute.xlu0 %3152
    %3156 = vset.pattern.permute.xlu0 0
    %3157 = vperm.xlu0 %3156, %v3067
    %v3158 = vpop.permute.xlu0 %3157
    %3161 = vset.pattern.permute.xlu0 0
    %3162 = vperm.xlu0 %3161, %v3068
    %v3163 = vpop.permute.xlu0 %3162
    %3165 = vset.pattern.permute.xlu0 2
    %3166 = vperm.xlu0 %3165, %v3061
    %v3167 = vpop.permute.xlu0 %3166
    %3169 = vset.pattern.permute.xlu0 2
    %3170 = vperm.xlu0 %3169, %v3062
    %v3171 = vpop.permute.xlu0 %3170
    %3173 = vset.pattern.permute.xlu0 2
    %3174 = vperm.xlu0 %3173, %v3063
    %v3175 = vpop.permute.xlu0 %3174
    %3177 = vset.pattern.permute.xlu0 2
    %3178 = vperm.xlu0 %3177, %v3064
    %v3179 = vpop.permute.xlu0 %3178
    %3181 = vset.pattern.permute.xlu0 2
    %3182 = vperm.xlu0 %3181, %v3065
    %v3183 = vpop.permute.xlu0 %3182
    %3185 = vset.pattern.permute.xlu0 2
    %3186 = vperm.xlu0 %3185, %v3066
    %v3187 = vpop.permute.xlu0 %3186
    %3189 = vset.pattern.permute.xlu0 2
    %3190 = vperm.xlu0 %3189, %v3067
    %v3191 = vpop.permute.xlu0 %3190
    %3193 = vset.pattern.permute.xlu0 2
    %3194 = vperm.xlu0 %3193, %v3068
    %v3195 = vpop.permute.xlu0 %3194
    %v3197 = vsel %vm751, %v3128, %v3167
    %v3198 = vsel %vm752, %v3128, %v3167
    %v3199 = vsel %vm751, %v3133, %v3171
    %v3200 = vsel %vm752, %v3133, %v3171
    %v3201 = vsel %vm751, %v3138, %v3175
    %v3202 = vsel %vm752, %v3138, %v3175
    %v3203 = vsel %vm751, %v3143, %v3179
    %v3204 = vsel %vm752, %v3143, %v3179
    %v3205 = vsel %vm751, %v3148, %v3183
    %v3206 = vsel %vm752, %v3148, %v3183
    %v3207 = vsel %vm751, %v3153, %v3187
    %v3208 = vsel %vm752, %v3153, %v3187
    %v3209 = vsel %vm751, %v3158, %v3191
    %v3210 = vsel %vm752, %v3158, %v3191
    %v3211 = vsel %vm751, %v3163, %v3195
    %v3212 = vsel %vm752, %v3163, %v3195
    %3214 = vset.pattern.permute.xlu0 1
    %3215 = vperm.xlu0 %3214, %v3117
    %v3216 = vpop.permute.xlu0 %3215
    %3219 = vset.pattern.permute.xlu0 1
    %3220 = vperm.xlu0 %3219, %v3118
    %v3221 = vpop.permute.xlu0 %3220
    %3224 = vset.pattern.permute.xlu0 1
    %3225 = vperm.xlu0 %3224, %v3119
    %v3226 = vpop.permute.xlu0 %3225
    %3229 = vset.pattern.permute.xlu0 1
    %3230 = vperm.xlu0 %3229, %v3120
    %v3231 = vpop.permute.xlu0 %3230
    %3234 = vset.pattern.permute.xlu0 1
    %3235 = vperm.xlu0 %3234, %v3121
    %v3236 = vpop.permute.xlu0 %3235
    %3239 = vset.pattern.permute.xlu0 1
    %3240 = vperm.xlu0 %3239, %v3122
    %v3241 = vpop.permute.xlu0 %3240
    %3244 = vset.pattern.permute.xlu0 1
    %3245 = vperm.xlu0 %3244, %v3123
    %v3246 = vpop.permute.xlu0 %3245
    %3249 = vset.pattern.permute.xlu0 1
    %3250 = vperm.xlu0 %3249, %v3124
    %v3251 = vpop.permute.xlu0 %3250
    %3253 = vset.pattern.permute.xlu0 3
    %3254 = vperm.xlu0 %3253, %v3117
    %v3255 = vpop.permute.xlu0 %3254
    %3257 = vset.pattern.permute.xlu0 3
    %3258 = vperm.xlu0 %3257, %v3118
    %v3259 = vpop.permute.xlu0 %3258
    %3261 = vset.pattern.permute.xlu0 3
    %3262 = vperm.xlu0 %3261, %v3119
    %v3263 = vpop.permute.xlu0 %3262
    %3265 = vset.pattern.permute.xlu0 3
    %3266 = vperm.xlu0 %3265, %v3120
    %v3267 = vpop.permute.xlu0 %3266
    %3269 = vset.pattern.permute.xlu0 3
    %3270 = vperm.xlu0 %3269, %v3121
    %v3271 = vpop.permute.xlu0 %3270
    %3273 = vset.pattern.permute.xlu0 3
    %3274 = vperm.xlu0 %3273, %v3122
    %v3275 = vpop.permute.xlu0 %3274
    %3277 = vset.pattern.permute.xlu0 3
    %3278 = vperm.xlu0 %3277, %v3123
    %v3279 = vpop.permute.xlu0 %3278
    %3281 = vset.pattern.permute.xlu0 3
    %3282 = vperm.xlu0 %3281, %v3124
    %v3283 = vpop.permute.xlu0 %3282
    %v3285 = vsel %vm751, %v3216, %v3255
    %v3286 = vsel %vm752, %v3216, %v3255
    %v3287 = vsel %vm751, %v3221, %v3259
    %v3288 = vsel %vm752, %v3221, %v3259
    %v3289 = vsel %vm751, %v3226, %v3263
    %v3290 = vsel %vm752, %v3226, %v3263
    %v3291 = vsel %vm751, %v3231, %v3267
    %v3292 = vsel %vm752, %v3231, %v3267
    %v3293 = vsel %vm751, %v3236, %v3271
    %v3294 = vsel %vm752, %v3236, %v3271
    %v3295 = vsel %vm751, %v3241, %v3275
    %v3296 = vsel %vm752, %v3241, %v3275
    %v3297 = vsel %vm751, %v3246, %v3279
    %v3298 = vsel %vm752, %v3246, %v3279
    %v3299 = vsel %vm751, %v3251, %v3283
    %v3300 = vsel %vm752, %v3251, %v3283
    %v3301 = vsub.f32 %v2795, %v3197
    %v3302 = vsub.f32 %v2796, %v3198
    %v3303 = vsub.f32 %v2797, %v3199
    %v3304 = vsub.f32 %v2798, %v3200
    %v3305 = vsub.f32 %v2799, %v3201
    %v3306 = vsub.f32 %v2800, %v3202
    %v3307 = vsub.f32 %v2801, %v3203
    %v3308 = vsub.f32 %v2802, %v3204
    %v3309 = vsub.f32 %v2803, %v3205
    %v3310 = vsub.f32 %v2804, %v3206
    %v3311 = vsub.f32 %v2805, %v3207
    %v3312 = vsub.f32 %v2806, %v3208
    %v3313 = vsub.f32 %v2807, %v3209
    %v3314 = vsub.f32 %v2808, %v3210
    %v3315 = vsub.f32 %v2809, %v3211
    %v3316 = vsub.f32 %v2810, %v3212
    %v3317 = vadd.f32 %v3285, 1e-05
    %v3318 = vadd.f32 %v3286, 1e-05
    %v3319 = vadd.f32 %v3287, 1e-05
    %v3320 = vadd.f32 %v3288, 1e-05
    %v3321 = vadd.f32 %v3289, 1e-05
    %v3322 = vadd.f32 %v3290, 1e-05
    %v3323 = vadd.f32 %v3291, 1e-05
    %v3324 = vadd.f32 %v3292, 1e-05
    %v3325 = vadd.f32 %v3293, 1e-05
    %v3326 = vadd.f32 %v3294, 1e-05
    %v3327 = vadd.f32 %v3295, 1e-05
    %v3328 = vadd.f32 %v3296, 1e-05
    %v3329 = vadd.f32 %v3297, 1e-05
    %v3330 = vadd.f32 %v3298, 1e-05
    %v3331 = vadd.f32 %v3299, 1e-05
    %v3332 = vadd.f32 %v3300, 1e-05
    %v3333 = vrsqrt.pop %v3317
    %v3334 = vrsqrt.pop %v3318
    %v3335 = vrsqrt.pop %v3319
    %v3336 = vrsqrt.pop %v3320
    %v3337 = vrsqrt.pop %v3321
    %v3338 = vrsqrt.pop %v3322
    %v3339 = vrsqrt.pop %v3323
    %v3340 = vrsqrt.pop %v3324
    %v3341 = vrsqrt.pop %v3325
    %v3342 = vrsqrt.pop %v3326
    %v3343 = vrsqrt.pop %v3327
    %v3344 = vrsqrt.pop %v3328
    %v3345 = vrsqrt.pop %v3329
    %v3346 = vrsqrt.pop %v3330
    %v3347 = vrsqrt.pop %v3331
    %v3348 = vrsqrt.pop %v3332
    %v3349 = vmul.f32 %v3301, %v3333
    %v3350 = vmul.f32 %v3302, %v3334
    %v3351 = vmul.f32 %v3303, %v3335
    %v3352 = vmul.f32 %v3304, %v3336
    %v3353 = vmul.f32 %v3305, %v3337
    %v3354 = vmul.f32 %v3306, %v3338
    %v3355 = vmul.f32 %v3307, %v3339
    %v3356 = vmul.f32 %v3308, %v3340
    %v3357 = vmul.f32 %v3309, %v3341
    %v3358 = vmul.f32 %v3310, %v3342
    %v3359 = vmul.f32 %v3311, %v3343
    %v3360 = vmul.f32 %v3312, %v3344
    %v3361 = vmul.f32 %v3313, %v3345
    %v3362 = vmul.f32 %v3314, %v3346
    %v3363 = vmul.f32 %v3315, %v3347
    %v3364 = vmul.f32 %v3316, %v3348
    %3365 = vset.pattern.permute.xlu0 6
    %3366 = vperm.xlu0 %3365, %v66
    %v3367 = vpop.permute.xlu0 %3366
    %3369 = vset.pattern.permute.xlu0 6
    %3370 = vperm.xlu0 %3369, %v67
    %v3371 = vpop.permute.xlu0 %3370
    %3373 = vset.pattern.permute.xlu0 6
    %3374 = vperm.xlu0 %3373, %v68
    %v3375 = vpop.permute.xlu0 %3374
    %3377 = vset.pattern.permute.xlu0 6
    %3378 = vperm.xlu0 %3377, %v69
    %v3379 = vpop.permute.xlu0 %3378
    %3381 = vset.pattern.permute.xlu0 6
    %3382 = vperm.xlu0 %3381, %v70
    %v3383 = vpop.permute.xlu0 %3382
    %3385 = vset.pattern.permute.xlu0 6
    %3386 = vperm.xlu0 %3385, %v71
    %v3387 = vpop.permute.xlu0 %3386
    %3389 = vset.pattern.permute.xlu0 6
    %3390 = vperm.xlu0 %3389, %v72
    %v3391 = vpop.permute.xlu0 %3390
    %3393 = vset.pattern.permute.xlu0 6
    %3394 = vperm.xlu0 %3393, %v73
    %v3395 = vpop.permute.xlu0 %3394
    %v3397 = vmul.f32 %v3349, %v3367
    %v3398 = vmul.f32 %v3350, %v3367
    %v3399 = vmul.f32 %v3351, %v3371
    %v3400 = vmul.f32 %v3352, %v3371
    %v3401 = vmul.f32 %v3353, %v3375
    %v3402 = vmul.f32 %v3354, %v3375
    %v3403 = vmul.f32 %v3355, %v3379
    %v3404 = vmul.f32 %v3356, %v3379
    %v3405 = vmul.f32 %v3357, %v3383
    %v3406 = vmul.f32 %v3358, %v3383
    %v3407 = vmul.f32 %v3359, %v3387
    %v3408 = vmul.f32 %v3360, %v3387
    %v3409 = vmul.f32 %v3361, %v3391
    %v3410 = vmul.f32 %v3362, %v3391
    %v3411 = vmul.f32 %v3363, %v3395
    %v3412 = vmul.f32 %v3364, %v3395
    %3413 = vset.pattern.permute.xlu0 7
    %3414 = vperm.xlu0 %3413, %v66
    %v3415 = vpop.permute.xlu0 %3414
    %3417 = vset.pattern.permute.xlu0 7
    %3418 = vperm.xlu0 %3417, %v67
    %v3419 = vpop.permute.xlu0 %3418
    %3421 = vset.pattern.permute.xlu0 7
    %3422 = vperm.xlu0 %3421, %v68
    %v3423 = vpop.permute.xlu0 %3422
    %3425 = vset.pattern.permute.xlu0 7
    %3426 = vperm.xlu0 %3425, %v69
    %v3427 = vpop.permute.xlu0 %3426
    %3429 = vset.pattern.permute.xlu0 7
    %3430 = vperm.xlu0 %3429, %v70
    %v3431 = vpop.permute.xlu0 %3430
    %3433 = vset.pattern.permute.xlu0 7
    %3434 = vperm.xlu0 %3433, %v71
    %v3435 = vpop.permute.xlu0 %3434
    %3437 = vset.pattern.permute.xlu0 7
    %3438 = vperm.xlu0 %3437, %v72
    %v3439 = vpop.permute.xlu0 %3438
    %3441 = vset.pattern.permute.xlu0 7
    %3442 = vperm.xlu0 %3441, %v73
    %v3443 = vpop.permute.xlu0 %3442
    %v3445 = vadd.f32 %v3397, %v3415
    %v3446 = vadd.f32 %v3398, %v3415
    %v3447 = vadd.f32 %v3399, %v3419
    %v3448 = vadd.f32 %v3400, %v3419
    %v3449 = vadd.f32 %v3401, %v3423
    %v3450 = vadd.f32 %v3402, %v3423
    %v3451 = vadd.f32 %v3403, %v3427
    %v3452 = vadd.f32 %v3404, %v3427
    %v3453 = vadd.f32 %v3405, %v3431
    %v3454 = vadd.f32 %v3406, %v3431
    %v3455 = vadd.f32 %v3407, %v3435
    %v3456 = vadd.f32 %v3408, %v3435
    %v3457 = vadd.f32 %v3409, %v3439
    %v3458 = vadd.f32 %v3410, %v3439
    %v3459 = vadd.f32 %v3411, %v3443
    %v3460 = vadd.f32 %v3412, %v3443
    %v3461 = vpack.c.bf16 %v3447, %v3445
    %v3462 = vpack.c.bf16 %v3448, %v3446
    %v3463 = vpack.c.bf16 %v3451, %v3449
    %v3464 = vpack.c.bf16 %v3452, %v3450
    %v3465 = vpack.c.bf16 %v3455, %v3453
    %v3466 = vpack.c.bf16 %v3456, %v3454
    %v3467 = vpack.c.bf16 %v3459, %v3457
    %v3468 = vpack.c.bf16 %v3460, %v3458
    %v3469 = vld [vmem:[%s12] sm:$0xf]
    %v3470 = vld [vmem:[%s12 + $0x4] sm:$0xf]
    %v3471 = vld [vmem:[%s12 + $0x8] sm:$0xf]
    %v3472 = vld [vmem:[%s12 + $0xc] sm:$0xf]
    %v3473 = vld [vmem:[%s12 + $0x10] sm:$0xf]
    %v3474 = vld [vmem:[%s12 + $0x14] sm:$0xf]
    %v3475 = vld [vmem:[%s12 + $0x18] sm:$0xf]
    %v3476 = vld [vmem:[%s12 + $0x1c] sm:$0xf]
    %v3477 = vld [vmem:[%s5] sm:$0xff]
    %v3478 = vld [vmem:[%s5 + $0x8] sm:$0xff]
    %v3479 = vld [vmem:[%s5 + $0x10] sm:$0xff]
    %v3480 = vld [vmem:[%s5 + $0x18] sm:$0xff]
    %v3481 = vld [vmem:[%s5 + $0x20] sm:$0xff]
    %v3482 = vld [vmem:[%s5 + $0x28] sm:$0xff]
    %v3483 = vld [vmem:[%s5 + $0x30] sm:$0xff]
    %v3484 = vld [vmem:[%s5 + $0x38] sm:$0xff]
    %3486 = vset.pattern.permute.xlu0 0
    %3487 = vperm.xlu0 %3486, %v3477
    %v3488 = vpop.permute.xlu0 %3487
    %3491 = vset.pattern.permute.xlu0 0
    %3492 = vperm.xlu0 %3491, %v3478
    %v3493 = vpop.permute.xlu0 %3492
    %3496 = vset.pattern.permute.xlu0 0
    %3497 = vperm.xlu0 %3496, %v3479
    %v3498 = vpop.permute.xlu0 %3497
    %3501 = vset.pattern.permute.xlu0 0
    %3502 = vperm.xlu0 %3501, %v3480
    %v3503 = vpop.permute.xlu0 %3502
    %3506 = vset.pattern.permute.xlu0 0
    %3507 = vperm.xlu0 %3506, %v3481
    %v3508 = vpop.permute.xlu0 %3507
    %3511 = vset.pattern.permute.xlu0 0
    %3512 = vperm.xlu0 %3511, %v3482
    %v3513 = vpop.permute.xlu0 %3512
    %3516 = vset.pattern.permute.xlu0 0
    %3517 = vperm.xlu0 %3516, %v3483
    %v3518 = vpop.permute.xlu0 %3517
    %3521 = vset.pattern.permute.xlu0 0
    %3522 = vperm.xlu0 %3521, %v3484
    %v3523 = vpop.permute.xlu0 %3522
    %v3533 = vunpack.c.l.b16 %v3469
    %v3534 = vunpack.c.l.b16 %v3470
    %v3535 = vunpack.c.l.b16 %v3471
    %v3536 = vunpack.c.l.b16 %v3472
    %v3537 = vunpack.c.l.b16 %v3473
    %v3538 = vunpack.c.l.b16 %v3474
    %v3539 = vunpack.c.l.b16 %v3475
    %v3540 = vunpack.c.l.b16 %v3476
    %v3541 = vpack.c.b16 %v3534, %v3533
    %v3542 = vpack.c.b16 %v3536, %v3535
    %v3543 = vpack.c.b16 %v3538, %v3537
    %v3544 = vpack.c.b16 %v3540, %v3539
    %v3546 = vsel %vm205, %v3541, 0
    %v3549 = vsel %vm205, %v3542, 0
    %v3552 = vsel %vm205, %v3543, 0
    %v3555 = vsel %vm205, %v3544, 0
    %3557 = vmatprep.subr.bf16.mxu0 %v3462
    %3558 = vmatpush1.bf16.msra.mxu0 %v3461
    %3559 = vmatprep.subr.bf16.mxu0 %v3464
    %3560 = vmatpush1.bf16.msra.mxu0 %v3463
    %3561 = vmatprep.subr.bf16.mxu0 %v3466
    %3562 = vmatpush1.bf16.msra.mxu0 %v3465
    %3563 = vmatprep.subr.bf16.mxu0 %v3468
    %3564 = vmatpush1.bf16.msra.mxu0 %v3467
    %3565 = vmatprep.subr.bf16.mxu0 0
    %3566 = vmatpush1.bf16.msra.mxu0 0
    %3567 = vmatprep.subr.bf16.mxu0 0
    %3568 = vmatpush1.bf16.msra.mxu0 0
    %3569 = vmatprep.subr.bf16.mxu0 0
    %3570 = vmatpush1.bf16.msra.mxu0 0
    %3571 = vmatprep.subr.bf16.mxu0 0
    %3572 = vmatpush1.bf16.msra.mxu0 0
    %3573 = vmatprep.subr.bf16.mxu0 0
    %3574 = vmatpush1.bf16.msra.mxu0 0
    %3575 = vmatprep.subr.bf16.mxu0 0
    %3576 = vmatpush1.bf16.msra.mxu0 0
    %3577 = vmatprep.subr.bf16.mxu0 0
    %3578 = vmatpush1.bf16.msra.mxu0 0
    %3579 = vmatprep.subr.bf16.mxu0 0
    %3580 = vmatpush1.bf16.msra.mxu0 0
    %3581 = vmatprep.subr.bf16.mxu0 0
    %3582 = vmatpush1.bf16.msra.mxu0 0
    %3583 = vmatprep.subr.bf16.mxu0 0
    %3584 = vmatpush1.bf16.msra.mxu0 0
    %3585 = vmatprep.subr.bf16.mxu0 0
    %3586 = vmatpush1.bf16.msra.mxu0 0
    %3587 = vmatprep.subr.bf16.mxu0 0
    %3588 = vmatpush1.bf16.msra.mxu0 0
    %3589 = vmatprep.mubr.bf16.mxu0 0
    %3590 = vmatmul.mubr.bf16.gmra.mrb[0].mxu0 %v3546
    %v3591 = vpop.f32.mrb[0].mxu0
    %v3592 = vadd.f32 %v3488, %v3591
    %v3593 = vpop.f32.mrb[0].mxu0
    %v3594 = vadd.f32 %v3488, %v3593
    %v3595 = vpop.f32.mrb[0].mxu0
    %v3596 = vadd.f32 %v3493, %v3595
    %v3597 = vpop.f32.mrb[0].mxu0
    %v3598 = vadd.f32 %v3493, %v3597
    %3599 = vmatprep.mubr.bf16.mxu0 0
    %3600 = vmatmul.mubr.bf16.gmra.mrb[0].mxu0 %v3549
    %v3601 = vpop.f32.mrb[0].mxu0
    %v3602 = vadd.f32 %v3498, %v3601
    %v3603 = vpop.f32.mrb[0].mxu0
    %v3604 = vadd.f32 %v3498, %v3603
    %v3605 = vpop.f32.mrb[0].mxu0
    %v3606 = vadd.f32 %v3503, %v3605
    %v3607 = vpop.f32.mrb[0].mxu0
    %v3608 = vadd.f32 %v3503, %v3607
    %3609 = vmatprep.mubr.bf16.mxu0 0
    %3610 = vmatmul.mubr.bf16.gmra.mrb[0].mxu0 %v3552
    %v3611 = vpop.f32.mrb[0].mxu0
    %v3612 = vadd.f32 %v3508, %v3611
    %v3613 = vpop.f32.mrb[0].mxu0
    %v3614 = vadd.f32 %v3508, %v3613
    %v3615 = vpop.f32.mrb[0].mxu0
    %v3616 = vadd.f32 %v3513, %v3615
    %v3617 = vpop.f32.mrb[0].mxu0
    %v3618 = vadd.f32 %v3513, %v3617
    %3619 = vmatprep.mubr.bf16.mxu0 0
    %3620 = vmatmul.mubr.bf16.gmra.mrb[0].mxu0 %v3555
    %v3621 = vpop.f32.mrb[0].mxu0
    %v3622 = vadd.f32 %v3518, %v3621
    %v3623 = vpop.f32.mrb[0].mxu0
    %v3624 = vadd.f32 %v3518, %v3623
    %v3625 = vpop.f32.mrb[0].mxu0
    %v3626 = vadd.f32 %v3523, %v3625
    %v3627 = vpop.f32.mrb[0].mxu0
    %v3628 = vadd.f32 %v3523, %v3627
    %3629 = vdwg.mxu0
    %v3630 = vmul.f32 %v3592, %v3592
    %v3631 = vmul.f32 %v3594, %v3594
    %v3632 = vmul.f32 %v3596, %v3596
    %v3633 = vmul.f32 %v3598, %v3598
    %v3634 = vmul.f32 %v3602, %v3602
    %v3635 = vmul.f32 %v3604, %v3604
    %v3636 = vmul.f32 %v3606, %v3606
    %v3637 = vmul.f32 %v3608, %v3608
    %v3638 = vmul.f32 %v3612, %v3612
    %v3639 = vmul.f32 %v3614, %v3614
    %v3640 = vmul.f32 %v3616, %v3616
    %v3641 = vmul.f32 %v3618, %v3618
    %v3642 = vmul.f32 %v3622, %v3622
    %v3643 = vmul.f32 %v3624, %v3624
    %v3644 = vmul.f32 %v3626, %v3626
    %v3645 = vmul.f32 %v3628, %v3628
    %v3646 = vmul.f32 %v3630, %v3592
    %v3647 = vmul.f32 %v3631, %v3594
    %v3648 = vmul.f32 %v3632, %v3596
    %v3649 = vmul.f32 %v3633, %v3598
    %v3650 = vmul.f32 %v3634, %v3602
    %v3651 = vmul.f32 %v3635, %v3604
    %v3652 = vmul.f32 %v3636, %v3606
    %v3653 = vmul.f32 %v3637, %v3608
    %v3654 = vmul.f32 %v3638, %v3612
    %v3655 = vmul.f32 %v3639, %v3614
    %v3656 = vmul.f32 %v3640, %v3616
    %v3657 = vmul.f32 %v3641, %v3618
    %v3658 = vmul.f32 %v3642, %v3622
    %v3659 = vmul.f32 %v3643, %v3624
    %v3660 = vmul.f32 %v3644, %v3626
    %v3661 = vmul.f32 %v3645, %v3628
    %v3662 = vmul.f32 %v3646, 0.044715
    %v3663 = vmul.f32 %v3647, 0.044715
    %v3664 = vmul.f32 %v3648, 0.044715
    %v3665 = vmul.f32 %v3649, 0.044715
    %v3666 = vmul.f32 %v3650, 0.044715
    %v3667 = vmul.f32 %v3651, 0.044715
    %v3668 = vmul.f32 %v3652, 0.044715
    %v3669 = vmul.f32 %v3653, 0.044715
    %v3670 = vmul.f32 %v3654, 0.044715
    %v3671 = vmul.f32 %v3655, 0.044715
    %v3672 = vmul.f32 %v3656, 0.044715
    %v3673 = vmul.f32 %v3657, 0.044715
    %v3674 = vmul.f32 %v3658, 0.044715
    %v3675 = vmul.f32 %v3659, 0.044715
    %v3676 = vmul.f32 %v3660, 0.044715
    %v3677 = vmul.f32 %v3661, 0.044715
    %v3678 = vadd.f32 %v3592, %v3662
    %v3679 = vadd.f32 %v3594, %v3663
    %v3680 = vadd.f32 %v3596, %v3664
    %v3681 = vadd.f32 %v3598, %v3665
    %v3682 = vadd.f32 %v3602, %v3666
    %v3683 = vadd.f32 %v3604, %v3667
    %v3684 = vadd.f32 %v3606, %v3668
    %v3685 = vadd.f32 %v3608, %v3669
    %v3686 = vadd.f32 %v3612, %v3670
    %v3687 = vadd.f32 %v3614, %v3671
    %v3688 = vadd.f32 %v3616, %v3672
    %v3689 = vadd.f32 %v3618, %v3673
    %v3690 = vadd.f32 %v3622, %v3674
    %v3691 = vadd.f32 %v3624, %v3675
    %v3692 = vadd.f32 %v3626, %v3676
    %v3693 = vadd.f32 %v3628, %v3677
    %v3694 = vmul.f32 %v3678, 0.7978846
    %v3695 = vmul.f32 %v3679, 0.7978846
    %v3696 = vmul.f32 %v3680, 0.7978846
    %v3697 = vmul.f32 %v3681, 0.7978846
    %v3698 = vmul.f32 %v3682, 0.7978846
    %v3699 = vmul.f32 %v3683, 0.7978846
    %v3700 = vmul.f32 %v3684, 0.7978846
    %v3701 = vmul.f32 %v3685, 0.7978846
    %v3702 = vmul.f32 %v3686, 0.7978846
    %v3703 = vmul.f32 %v3687, 0.7978846
    %v3704 = vmul.f32 %v3688, 0.7978846
    %v3705 = vmul.f32 %v3689, 0.7978846
    %v3706 = vmul.f32 %v3690, 0.7978846
    %v3707 = vmul.f32 %v3691, 0.7978846
    %v3708 = vmul.f32 %v3692, 0.7978846
    %v3709 = vmul.f32 %v3693, 0.7978846
    %v3710 = vmul.f32 %v3592, 0.5
    %v3711 = vmul.f32 %v3594, 0.5
    %v3712 = vmul.f32 %v3596, 0.5
    %v3713 = vmul.f32 %v3598, 0.5
    %v3714 = vmul.f32 %v3602, 0.5
    %v3715 = vmul.f32 %v3604, 0.5
    %v3716 = vmul.f32 %v3606, 0.5
    %v3717 = vmul.f32 %v3608, 0.5
    %v3718 = vmul.f32 %v3612, 0.5
    %v3719 = vmul.f32 %v3614, 0.5
    %v3720 = vmul.f32 %v3616, 0.5
    %v3721 = vmul.f32 %v3618, 0.5
    %v3722 = vmul.f32 %v3622, 0.5
    %v3723 = vmul.f32 %v3624, 0.5
    %v3724 = vmul.f32 %v3626, 0.5
    %v3725 = vmul.f32 %v3628, 0.5
    %v3726 = vtanh.pop %v3694
    %v3727 = vtanh.pop %v3695
    %v3728 = vtanh.pop %v3696
    %v3729 = vtanh.pop %v3697
    %v3730 = vtanh.pop %v3698
    %v3731 = vtanh.pop %v3699
    %v3732 = vtanh.pop %v3700
    %v3733 = vtanh.pop %v3701
    %v3734 = vtanh.pop %v3702
    %v3735 = vtanh.pop %v3703
    %v3736 = vtanh.pop %v3704
    %v3737 = vtanh.pop %v3705
    %v3738 = vtanh.pop %v3706
    %v3739 = vtanh.pop %v3707
    %v3740 = vtanh.pop %v3708
    %v3741 = vtanh.pop %v3709
    %v3742 = vadd.f32 %v3726, 1.0
    %v3743 = vadd.f32 %v3727, 1.0
    %v3744 = vadd.f32 %v3728, 1.0
    %v3745 = vadd.f32 %v3729, 1.0
    %v3746 = vadd.f32 %v3730, 1.0
    %v3747 = vadd.f32 %v3731, 1.0
    %v3748 = vadd.f32 %v3732, 1.0
    %v3749 = vadd.f32 %v3733, 1.0
    %v3750 = vadd.f32 %v3734, 1.0
    %v3751 = vadd.f32 %v3735, 1.0
    %v3752 = vadd.f32 %v3736, 1.0
    %v3753 = vadd.f32 %v3737, 1.0
    %v3754 = vadd.f32 %v3738, 1.0
    %v3755 = vadd.f32 %v3739, 1.0
    %v3756 = vadd.f32 %v3740, 1.0
    %v3757 = vadd.f32 %v3741, 1.0
    %v3758 = vmul.f32 %v3710, %v3742
    %v3759 = vmul.f32 %v3711, %v3743
    %v3760 = vmul.f32 %v3712, %v3744
    %v3761 = vmul.f32 %v3713, %v3745
    %v3762 = vmul.f32 %v3714, %v3746
    %v3763 = vmul.f32 %v3715, %v3747
    %v3764 = vmul.f32 %v3716, %v3748
    %v3765 = vmul.f32 %v3717, %v3749
    %v3766 = vmul.f32 %v3718, %v3750
    %v3767 = vmul.f32 %v3719, %v3751
    %v3768 = vmul.f32 %v3720, %v3752
    %v3769 = vmul.f32 %v3721, %v3753
    %v3770 = vmul.f32 %v3722, %v3754
    %v3771 = vmul.f32 %v3723, %v3755
    %v3772 = vmul.f32 %v3724, %v3756
    %v3773 = vmul.f32 %v3725, %v3757
    %v3774 = vpack.c.bf16 %v3760, %v3758
    %v3775 = vpack.c.bf16 %v3761, %v3759
    %v3776 = vpack.c.bf16 %v3764, %v3762
    %v3777 = vpack.c.bf16 %v3765, %v3763
    %v3778 = vpack.c.bf16 %v3768, %v3766
    %v3779 = vpack.c.bf16 %v3769, %v3767
    %v3780 = vpack.c.bf16 %v3772, %v3770
    %v3781 = vpack.c.bf16 %v3773, %v3771
    %3782 = vst [vmem:[#allocation2] sm:$0xff] %v3774
    %3783 = vst [vmem:[#allocation2 + $0x8] sm:$0xff] %v3775
    %3784 = vst [vmem:[#allocation2 + $0x10] sm:$0xff] %v3776
    %3785 = vst [vmem:[#allocation2 + $0x18] sm:$0xff] %v3777
    %3786 = vst [vmem:[#allocation2 + $0x20] sm:$0xff] %v3778
    %3787 = vst [vmem:[#allocation2 + $0x28] sm:$0xff] %v3779
    %3788 = vst [vmem:[#allocation2 + $0x30] sm:$0xff] %v3780
    %3789 = vst [vmem:[#allocation2 + $0x38] sm:$0xff] %v3781
    %s3790 = scalar_lea.vmem %s12, 32
    %v3791 = vld [vmem:[%s3790] sm:$0xf]
    %v3792 = vld [vmem:[%s3790 + $0x4] sm:$0xf]
    %v3793 = vld [vmem:[%s3790 + $0x8] sm:$0xf]
    %v3794 = vld [vmem:[%s3790 + $0xc] sm:$0xf]
    %v3795 = vld [vmem:[%s3790 + $0x10] sm:$0xf]
    %v3796 = vld [vmem:[%s3790 + $0x14] sm:$0xf]
    %v3797 = vld [vmem:[%s3790 + $0x18] sm:$0xf]
    %v3798 = vld [vmem:[%s3790 + $0x1c] sm:$0xf]
    %s3799 = scalar_lea.vmem %s5, 64
    %v3800 = vld [vmem:[%s3799] sm:$0xff]
    %v3801 = vld [vmem:[%s3799 + $0x8] sm:$0xff]
    %v3802 = vld [vmem:[%s3799 + $0x10] sm:$0xff]
    %v3803 = vld [vmem:[%s3799 + $0x18] sm:$0xff]
    %v3804 = vld [vmem:[%s3799 + $0x20] sm:$0xff]
    %v3805 = vld [vmem:[%s3799 + $0x28] sm:$0xff]
    %v3806 = vld [vmem:[%s3799 + $0x30] sm:$0xff]
    %v3807 = vld [vmem:[%s3799 + $0x38] sm:$0xff]
    %3809 = vset.pattern.permute.xlu0 0
    %3810 = vperm.xlu0 %3809, %v3800
    %v3811 = vpop.permute.xlu0 %3810
    %3814 = vset.pattern.permute.xlu0 0
    %3815 = vperm.xlu0 %3814, %v3801
    %v3816 = vpop.permute.xlu0 %3815
    %3819 = vset.pattern.permute.xlu0 0
    %3820 = vperm.xlu0 %3819, %v3802
    %v3821 = vpop.permute.xlu0 %3820
    %3824 = vset.pattern.permute.xlu0 0
    %3825 = vperm.xlu0 %3824, %v3803
    %v3826 = vpop.permute.xlu0 %3825
    %3829 = vset.pattern.permute.xlu0 0
    %3830 = vperm.xlu0 %3829, %v3804
    %v3831 = vpop.permute.xlu0 %3830
    %3834 = vset.pattern.permute.xlu0 0
    %3835 = vperm.xlu0 %3834, %v3805
    %v3836 = vpop.permute.xlu0 %3835
    %3839 = vset.pattern.permute.xlu0 0
    %3840 = vperm.xlu0 %3839, %v3806
    %v3841 = vpop.permute.xlu0 %3840
    %3844 = vset.pattern.permute.xlu0 0
    %3845 = vperm.xlu0 %3844, %v3807
    %v3846 = vpop.permute.xlu0 %3845
    %v3856 = vunpack.c.l.b16 %v3791
    %v3857 = vunpack.c.l.b16 %v3792
    %v3858 = vunpack.c.l.b16 %v3793
    %v3859 = vunpack.c.l.b16 %v3794
    %v3860 = vunpack.c.l.b16 %v3795
    %v3861 = vunpack.c.l.b16 %v3796
    %v3862 = vunpack.c.l.b16 %v3797
    %v3863 = vunpack.c.l.b16 %v3798
    %v3864 = vpack.c.b16 %v3857, %v3856
    %v3865 = vpack.c.b16 %v3859, %v3858
    %v3866 = vpack.c.b16 %v3861, %v3860
    %v3867 = vpack.c.b16 %v3863, %v3862
    %v3869 = vsel %vm205, %v3864, 0
    %v3872 = vsel %vm205, %v3865, 0
    %v3875 = vsel %vm205, %v3866, 0
    %v3878 = vsel %vm205, %v3867, 0
    %3880 = vmatprep.subr.bf16.mxu0 %v3462
    %3881 = vmatpush1.bf16.msra.mxu0 %v3461
    %3882 = vmatprep.subr.bf16.mxu0 %v3464
    %3883 = vmatpush1.bf16.msra.mxu0 %v3463
    %3884 = vmatprep.subr.bf16.mxu0 %v3466
    %3885 = vmatpush1.bf16.msra.mxu0 %v3465
    %3886 = vmatprep.subr.bf16.mxu0 %v3468
    %3887 = vmatpush1.bf16.msra.mxu0 %v3467
    %3888 = vmatprep.subr.bf16.mxu0 0
    %3889 = vmatpush1.bf16.msra.mxu0 0
    %3890 = vmatprep.subr.bf16.mxu0 0
    %3891 = vmatpush1.bf16.msra.mxu0 0
    %3892 = vmatprep.subr.bf16.mxu0 0
    %3893 = vmatpush1.bf16.msra.mxu0 0
    %3894 = vmatprep.subr.bf16.mxu0 0
    %3895 = vmatpush1.bf16.msra.mxu0 0
    %3896 = vmatprep.subr.bf16.mxu0 0
    %3897 = vmatpush1.bf16.msra.mxu0 0
    %3898 = vmatprep.subr.bf16.mxu0 0
    %3899 = vmatpush1.bf16.msra.mxu0 0
    %3900 = vmatprep.subr.bf16.mxu0 0
    %3901 = vmatpush1.bf16.msra.mxu0 0
    %3902 = vmatprep.subr.bf16.mxu0 0
    %3903 = vmatpush1.bf16.msra.mxu0 0
    %3904 = vmatprep.subr.bf16.mxu0 0
    %3905 = vmatpush1.bf16.msra.mxu0 0
    %3906 = vmatprep.subr.bf16.mxu0 0
    %3907 = vmatpush1.bf16.msra.mxu0 0
    %3908 = vmatprep.subr.bf16.mxu0 0
    %3909 = vmatpush1.bf16.msra.mxu0 0
    %3910 = vmatprep.subr.bf16.mxu0 0
    %3911 = vmatpush1.bf16.msra.mxu0 0
    %3912 = vmatprep.mubr.bf16.mxu0 0
    %3913 = vmatmul.mubr.bf16.gmra.mrb[0].mxu0 %v3869
    %v3914 = vpop.f32.mrb[0].mxu0
    %v3915 = vadd.f32 %v3811, %v3914
    %v3916 = vpop.f32.mrb[0].mxu0
    %v3917 = vadd.f32 %v3811, %v3916
    %v3918 = vpop.f32.mrb[0].mxu0
    %v3919 = vadd.f32 %v3816, %v3918
    %v3920 = vpop.f32.mrb[0].mxu0
    %v3921 = vadd.f32 %v3816, %v3920
    %3922 = vmatprep.mubr.bf16.mxu0 0
    %3923 = vmatmul.mubr.bf16.gmra.mrb[0].mxu0 %v3872
    %v3924 = vpop.f32.mrb[0].mxu0
    %v3925 = vadd.f32 %v3821, %v3924
    %v3926 = vpop.f32.mrb[0].mxu0
    %v3927 = vadd.f32 %v3821, %v3926
    %v3928 = vpop.f32.mrb[0].mxu0
    %v3929 = vadd.f32 %v3826, %v3928
    %v3930 = vpop.f32.mrb[0].mxu0
    %v3931 = vadd.f32 %v3826, %v3930
    %3932 = vmatprep.mubr.bf16.mxu0 0
    %3933 = vmatmul.mubr.bf16.gmra.mrb[0].mxu0 %v3875
    %v3934 = vpop.f32.mrb[0].mxu0
    %v3935 = vadd.f32 %v3831, %v3934
    %v3936 = vpop.f32.mrb[0].mxu0
    %v3937 = vadd.f32 %v3831, %v3936
    %v3938 = vpop.f32.mrb[0].mxu0
    %v3939 = vadd.f32 %v3836, %v3938
    %v3940 = vpop.f32.mrb[0].mxu0
    %v3941 = vadd.f32 %v3836, %v3940
    %3942 = vmatprep.mubr.bf16.mxu0 0
    %3943 = vmatmul.mubr.bf16.gmra.mrb[0].mxu0 %v3878
    %v3944 = vpop.f32.mrb[0].mxu0
    %v3945 = vadd.f32 %v3841, %v3944
    %v3946 = vpop.f32.mrb[0].mxu0
    %v3947 = vadd.f32 %v3841, %v3946
    %v3948 = vpop.f32.mrb[0].mxu0
    %v3949 = vadd.f32 %v3846, %v3948
    %v3950 = vpop.f32.mrb[0].mxu0
    %v3951 = vadd.f32 %v3846, %v3950
    %3952 = vdwg.mxu0
    %v3953 = vmul.f32 %v3915, %v3915
    %v3954 = vmul.f32 %v3917, %v3917
    %v3955 = vmul.f32 %v3919, %v3919
    %v3956 = vmul.f32 %v3921, %v3921
    %v3957 = vmul.f32 %v3925, %v3925
    %v3958 = vmul.f32 %v3927, %v3927
    %v3959 = vmul.f32 %v3929, %v3929
    %v3960 = vmul.f32 %v3931, %v3931
    %v3961 = vmul.f32 %v3935, %v3935
    %v3962 = vmul.f32 %v3937, %v3937
    %v3963 = vmul.f32 %v3939, %v3939
    %v3964 = vmul.f32 %v3941, %v3941
    %v3965 = vmul.f32 %v3945, %v3945
    %v3966 = vmul.f32 %v3947, %v3947
    %v3967 = vmul.f32 %v3949, %v3949
    %v3968 = vmul.f32 %v3951, %v3951
    %v3969 = vmul.f32 %v3953, %v3915
    %v3970 = vmul.f32 %v3954, %v3917
    %v3971 = vmul.f32 %v3955, %v3919
    %v3972 = vmul.f32 %v3956, %v3921
    %v3973 = vmul.f32 %v3957, %v3925
    %v3974 = vmul.f32 %v3958, %v3927
    %v3975 = vmul.f32 %v3959, %v3929
    %v3976 = vmul.f32 %v3960, %v3931
    %v3977 = vmul.f32 %v3961, %v3935
    %v3978 = vmul.f32 %v3962, %v3937
    %v3979 = vmul.f32 %v3963, %v3939
    %v3980 = vmul.f32 %v3964, %v3941
    %v3981 = vmul.f32 %v3965, %v3945
    %v3982 = vmul.f32 %v3966, %v3947
    %v3983 = vmul.f32 %v3967, %v3949
    %v3984 = vmul.f32 %v3968, %v3951
    %v3985 = vmul.f32 %v3969, 0.044715
    %v3986 = vmul.f32 %v3970, 0.044715
    %v3987 = vmul.f32 %v3971, 0.044715
    %v3988 = vmul.f32 %v3972, 0.044715
    %v3989 = vmul.f32 %v3973, 0.044715
    %v3990 = vmul.f32 %v3974, 0.044715
    %v3991 = vmul.f32 %v3975, 0.044715
    %v3992 = vmul.f32 %v3976, 0.044715
    %v3993 = vmul.f32 %v3977, 0.044715
    %v3994 = vmul.f32 %v3978, 0.044715
    %v3995 = vmul.f32 %v3979, 0.044715
    %v3996 = vmul.f32 %v3980, 0.044715
    %v3997 = vmul.f32 %v3981, 0.044715
    %v3998 = vmul.f32 %v3982, 0.044715
    %v3999 = vmul.f32 %v3983, 0.044715
    %v4000 = vmul.f32 %v3984, 0.044715
    %v4001 = vadd.f32 %v3915, %v3985
    %v4002 = vadd.f32 %v3917, %v3986
    %v4003 = vadd.f32 %v3919, %v3987
    %v4004 = vadd.f32 %v3921, %v3988
    %v4005 = vadd.f32 %v3925, %v3989
    %v4006 = vadd.f32 %v3927, %v3990
    %v4007 = vadd.f32 %v3929, %v3991
    %v4008 = vadd.f32 %v3931, %v3992
    %v4009 = vadd.f32 %v3935, %v3993
    %v4010 = vadd.f32 %v3937, %v3994
    %v4011 = vadd.f32 %v3939, %v3995
    %v4012 = vadd.f32 %v3941, %v3996
    %v4013 = vadd.f32 %v3945, %v3997
    %v4014 = vadd.f32 %v3947, %v3998
    %v4015 = vadd.f32 %v3949, %v3999
    %v4016 = vadd.f32 %v3951, %v4000
    %v4017 = vmul.f32 %v4001, 0.7978846
    %v4018 = vmul.f32 %v4002, 0.7978846
    %v4019 = vmul.f32 %v4003, 0.7978846
    %v4020 = vmul.f32 %v4004, 0.7978846
    %v4021 = vmul.f32 %v4005, 0.7978846
    %v4022 = vmul.f32 %v4006, 0.7978846
    %v4023 = vmul.f32 %v4007, 0.7978846
    %v4024 = vmul.f32 %v4008, 0.7978846
    %v4025 = vmul.f32 %v4009, 0.7978846
    %v4026 = vmul.f32 %v4010, 0.7978846
    %v4027 = vmul.f32 %v4011, 0.7978846
    %v4028 = vmul.f32 %v4012, 0.7978846
    %v4029 = vmul.f32 %v4013, 0.7978846
    %v4030 = vmul.f32 %v4014, 0.7978846
    %v4031 = vmul.f32 %v4015, 0.7978846
    %v4032 = vmul.f32 %v4016, 0.7978846
    %v4033 = vmul.f32 %v3915, 0.5
    %v4034 = vmul.f32 %v3917, 0.5
    %v4035 = vmul.f32 %v3919, 0.5
    %v4036 = vmul.f32 %v3921, 0.5
    %v4037 = vmul.f32 %v3925, 0.5
    %v4038 = vmul.f32 %v3927, 0.5
    %v4039 = vmul.f32 %v3929, 0.5
    %v4040 = vmul.f32 %v3931, 0.5
    %v4041 = vmul.f32 %v3935, 0.5
    %v4042 = vmul.f32 %v3937, 0.5
    %v4043 = vmul.f32 %v3939, 0.5
    %v4044 = vmul.f32 %v3941, 0.5
    %v4045 = vmul.f32 %v3945, 0.5
    %v4046 = vmul.f32 %v3947, 0.5
    %v4047 = vmul.f32 %v3949, 0.5
    %v4048 = vmul.f32 %v3951, 0.5
    %v4049 = vtanh.pop %v4017
    %v4050 = vtanh.pop %v4018
    %v4051 = vtanh.pop %v4019
    %v4052 = vtanh.pop %v4020
    %v4053 = vtanh.pop %v4021
    %v4054 = vtanh.pop %v4022
    %v4055 = vtanh.pop %v4023
    %v4056 = vtanh.pop %v4024
    %v4057 = vtanh.pop %v4025
    %v4058 = vtanh.pop %v4026
    %v4059 = vtanh.pop %v4027
    %v4060 = vtanh.pop %v4028
    %v4061 = vtanh.pop %v4029
    %v4062 = vtanh.pop %v4030
    %v4063 = vtanh.pop %v4031
    %v4064 = vtanh.pop %v4032
    %v4065 = vadd.f32 %v4049, 1.0
    %v4066 = vadd.f32 %v4050, 1.0
    %v4067 = vadd.f32 %v4051, 1.0
    %v4068 = vadd.f32 %v4052, 1.0
    %v4069 = vadd.f32 %v4053, 1.0
    %v4070 = vadd.f32 %v4054, 1.0
    %v4071 = vadd.f32 %v4055, 1.0
    %v4072 = vadd.f32 %v4056, 1.0
    %v4073 = vadd.f32 %v4057, 1.0
    %v4074 = vadd.f32 %v4058, 1.0
    %v4075 = vadd.f32 %v4059, 1.0
    %v4076 = vadd.f32 %v4060, 1.0
    %v4077 = vadd.f32 %v4061, 1.0
    %v4078 = vadd.f32 %v4062, 1.0
    %v4079 = vadd.f32 %v4063, 1.0
    %v4080 = vadd.f32 %v4064, 1.0
    %v4081 = vmul.f32 %v4033, %v4065
    %v4082 = vmul.f32 %v4034, %v4066
    %v4083 = vmul.f32 %v4035, %v4067
    %v4084 = vmul.f32 %v4036, %v4068
    %v4085 = vmul.f32 %v4037, %v4069
    %v4086 = vmul.f32 %v4038, %v4070
    %v4087 = vmul.f32 %v4039, %v4071
    %v4088 = vmul.f32 %v4040, %v4072
    %v4089 = vmul.f32 %v4041, %v4073
    %v4090 = vmul.f32 %v4042, %v4074
    %v4091 = vmul.f32 %v4043, %v4075
    %v4092 = vmul.f32 %v4044, %v4076
    %v4093 = vmul.f32 %v4045, %v4077
    %v4094 = vmul.f32 %v4046, %v4078
    %v4095 = vmul.f32 %v4047, %v4079
    %v4096 = vmul.f32 %v4048, %v4080
    %v4097 = vpack.c.bf16 %v4083, %v4081
    %v4098 = vpack.c.bf16 %v4084, %v4082
    %v4099 = vpack.c.bf16 %v4087, %v4085
    %v4100 = vpack.c.bf16 %v4088, %v4086
    %v4101 = vpack.c.bf16 %v4091, %v4089
    %v4102 = vpack.c.bf16 %v4092, %v4090
    %v4103 = vpack.c.bf16 %v4095, %v4093
    %v4104 = vpack.c.bf16 %v4096, %v4094
    %4105 = vst [vmem:[#allocation2 + $0x40] sm:$0xff] %v4097
    %4106 = vst [vmem:[#allocation2 + $0x48] sm:$0xff] %v4098
    %4107 = vst [vmem:[#allocation2 + $0x50] sm:$0xff] %v4099
    %4108 = vst [vmem:[#allocation2 + $0x58] sm:$0xff] %v4100
    %4109 = vst [vmem:[#allocation2 + $0x60] sm:$0xff] %v4101
    %4110 = vst [vmem:[#allocation2 + $0x68] sm:$0xff] %v4102
    %4111 = vst [vmem:[#allocation2 + $0x70] sm:$0xff] %v4103
    %4112 = vst [vmem:[#allocation2 + $0x78] sm:$0xff] %v4104
    %s4113 = scalar_lea.vmem %s12, 64
    %v4114 = vld [vmem:[%s4113] sm:$0xf]
    %v4115 = vld [vmem:[%s4113 + $0x4] sm:$0xf]
    %v4116 = vld [vmem:[%s4113 + $0x8] sm:$0xf]
    %v4117 = vld [vmem:[%s4113 + $0xc] sm:$0xf]
    %v4118 = vld [vmem:[%s4113 + $0x10] sm:$0xf]
    %v4119 = vld [vmem:[%s4113 + $0x14] sm:$0xf]
    %v4120 = vld [vmem:[%s4113 + $0x18] sm:$0xf]
    %v4121 = vld [vmem:[%s4113 + $0x1c] sm:$0xf]
    %s4122 = scalar_lea.vmem %s5, 128
    %v4123 = vld [vmem:[%s4122] sm:$0xff]
    %v4124 = vld [vmem:[%s4122 + $0x8] sm:$0xff]
    %v4125 = vld [vmem:[%s4122 + $0x10] sm:$0xff]
    %v4126 = vld [vmem:[%s4122 + $0x18] sm:$0xff]
    %v4127 = vld [vmem:[%s4122 + $0x20] sm:$0xff]
    %v4128 = vld [vmem:[%s4122 + $0x28] sm:$0xff]
    %v4129 = vld [vmem:[%s4122 + $0x30] sm:$0xff]
    %v4130 = vld [vmem:[%s4122 + $0x38] sm:$0xff]
    %4132 = vset.pattern.permute.xlu0 0
    %4133 = vperm.xlu0 %4132, %v4123
    %v4134 = vpop.permute.xlu0 %4133
    %4137 = vset.pattern.permute.xlu0 0
    %4138 = vperm.xlu0 %4137, %v4124
    %v4139 = vpop.permute.xlu0 %4138
    %4142 = vset.pattern.permute.xlu0 0
    %4143 = vperm.xlu0 %4142, %v4125
    %v4144 = vpop.permute.xlu0 %4143
    %4147 = vset.pattern.permute.xlu0 0
    %4148 = vperm.xlu0 %4147, %v4126
    %v4149 = vpop.permute.xlu0 %4148
    %4152 = vset.pattern.permute.xlu0 0
    %4153 = vperm.xlu0 %4152, %v4127
    %v4154 = vpop.permute.xlu0 %4153
    %4157 = vset.pattern.permute.xlu0 0
    %4158 = vperm.xlu0 %4157, %v4128
    %v4159 = vpop.permute.xlu0 %4158
    %4162 = vset.pattern.permute.xlu0 0
    %4163 = vperm.xlu0 %4162, %v4129
    %v4164 = vpop.permute.xlu0 %4163
    %4167 = vset.pattern.permute.xlu0 0
    %4168 = vperm.xlu0 %4167, %v4130
    %v4169 = vpop.permute.xlu0 %4168
    %v4179 = vunpack.c.l.b16 %v4114
    %v4180 = vunpack.c.l.b16 %v4115
    %v4181 = vunpack.c.l.b16 %v4116
    %v4182 = vunpack.c.l.b16 %v4117
    %v4183 = vunpack.c.l.b16 %v4118
    %v4184 = vunpack.c.l.b16 %v4119
    %v4185 = vunpack.c.l.b16 %v4120
    %v4186 = vunpack.c.l.b16 %v4121
    %v4187 = vpack.c.b16 %v4180, %v4179
    %v4188 = vpack.c.b16 %v4182, %v4181
    %v4189 = vpack.c.b16 %v4184, %v4183
    %v4190 = vpack.c.b16 %v4186, %v4185
    %v4192 = vsel %vm205, %v4187, 0
    %v4195 = vsel %vm205, %v4188, 0
    %v4198 = vsel %vm205, %v4189, 0
    %v4201 = vsel %vm205, %v4190, 0
    %4203 = vmatprep.subr.bf16.mxu0 %v3462
    %4204 = vmatpush1.bf16.msra.mxu0 %v3461
    %4205 = vmatprep.subr.bf16.mxu0 %v3464
    %4206 = vmatpush1.bf16.msra.mxu0 %v3463
    %4207 = vmatprep.subr.bf16.mxu0 %v3466
    %4208 = vmatpush1.bf16.msra.mxu0 %v3465
    %4209 = vmatprep.subr.bf16.mxu0 %v3468
    %4210 = vmatpush1.bf16.msra.mxu0 %v3467
    %4211 = vmatprep.subr.bf16.mxu0 0
    %4212 = vmatpush1.bf16.msra.mxu0 0
    %4213 = vmatprep.subr.bf16.mxu0 0
    %4214 = vmatpush1.bf16.msra.mxu0 0
    %4215 = vmatprep.subr.bf16.mxu0 0
    %4216 = vmatpush1.bf16.msra.mxu0 0
    %4217 = vmatprep.subr.bf16.mxu0 0
    %4218 = vmatpush1.bf16.msra.mxu0 0
    %4219 = vmatprep.subr.bf16.mxu0 0
    %4220 = vmatpush1.bf16.msra.mxu0 0
    %4221 = vmatprep.subr.bf16.mxu0 0
    %4222 = vmatpush1.bf16.msra.mxu0 0
    %4223 = vmatprep.subr.bf16.mxu0 0
    %4224 = vmatpush1.bf16.msra.mxu0 0
    %4225 = vmatprep.subr.bf16.mxu0 0
    %4226 = vmatpush1.bf16.msra.mxu0 0
    %4227 = vmatprep.subr.bf16.mxu0 0
    %4228 = vmatpush1.bf16.msra.mxu0 0
    %4229 = vmatprep.subr.bf16.mxu0 0
    %4230 = vmatpush1.bf16.msra.mxu0 0
    %4231 = vmatprep.subr.bf16.mxu0 0
    %4232 = vmatpush1.bf16.msra.mxu0 0
    %4233 = vmatprep.subr.bf16.mxu0 0
    %4234 = vmatpush1.bf16.msra.mxu0 0
    %4235 = vmatprep.mubr.bf16.mxu0 0
    %4236 = vmatmul.mubr.bf16.gmra.mrb[0].mxu0 %v4192
    %v4237 = vpop.f32.mrb[0].mxu0
    %v4238 = vadd.f32 %v4134, %v4237
    %v4239 = vpop.f32.mrb[0].mxu0
    %v4240 = vadd.f32 %v4134, %v4239
    %v4241 = vpop.f32.mrb[0].mxu0
    %v4242 = vadd.f32 %v4139, %v4241
    %v4243 = vpop.f32.mrb[0].mxu0
    %v4244 = vadd.f32 %v4139, %v4243
    %4245 = vmatprep.mubr.bf16.mxu0 0
    %4246 = vmatmul.mubr.bf16.gmra.mrb[0].mxu0 %v4195
    %v4247 = vpop.f32.mrb[0].mxu0
    %v4248 = vadd.f32 %v4144, %v4247
    %v4249 = vpop.f32.mrb[0].mxu0
    %v4250 = vadd.f32 %v4144, %v4249
    %v4251 = vpop.f32.mrb[0].mxu0
    %v4252 = vadd.f32 %v4149, %v4251
    %v4253 = vpop.f32.mrb[0].mxu0
    %v4254 = vadd.f32 %v4149, %v4253
    %4255 = vmatprep.mubr.bf16.mxu0 0
    %4256 = vmatmul.mubr.bf16.gmra.mrb[0].mxu0 %v4198
    %v4257 = vpop.f32.mrb[0].mxu0
    %v4258 = vadd.f32 %v4154, %v4257
    %v4259 = vpop.f32.mrb[0].mxu0
    %v4260 = vadd.f32 %v4154, %v4259
    %v4261 = vpop.f32.mrb[0].mxu0
    %v4262 = vadd.f32 %v4159, %v4261
    %v4263 = vpop.f32.mrb[0].mxu0
    %v4264 = vadd.f32 %v4159, %v4263
    %4265 = vmatprep.mubr.bf16.mxu0 0
    %4266 = vmatmul.mubr.bf16.gmra.mrb[0].mxu0 %v4201
    %v4267 = vpop.f32.mrb[0].mxu0
    %v4268 = vadd.f32 %v4164, %v4267
    %v4269 = vpop.f32.mrb[0].mxu0
    %v4270 = vadd.f32 %v4164, %v4269
    %v4271 = vpop.f32.mrb[0].mxu0
    %v4272 = vadd.f32 %v4169, %v4271
    %v4273 = vpop.f32.mrb[0].mxu0
    %v4274 = vadd.f32 %v4169, %v4273
    %4275 = vdwg.mxu0
    %v4276 = vmul.f32 %v4238, %v4238
    %v4277 = vmul.f32 %v4240, %v4240
    %v4278 = vmul.f32 %v4242, %v4242
    %v4279 = vmul.f32 %v4244, %v4244
    %v4280 = vmul.f32 %v4248, %v4248
    %v4281 = vmul.f32 %v4250, %v4250
    %v4282 = vmul.f32 %v4252, %v4252
    %v4283 = vmul.f32 %v4254, %v4254
    %v4284 = vmul.f32 %v4258, %v4258
    %v4285 = vmul.f32 %v4260, %v4260
    %v4286 = vmul.f32 %v4262, %v4262
    %v4287 = vmul.f32 %v4264, %v4264
    %v4288 = vmul.f32 %v4268, %v4268
    %v4289 = vmul.f32 %v4270, %v4270
    %v4290 = vmul.f32 %v4272, %v4272
    %v4291 = vmul.f32 %v4274, %v4274
    %v4292 = vmul.f32 %v4276, %v4238
    %v4293 = vmul.f32 %v4277, %v4240
    %v4294 = vmul.f32 %v4278, %v4242
    %v4295 = vmul.f32 %v4279, %v4244
    %v4296 = vmul.f32 %v4280, %v4248
    %v4297 = vmul.f32 %v4281, %v4250
    %v4298 = vmul.f32 %v4282, %v4252
    %v4299 = vmul.f32 %v4283, %v4254
    %v4300 = vmul.f32 %v4284, %v4258
    %v4301 = vmul.f32 %v4285, %v4260
    %v4302 = vmul.f32 %v4286, %v4262
    %v4303 = vmul.f32 %v4287, %v4264
    %v4304 = vmul.f32 %v4288, %v4268
    %v4305 = vmul.f32 %v4289, %v4270
    %v4306 = vmul.f32 %v4290, %v4272
    %v4307 = vmul.f32 %v4291, %v4274
    %v4308 = vmul.f32 %v4292, 0.044715
    %v4309 = vmul.f32 %v4293, 0.044715
    %v4310 = vmul.f32 %v4294, 0.044715
    %v4311 = vmul.f32 %v4295, 0.044715
    %v4312 = vmul.f32 %v4296, 0.044715
    %v4313 = vmul.f32 %v4297, 0.044715
    %v4314 = vmul.f32 %v4298, 0.044715
    %v4315 = vmul.f32 %v4299, 0.044715
    %v4316 = vmul.f32 %v4300, 0.044715
    %v4317 = vmul.f32 %v4301, 0.044715
    %v4318 = vmul.f32 %v4302, 0.044715
    %v4319 = vmul.f32 %v4303, 0.044715
    %v4320 = vmul.f32 %v4304, 0.044715
    %v4321 = vmul.f32 %v4305, 0.044715
    %v4322 = vmul.f32 %v4306, 0.044715
    %v4323 = vmul.f32 %v4307, 0.044715
    %v4324 = vadd.f32 %v4238, %v4308
    %v4325 = vadd.f32 %v4240, %v4309
    %v4326 = vadd.f32 %v4242, %v4310
    %v4327 = vadd.f32 %v4244, %v4311
    %v4328 = vadd.f32 %v4248, %v4312
    %v4329 = vadd.f32 %v4250, %v4313
    %v4330 = vadd.f32 %v4252, %v4314
    %v4331 = vadd.f32 %v4254, %v4315
    %v4332 = vadd.f32 %v4258, %v4316
    %v4333 = vadd.f32 %v4260, %v4317
    %v4334 = vadd.f32 %v4262, %v4318
    %v4335 = vadd.f32 %v4264, %v4319
    %v4336 = vadd.f32 %v4268, %v4320
    %v4337 = vadd.f32 %v4270, %v4321
    %v4338 = vadd.f32 %v4272, %v4322
    %v4339 = vadd.f32 %v4274, %v4323
    %v4340 = vmul.f32 %v4324, 0.7978846
    %v4341 = vmul.f32 %v4325, 0.7978846
    %v4342 = vmul.f32 %v4326, 0.7978846
    %v4343 = vmul.f32 %v4327, 0.7978846
    %v4344 = vmul.f32 %v4328, 0.7978846
    %v4345 = vmul.f32 %v4329, 0.7978846
    %v4346 = vmul.f32 %v4330, 0.7978846
    %v4347 = vmul.f32 %v4331, 0.7978846
    %v4348 = vmul.f32 %v4332, 0.7978846
    %v4349 = vmul.f32 %v4333, 0.7978846
    %v4350 = vmul.f32 %v4334, 0.7978846
    %v4351 = vmul.f32 %v4335, 0.7978846
    %v4352 = vmul.f32 %v4336, 0.7978846
    %v4353 = vmul.f32 %v4337, 0.7978846
    %v4354 = vmul.f32 %v4338, 0.7978846
    %v4355 = vmul.f32 %v4339, 0.7978846
    %v4356 = vmul.f32 %v4238, 0.5
    %v4357 = vmul.f32 %v4240, 0.5
    %v4358 = vmul.f32 %v4242, 0.5
    %v4359 = vmul.f32 %v4244, 0.5
    %v4360 = vmul.f32 %v4248, 0.5
    %v4361 = vmul.f32 %v4250, 0.5
    %v4362 = vmul.f32 %v4252, 0.5
    %v4363 = vmul.f32 %v4254, 0.5
    %v4364 = vmul.f32 %v4258, 0.5
    %v4365 = vmul.f32 %v4260, 0.5
    %v4366 = vmul.f32 %v4262, 0.5
    %v4367 = vmul.f32 %v4264, 0.5
    %v4368 = vmul.f32 %v4268, 0.5
    %v4369 = vmul.f32 %v4270, 0.5
    %v4370 = vmul.f32 %v4272, 0.5
    %v4371 = vmul.f32 %v4274, 0.5
    %v4372 = vtanh.pop %v4340
    %v4373 = vtanh.pop %v4341
    %v4374 = vtanh.pop %v4342
    %v4375 = vtanh.pop %v4343
    %v4376 = vtanh.pop %v4344
    %v4377 = vtanh.pop %v4345
    %v4378 = vtanh.pop %v4346
    %v4379 = vtanh.pop %v4347
    %v4380 = vtanh.pop %v4348
    %v4381 = vtanh.pop %v4349
    %v4382 = vtanh.pop %v4350
    %v4383 = vtanh.pop %v4351
    %v4384 = vtanh.pop %v4352
    %v4385 = vtanh.pop %v4353
    %v4386 = vtanh.pop %v4354
    %v4387 = vtanh.pop %v4355
    %v4388 = vadd.f32 %v4372, 1.0
    %v4389 = vadd.f32 %v4373, 1.0
    %v4390 = vadd.f32 %v4374, 1.0
    %v4391 = vadd.f32 %v4375, 1.0
    %v4392 = vadd.f32 %v4376, 1.0
    %v4393 = vadd.f32 %v4377, 1.0
    %v4394 = vadd.f32 %v4378, 1.0
    %v4395 = vadd.f32 %v4379, 1.0
    %v4396 = vadd.f32 %v4380, 1.0
    %v4397 = vadd.f32 %v4381, 1.0
    %v4398 = vadd.f32 %v4382, 1.0
    %v4399 = vadd.f32 %v4383, 1.0
    %v4400 = vadd.f32 %v4384, 1.0
    %v4401 = vadd.f32 %v4385, 1.0
    %v4402 = vadd.f32 %v4386, 1.0
    %v4403 = vadd.f32 %v4387, 1.0
    %v4404 = vmul.f32 %v4356, %v4388
    %v4405 = vmul.f32 %v4357, %v4389
    %v4406 = vmul.f32 %v4358, %v4390
    %v4407 = vmul.f32 %v4359, %v4391
    %v4408 = vmul.f32 %v4360, %v4392
    %v4409 = vmul.f32 %v4361, %v4393
    %v4410 = vmul.f32 %v4362, %v4394
    %v4411 = vmul.f32 %v4363, %v4395
    %v4412 = vmul.f32 %v4364, %v4396
    %v4413 = vmul.f32 %v4365, %v4397
    %v4414 = vmul.f32 %v4366, %v4398
    %v4415 = vmul.f32 %v4367, %v4399
    %v4416 = vmul.f32 %v4368, %v4400
    %v4417 = vmul.f32 %v4369, %v4401
    %v4418 = vmul.f32 %v4370, %v4402
    %v4419 = vmul.f32 %v4371, %v4403
    %v4420 = vpack.c.bf16 %v4406, %v4404
    %v4421 = vpack.c.bf16 %v4407, %v4405
    %v4422 = vpack.c.bf16 %v4410, %v4408
    %v4423 = vpack.c.bf16 %v4411, %v4409
    %v4424 = vpack.c.bf16 %v4414, %v4412
    %v4425 = vpack.c.bf16 %v4415, %v4413
    %v4426 = vpack.c.bf16 %v4418, %v4416
    %v4427 = vpack.c.bf16 %v4419, %v4417
    %4428 = vst [vmem:[#allocation2 + $0x80] sm:$0xff] %v4420
    %4429 = vst [vmem:[#allocation2 + $0x88] sm:$0xff] %v4421
    %4430 = vst [vmem:[#allocation2 + $0x90] sm:$0xff] %v4422
    %4431 = vst [vmem:[#allocation2 + $0x98] sm:$0xff] %v4423
    %4432 = vst [vmem:[#allocation2 + $0xa0] sm:$0xff] %v4424
    %4433 = vst [vmem:[#allocation2 + $0xa8] sm:$0xff] %v4425
    %4434 = vst [vmem:[#allocation2 + $0xb0] sm:$0xff] %v4426
    %4435 = vst [vmem:[#allocation2 + $0xb8] sm:$0xff] %v4427
    %s4436 = scalar_lea.vmem %s12, 96
    %v4437 = vld [vmem:[%s4436] sm:$0xf]
    %v4438 = vld [vmem:[%s4436 + $0x4] sm:$0xf]
    %v4439 = vld [vmem:[%s4436 + $0x8] sm:$0xf]
    %v4440 = vld [vmem:[%s4436 + $0xc] sm:$0xf]
    %v4441 = vld [vmem:[%s4436 + $0x10] sm:$0xf]
    %v4442 = vld [vmem:[%s4436 + $0x14] sm:$0xf]
    %v4443 = vld [vmem:[%s4436 + $0x18] sm:$0xf]
    %v4444 = vld [vmem:[%s4436 + $0x1c] sm:$0xf]
    %s4445 = scalar_lea.vmem %s5, 192
    %v4446 = vld [vmem:[%s4445] sm:$0xff]
    %v4447 = vld [vmem:[%s4445 + $0x8] sm:$0xff]
    %v4448 = vld [vmem:[%s4445 + $0x10] sm:$0xff]
    %v4449 = vld [vmem:[%s4445 + $0x18] sm:$0xff]
    %v4450 = vld [vmem:[%s4445 + $0x20] sm:$0xff]
    %v4451 = vld [vmem:[%s4445 + $0x28] sm:$0xff]
    %v4452 = vld [vmem:[%s4445 + $0x30] sm:$0xff]
    %v4453 = vld [vmem:[%s4445 + $0x38] sm:$0xff]
    %4455 = vset.pattern.permute.xlu0 0
    %4456 = vperm.xlu0 %4455, %v4446
    %v4457 = vpop.permute.xlu0 %4456
    %4460 = vset.pattern.permute.xlu0 0
    %4461 = vperm.xlu0 %4460, %v4447
    %v4462 = vpop.permute.xlu0 %4461
    %4465 = vset.pattern.permute.xlu0 0
    %4466 = vperm.xlu0 %4465, %v4448
    %v4467 = vpop.permute.xlu0 %4466
    %4470 = vset.pattern.permute.xlu0 0
    %4471 = vperm.xlu0 %4470, %v4449
    %v4472 = vpop.permute.xlu0 %4471
    %4475 = vset.pattern.permute.xlu0 0
    %4476 = vperm.xlu0 %4475, %v4450
    %v4477 = vpop.permute.xlu0 %4476
    %4480 = vset.pattern.permute.xlu0 0
    %4481 = vperm.xlu0 %4480, %v4451
    %v4482 = vpop.permute.xlu0 %4481
    %4485 = vset.pattern.permute.xlu0 0
    %4486 = vperm.xlu0 %4485, %v4452
    %v4487 = vpop.permute.xlu0 %4486
    %4490 = vset.pattern.permute.xlu0 0
    %4491 = vperm.xlu0 %4490, %v4453
    %v4492 = vpop.permute.xlu0 %4491
    %v4502 = vunpack.c.l.b16 %v4437
    %v4503 = vunpack.c.l.b16 %v4438
    %v4504 = vunpack.c.l.b16 %v4439
    %v4505 = vunpack.c.l.b16 %v4440
    %v4506 = vunpack.c.l.b16 %v4441
    %v4507 = vunpack.c.l.b16 %v4442
    %v4508 = vunpack.c.l.b16 %v4443
    %v4509 = vunpack.c.l.b16 %v4444
    %v4510 = vpack.c.b16 %v4503, %v4502
    %v4511 = vpack.c.b16 %v4505, %v4504
    %v4512 = vpack.c.b16 %v4507, %v4506
    %v4513 = vpack.c.b16 %v4509, %v4508
    %v4515 = vsel %vm205, %v4510, 0
    %v4518 = vsel %vm205, %v4511, 0
    %v4521 = vsel %vm205, %v4512, 0
    %v4524 = vsel %vm205, %v4513, 0
    %4526 = vmatprep.subr.bf16.mxu0 %v3462
    %4527 = vmatpush1.bf16.msra.mxu0 %v3461
    %4528 = vmatprep.subr.bf16.mxu0 %v3464
    %4529 = vmatpush1.bf16.msra.mxu0 %v3463
    %4530 = vmatprep.subr.bf16.mxu0 %v3466
    %4531 = vmatpush1.bf16.msra.mxu0 %v3465
    %4532 = vmatprep.subr.bf16.mxu0 %v3468
    %4533 = vmatpush1.bf16.msra.mxu0 %v3467
    %4534 = vmatprep.subr.bf16.mxu0 0
    %4535 = vmatpush1.bf16.msra.mxu0 0
    %4536 = vmatprep.subr.bf16.mxu0 0
    %4537 = vmatpush1.bf16.msra.mxu0 0
    %4538 = vmatprep.subr.bf16.mxu0 0
    %4539 = vmatpush1.bf16.msra.mxu0 0
    %4540 = vmatprep.subr.bf16.mxu0 0
    %4541 = vmatpush1.bf16.msra.mxu0 0
    %4542 = vmatprep.subr.bf16.mxu0 0
    %4543 = vmatpush1.bf16.msra.mxu0 0
    %4544 = vmatprep.subr.bf16.mxu0 0
    %4545 = vmatpush1.bf16.msra.mxu0 0
    %4546 = vmatprep.subr.bf16.mxu0 0
    %4547 = vmatpush1.bf16.msra.mxu0 0
    %4548 = vmatprep.subr.bf16.mxu0 0
    %4549 = vmatpush1.bf16.msra.mxu0 0
    %4550 = vmatprep.subr.bf16.mxu0 0
    %4551 = vmatpush1.bf16.msra.mxu0 0
    %4552 = vmatprep.subr.bf16.mxu0 0
    %4553 = vmatpush1.bf16.msra.mxu0 0
    %4554 = vmatprep.subr.bf16.mxu0 0
    %4555 = vmatpush1.bf16.msra.mxu0 0
    %4556 = vmatprep.subr.bf16.mxu0 0
    %4557 = vmatpush1.bf16.msra.mxu0 0
    %4558 = vmatprep.mubr.bf16.mxu0 0
    %4559 = vmatmul.mubr.bf16.gmra.mrb[0].mxu0 %v4515
    %v4560 = vpop.f32.mrb[0].mxu0
    %v4561 = vadd.f32 %v4457, %v4560
    %v4562 = vpop.f32.mrb[0].mxu0
    %v4563 = vadd.f32 %v4457, %v4562
    %v4564 = vpop.f32.mrb[0].mxu0
    %v4565 = vadd.f32 %v4462, %v4564
    %v4566 = vpop.f32.mrb[0].mxu0
    %v4567 = vadd.f32 %v4462, %v4566
    %4568 = vmatprep.mubr.bf16.mxu0 0
    %4569 = vmatmul.mubr.bf16.gmra.mrb[0].mxu0 %v4518
    %v4570 = vpop.f32.mrb[0].mxu0
    %v4571 = vadd.f32 %v4467, %v4570
    %v4572 = vpop.f32.mrb[0].mxu0
    %v4573 = vadd.f32 %v4467, %v4572
    %v4574 = vpop.f32.mrb[0].mxu0
    %v4575 = vadd.f32 %v4472, %v4574
    %v4576 = vpop.f32.mrb[0].mxu0
    %v4577 = vadd.f32 %v4472, %v4576
    %4578 = vmatprep.mubr.bf16.mxu0 0
    %4579 = vmatmul.mubr.bf16.gmra.mrb[0].mxu0 %v4521
    %v4580 = vpop.f32.mrb[0].mxu0
    %v4581 = vadd.f32 %v4477, %v4580
    %v4582 = vpop.f32.mrb[0].mxu0
    %v4583 = vadd.f32 %v4477, %v4582
    %v4584 = vpop.f32.mrb[0].mxu0
    %v4585 = vadd.f32 %v4482, %v4584
    %v4586 = vpop.f32.mrb[0].mxu0
    %v4587 = vadd.f32 %v4482, %v4586
    %4588 = vmatprep.mubr.bf16.mxu0 0
    %4589 = vmatmul.mubr.bf16.gmra.mrb[0].mxu0 %v4524
    %v4590 = vpop.f32.mrb[0].mxu0
    %v4591 = vadd.f32 %v4487, %v4590
    %v4592 = vpop.f32.mrb[0].mxu0
    %v4593 = vadd.f32 %v4487, %v4592
    %v4594 = vpop.f32.mrb[0].mxu0
    %v4595 = vadd.f32 %v4492, %v4594
    %v4596 = vpop.f32.mrb[0].mxu0
    %v4597 = vadd.f32 %v4492, %v4596
    %4598 = vdwg.mxu0
    %v4599 = vmul.f32 %v4561, %v4561
    %v4600 = vmul.f32 %v4563, %v4563
    %v4601 = vmul.f32 %v4565, %v4565
    %v4602 = vmul.f32 %v4567, %v4567
    %v4603 = vmul.f32 %v4571, %v4571
    %v4604 = vmul.f32 %v4573, %v4573
    %v4605 = vmul.f32 %v4575, %v4575
    %v4606 = vmul.f32 %v4577, %v4577
    %v4607 = vmul.f32 %v4581, %v4581
    %v4608 = vmul.f32 %v4583, %v4583
    %v4609 = vmul.f32 %v4585, %v4585
    %v4610 = vmul.f32 %v4587, %v4587
    %v4611 = vmul.f32 %v4591, %v4591
    %v4612 = vmul.f32 %v4593, %v4593
    %v4613 = vmul.f32 %v4595, %v4595
    %v4614 = vmul.f32 %v4597, %v4597
    %v4615 = vmul.f32 %v4599, %v4561
    %v4616 = vmul.f32 %v4600, %v4563
    %v4617 = vmul.f32 %v4601, %v4565
    %v4618 = vmul.f32 %v4602, %v4567
    %v4619 = vmul.f32 %v4603, %v4571
    %v4620 = vmul.f32 %v4604, %v4573
    %v4621 = vmul.f32 %v4605, %v4575
    %v4622 = vmul.f32 %v4606, %v4577
    %v4623 = vmul.f32 %v4607, %v4581
    %v4624 = vmul.f32 %v4608, %v4583
    %v4625 = vmul.f32 %v4609, %v4585
    %v4626 = vmul.f32 %v4610, %v4587
    %v4627 = vmul.f32 %v4611, %v4591
    %v4628 = vmul.f32 %v4612, %v4593
    %v4629 = vmul.f32 %v4613, %v4595
    %v4630 = vmul.f32 %v4614, %v4597
    %v4631 = vmul.f32 %v4615, 0.044715
    %v4632 = vmul.f32 %v4616, 0.044715
    %v4633 = vmul.f32 %v4617, 0.044715
    %v4634 = vmul.f32 %v4618, 0.044715
    %v4635 = vmul.f32 %v4619, 0.044715
    %v4636 = vmul.f32 %v4620, 0.044715
    %v4637 = vmul.f32 %v4621, 0.044715
    %v4638 = vmul.f32 %v4622, 0.044715
    %v4639 = vmul.f32 %v4623, 0.044715
    %v4640 = vmul.f32 %v4624, 0.044715
    %v4641 = vmul.f32 %v4625, 0.044715
    %v4642 = vmul.f32 %v4626, 0.044715
    %v4643 = vmul.f32 %v4627, 0.044715
    %v4644 = vmul.f32 %v4628, 0.044715
    %v4645 = vmul.f32 %v4629, 0.044715
    %v4646 = vmul.f32 %v4630, 0.044715
    %v4647 = vadd.f32 %v4561, %v4631
    %v4648 = vadd.f32 %v4563, %v4632
    %v4649 = vadd.f32 %v4565, %v4633
    %v4650 = vadd.f32 %v4567, %v4634
    %v4651 = vadd.f32 %v4571, %v4635
    %v4652 = vadd.f32 %v4573, %v4636
    %v4653 = vadd.f32 %v4575, %v4637
    %v4654 = vadd.f32 %v4577, %v4638
    %v4655 = vadd.f32 %v4581, %v4639
    %v4656 = vadd.f32 %v4583, %v4640
    %v4657 = vadd.f32 %v4585, %v4641
    %v4658 = vadd.f32 %v4587, %v4642
    %v4659 = vadd.f32 %v4591, %v4643
    %v4660 = vadd.f32 %v4593, %v4644
    %v4661 = vadd.f32 %v4595, %v4645
    %v4662 = vadd.f32 %v4597, %v4646
    %v4663 = vmul.f32 %v4647, 0.7978846
    %v4664 = vmul.f32 %v4648, 0.7978846
    %v4665 = vmul.f32 %v4649, 0.7978846
    %v4666 = vmul.f32 %v4650, 0.7978846
    %v4667 = vmul.f32 %v4651, 0.7978846
    %v4668 = vmul.f32 %v4652, 0.7978846
    %v4669 = vmul.f32 %v4653, 0.7978846
    %v4670 = vmul.f32 %v4654, 0.7978846
    %v4671 = vmul.f32 %v4655, 0.7978846
    %v4672 = vmul.f32 %v4656, 0.7978846
    %v4673 = vmul.f32 %v4657, 0.7978846
    %v4674 = vmul.f32 %v4658, 0.7978846
    %v4675 = vmul.f32 %v4659, 0.7978846
    %v4676 = vmul.f32 %v4660, 0.7978846
    %v4677 = vmul.f32 %v4661, 0.7978846
    %v4678 = vmul.f32 %v4662, 0.7978846
    %v4679 = vmul.f32 %v4561, 0.5
    %v4680 = vmul.f32 %v4563, 0.5
    %v4681 = vmul.f32 %v4565, 0.5
    %v4682 = vmul.f32 %v4567, 0.5
    %v4683 = vmul.f32 %v4571, 0.5
    %v4684 = vmul.f32 %v4573, 0.5
    %v4685 = vmul.f32 %v4575, 0.5
    %v4686 = vmul.f32 %v4577, 0.5
    %v4687 = vmul.f32 %v4581, 0.5
    %v4688 = vmul.f32 %v4583, 0.5
    %v4689 = vmul.f32 %v4585, 0.5
    %v4690 = vmul.f32 %v4587, 0.5
    %v4691 = vmul.f32 %v4591, 0.5
    %v4692 = vmul.f32 %v4593, 0.5
    %v4693 = vmul.f32 %v4595, 0.5
    %v4694 = vmul.f32 %v4597, 0.5
    %v4695 = vtanh.pop %v4663
    %v4696 = vtanh.pop %v4664
    %v4697 = vtanh.pop %v4665
    %v4698 = vtanh.pop %v4666
    %v4699 = vtanh.pop %v4667
    %v4700 = vtanh.pop %v4668
    %v4701 = vtanh.pop %v4669
    %v4702 = vtanh.pop %v4670
    %v4703 = vtanh.pop %v4671
    %v4704 = vtanh.pop %v4672
    %v4705 = vtanh.pop %v4673
    %v4706 = vtanh.pop %v4674
    %v4707 = vtanh.pop %v4675
    %v4708 = vtanh.pop %v4676
    %v4709 = vtanh.pop %v4677
    %v4710 = vtanh.pop %v4678
    %v4711 = vadd.f32 %v4695, 1.0
    %v4712 = vadd.f32 %v4696, 1.0
    %v4713 = vadd.f32 %v4697, 1.0
    %v4714 = vadd.f32 %v4698, 1.0
    %v4715 = vadd.f32 %v4699, 1.0
    %v4716 = vadd.f32 %v4700, 1.0
    %v4717 = vadd.f32 %v4701, 1.0
    %v4718 = vadd.f32 %v4702, 1.0
    %v4719 = vadd.f32 %v4703, 1.0
    %v4720 = vadd.f32 %v4704, 1.0
    %v4721 = vadd.f32 %v4705, 1.0
    %v4722 = vadd.f32 %v4706, 1.0
    %v4723 = vadd.f32 %v4707, 1.0
    %v4724 = vadd.f32 %v4708, 1.0
    %v4725 = vadd.f32 %v4709, 1.0
    %v4726 = vadd.f32 %v4710, 1.0
    %v4727 = vmul.f32 %v4679, %v4711
    %v4728 = vmul.f32 %v4680, %v4712
    %v4729 = vmul.f32 %v4681, %v4713
    %v4730 = vmul.f32 %v4682, %v4714
    %v4731 = vmul.f32 %v4683, %v4715
    %v4732 = vmul.f32 %v4684, %v4716
    %v4733 = vmul.f32 %v4685, %v4717
    %v4734 = vmul.f32 %v4686, %v4718
    %v4735 = vmul.f32 %v4687, %v4719
    %v4736 = vmul.f32 %v4688, %v4720
    %v4737 = vmul.f32 %v4689, %v4721
    %v4738 = vmul.f32 %v4690, %v4722
    %v4739 = vmul.f32 %v4691, %v4723
    %v4740 = vmul.f32 %v4692, %v4724
    %v4741 = vmul.f32 %v4693, %v4725
    %v4742 = vmul.f32 %v4694, %v4726
    %v4743 = vpack.c.bf16 %v4729, %v4727
    %v4744 = vpack.c.bf16 %v4730, %v4728
    %v4745 = vpack.c.bf16 %v4733, %v4731
    %v4746 = vpack.c.bf16 %v4734, %v4732
    %v4747 = vpack.c.bf16 %v4737, %v4735
    %v4748 = vpack.c.bf16 %v4738, %v4736
    %v4749 = vpack.c.bf16 %v4741, %v4739
    %v4750 = vpack.c.bf16 %v4742, %v4740
    %4751 = vst [vmem:[#allocation2 + $0xc0] sm:$0xff] %v4743
    %4752 = vst [vmem:[#allocation2 + $0xc8] sm:$0xff] %v4744
    %4753 = vst [vmem:[#allocation2 + $0xd0] sm:$0xff] %v4745
    %4754 = vst [vmem:[#allocation2 + $0xd8] sm:$0xff] %v4746
    %4755 = vst [vmem:[#allocation2 + $0xe0] sm:$0xff] %v4747
    %4756 = vst [vmem:[#allocation2 + $0xe8] sm:$0xff] %v4748
    %4757 = vst [vmem:[#allocation2 + $0xf0] sm:$0xff] %v4749
    %4758 = vst [vmem:[#allocation2 + $0xf8] sm:$0xff] %v4750
    %v4759 = vld [vmem:[%s13] sm:$0xff]
    %v4760 = vld [vmem:[%s13 + $0x8] sm:$0xff]
    %v4761 = vld [vmem:[%s13 + $0x10] sm:$0xff]
    %v4762 = vld [vmem:[%s13 + $0x18] sm:$0xff]
    %v4763 = vld [vmem:[%s13 + $0x20] sm:$0xff]
    %v4764 = vld [vmem:[%s13 + $0x28] sm:$0xff]
    %v4765 = vld [vmem:[%s13 + $0x30] sm:$0xff]
    %v4766 = vld [vmem:[%s13 + $0x38] sm:$0xff]
    %v4767 = vld [vmem:[#allocation2] sm:$0xff]
    %v4768 = vld [vmem:[#allocation2 + $0x8] sm:$0xff]
    %v4769 = vld [vmem:[#allocation2 + $0x10] sm:$0xff]
    %v4770 = vld [vmem:[#allocation2 + $0x18] sm:$0xff]
    %v4771 = vld [vmem:[#allocation2 + $0x20] sm:$0xff]
    %v4772 = vld [vmem:[#allocation2 + $0x28] sm:$0xff]
    %v4773 = vld [vmem:[#allocation2 + $0x30] sm:$0xff]
    %v4774 = vld [vmem:[#allocation2 + $0x38] sm:$0xff]
    %v4775 = vld [vmem:[#allocation2 + $0x40] sm:$0xff]
    %v4776 = vld [vmem:[#allocation2 + $0x48] sm:$0xff]
    %v4777 = vld [vmem:[#allocation2 + $0x50] sm:$0xff]
    %v4778 = vld [vmem:[#allocation2 + $0x58] sm:$0xff]
    %v4779 = vld [vmem:[#allocation2 + $0x60] sm:$0xff]
    %v4780 = vld [vmem:[#allocation2 + $0x68] sm:$0xff]
    %v4781 = vld [vmem:[#allocation2 + $0x70] sm:$0xff]
    %v4782 = vld [vmem:[#allocation2 + $0x78] sm:$0xff]
    %v4783 = vld [vmem:[#allocation2 + $0x80] sm:$0xff]
    %v4784 = vld [vmem:[#allocation2 + $0x88] sm:$0xff]
    %v4785 = vld [vmem:[#allocation2 + $0x90] sm:$0xff]
    %v4786 = vld [vmem:[#allocation2 + $0x98] sm:$0xff]
    %v4787 = vld [vmem:[#allocation2 + $0xa0] sm:$0xff]
    %v4788 = vld [vmem:[#allocation2 + $0xa8] sm:$0xff]
    %v4789 = vld [vmem:[#allocation2 + $0xb0] sm:$0xff]
    %v4790 = vld [vmem:[#allocation2 + $0xb8] sm:$0xff]
    %v4791 = vld [vmem:[#allocation2 + $0xc0] sm:$0xff]
    %v4792 = vld [vmem:[#allocation2 + $0xc8] sm:$0xff]
    %v4793 = vld [vmem:[#allocation2 + $0xd0] sm:$0xff]
    %v4794 = vld [vmem:[#allocation2 + $0xd8] sm:$0xff]
    %v4795 = vld [vmem:[#allocation2 + $0xe0] sm:$0xff]
    %v4796 = vld [vmem:[#allocation2 + $0xe8] sm:$0xff]
    %v4797 = vld [vmem:[#allocation2 + $0xf0] sm:$0xff]
    %v4798 = vld [vmem:[#allocation2 + $0xf8] sm:$0xff]
    %v4807 = vunpack.c.l.b16 %v4759
    %v4808 = vunpack.c.h.b16 %v4759
    %v4809 = vunpack.c.l.b16 %v4760
    %v4810 = vunpack.c.h.b16 %v4760
    %v4811 = vunpack.c.l.b16 %v4761
    %v4812 = vunpack.c.h.b16 %v4761
    %v4813 = vunpack.c.l.b16 %v4762
    %v4814 = vunpack.c.h.b16 %v4762
    %v4815 = vunpack.c.l.b16 %v4763
    %v4816 = vunpack.c.h.b16 %v4763
    %v4817 = vunpack.c.l.b16 %v4764
    %v4818 = vunpack.c.h.b16 %v4764
    %v4819 = vunpack.c.l.b16 %v4765
    %v4820 = vunpack.c.h.b16 %v4765
    %v4821 = vunpack.c.l.b16 %v4766
    %v4822 = vunpack.c.h.b16 %v4766
    %v4823 = vpack.c.b16 %v4809, %v4807
    %v4824 = vpack.c.b16 %v4810, %v4808
    %v4825 = vpack.c.b16 %v4813, %v4811
    %v4826 = vpack.c.b16 %v4814, %v4812
    %v4827 = vpack.c.b16 %v4817, %v4815
    %v4828 = vpack.c.b16 %v4818, %v4816
    %v4829 = vpack.c.b16 %v4821, %v4819
    %v4830 = vpack.c.b16 %v4822, %v4820
    %4839 = vmatprep.subr.bf16.mxu0 %v4768
    %4840 = vmatpush1.bf16.msra.mxu0 %v4767
    %4841 = vmatprep.subr.bf16.mxu0 %v4770
    %4842 = vmatpush1.bf16.msra.mxu0 %v4769
    %4843 = vmatprep.subr.bf16.mxu0 %v4772
    %4844 = vmatpush1.bf16.msra.mxu0 %v4771
    %4845 = vmatprep.subr.bf16.mxu0 %v4774
    %4846 = vmatpush1.bf16.msra.mxu0 %v4773
    %4847 = vmatprep.subr.bf16.mxu0 %v4776
    %4848 = vmatpush1.bf16.msra.mxu0 %v4775
    %4849 = vmatprep.subr.bf16.mxu0 %v4778
    %4850 = vmatpush1.bf16.msra.mxu0 %v4777
    %4851 = vmatprep.subr.bf16.mxu0 %v4780
    %4852 = vmatpush1.bf16.msra.mxu0 %v4779
    %4853 = vmatprep.subr.bf16.mxu0 %v4782
    %4854 = vmatpush1.bf16.msra.mxu0 %v4781
    %4855 = vmatprep.subr.bf16.mxu0 %v4784
    %4856 = vmatpush1.bf16.msra.mxu0 %v4783
    %4857 = vmatprep.subr.bf16.mxu0 %v4786
    %4858 = vmatpush1.bf16.msra.mxu0 %v4785
    %4859 = vmatprep.subr.bf16.mxu0 %v4788
    %4860 = vmatpush1.bf16.msra.mxu0 %v4787
    %4861 = vmatprep.subr.bf16.mxu0 %v4790
    %4862 = vmatpush1.bf16.msra.mxu0 %v4789
    %4863 = vmatprep.subr.bf16.mxu0 %v4792
    %4864 = vmatpush1.bf16.msra.mxu0 %v4791
    %4865 = vmatprep.subr.bf16.mxu0 %v4794
    %4866 = vmatpush1.bf16.msra.mxu0 %v4793
    %4867 = vmatprep.subr.bf16.mxu0 %v4796
    %4868 = vmatpush1.bf16.msra.mxu0 %v4795
    %4869 = vmatprep.subr.bf16.mxu0 %v4798
    %4870 = vmatpush1.bf16.msra.mxu0 %v4797
    %4871 = vmatprep.mubr.bf16.mxu0 %v4824
    %4872 = vmatmul.mubr.bf16.gmra.mrb[0].mxu0 %v4823
    %v4873 = vpop.f32.mrb[0].mxu0
    %v4874 = vadd.f32 0.0, %v4873
    %v4875 = vpop.f32.mrb[0].mxu0
    %v4876 = vadd.f32 0.0, %v4875
    %v4877 = vpop.f32.mrb[0].mxu0
    %v4878 = vadd.f32 0.0, %v4877
    %v4879 = vpop.f32.mrb[0].mxu0
    %v4880 = vadd.f32 0.0, %v4879
    %4881 = vmatprep.mubr.bf16.mxu0 %v4826
    %4882 = vmatmul.mubr.bf16.gmra.mrb[0].mxu0 %v4825
    %v4883 = vpop.f32.mrb[0].mxu0
    %v4884 = vadd.f32 0.0, %v4883
    %v4885 = vpop.f32.mrb[0].mxu0
    %v4886 = vadd.f32 0.0, %v4885
    %v4887 = vpop.f32.mrb[0].mxu0
    %v4888 = vadd.f32 0.0, %v4887
    %v4889 = vpop.f32.mrb[0].mxu0
    %v4890 = vadd.f32 0.0, %v4889
    %4891 = vmatprep.mubr.bf16.mxu0 %v4828
    %4892 = vmatmul.mubr.bf16.gmra.mrb[0].mxu0 %v4827
    %v4893 = vpop.f32.mrb[0].mxu0
    %v4894 = vadd.f32 0.0, %v4893
    %v4895 = vpop.f32.mrb[0].mxu0
    %v4896 = vadd.f32 0.0, %v4895
    %v4897 = vpop.f32.mrb[0].mxu0
    %v4898 = vadd.f32 0.0, %v4897
    %v4899 = vpop.f32.mrb[0].mxu0
    %v4900 = vadd.f32 0.0, %v4899
    %4901 = vmatprep.mubr.bf16.mxu0 %v4830
    %4902 = vmatmul.mubr.bf16.gmra.mrb[0].mxu0 %v4829
    %v4903 = vpop.f32.mrb[0].mxu0
    %v4904 = vadd.f32 0.0, %v4903
    %v4905 = vpop.f32.mrb[0].mxu0
    %v4906 = vadd.f32 0.0, %v4905
    %v4907 = vpop.f32.mrb[0].mxu0
    %v4908 = vadd.f32 0.0, %v4907
    %v4909 = vpop.f32.mrb[0].mxu0
    %v4910 = vadd.f32 0.0, %v4909
    %4911 = vdwg.mxu0
    %4912 = vset.pattern.permute.xlu0 9
    %4913 = vperm.xlu0 %4912, %v66
    %v4914 = vpop.permute.xlu0 %4913
    %4916 = vset.pattern.permute.xlu0 9
    %4917 = vperm.xlu0 %4916, %v67
    %v4918 = vpop.permute.xlu0 %4917
    %4920 = vset.pattern.permute.xlu0 9
    %4921 = vperm.xlu0 %4920, %v68
    %v4922 = vpop.permute.xlu0 %4921
    %4924 = vset.pattern.permute.xlu0 9
    %4925 = vperm.xlu0 %4924, %v69
    %v4926 = vpop.permute.xlu0 %4925
    %4928 = vset.pattern.permute.xlu0 9
    %4929 = vperm.xlu0 %4928, %v70
    %v4930 = vpop.permute.xlu0 %4929
    %4932 = vset.pattern.permute.xlu0 9
    %4933 = vperm.xlu0 %4932, %v71
    %v4934 = vpop.permute.xlu0 %4933
    %4936 = vset.pattern.permute.xlu0 9
    %4937 = vperm.xlu0 %4936, %v72
    %v4938 = vpop.permute.xlu0 %4937
    %4940 = vset.pattern.permute.xlu0 9
    %4941 = vperm.xlu0 %4940, %v73
    %v4942 = vpop.permute.xlu0 %4941
    %v4944 = vadd.f32 %v2795, %v4914
    %v4945 = vadd.f32 %v2796, %v4914
    %v4946 = vadd.f32 %v2797, %v4918
    %v4947 = vadd.f32 %v2798, %v4918
    %v4948 = vadd.f32 %v2799, %v4922
    %v4949 = vadd.f32 %v2800, %v4922
    %v4950 = vadd.f32 %v2801, %v4926
    %v4951 = vadd.f32 %v2802, %v4926
    %v4952 = vadd.f32 %v2803, %v4930
    %v4953 = vadd.f32 %v2804, %v4930
    %v4954 = vadd.f32 %v2805, %v4934
    %v4955 = vadd.f32 %v2806, %v4934
    %v4956 = vadd.f32 %v2807, %v4938
    %v4957 = vadd.f32 %v2808, %v4938
    %v4958 = vadd.f32 %v2809, %v4942
    %v4959 = vadd.f32 %v2810, %v4942
    %v4960 = vadd.f32 %v4944, %v4874
    %v4961 = vadd.f32 %v4945, %v4876
    %v4962 = vadd.f32 %v4946, %v4878
    %v4963 = vadd.f32 %v4947, %v4880
    %v4964 = vadd.f32 %v4948, %v4884
    %v4965 = vadd.f32 %v4949, %v4886
    %v4966 = vadd.f32 %v4950, %v4888
    %v4967 = vadd.f32 %v4951, %v4890
    %v4968 = vadd.f32 %v4952, %v4894
    %v4969 = vadd.f32 %v4953, %v4896
    %v4970 = vadd.f32 %v4954, %v4898
    %v4971 = vadd.f32 %v4955, %v4900
    %v4972 = vadd.f32 %v4956, %v4904
    %v4973 = vadd.f32 %v4957, %v4906
    %v4974 = vadd.f32 %v4958, %v4908
    %v4975 = vadd.f32 %v4959, %v4910
    %4976 = vst [vmem:[#allocation3] sm:$0xff] %v4960
    %4977 = vst [vmem:[#allocation3 + $0x8] sm:$0xff] %v4961
    %4978 = vst [vmem:[#allocation3 + $0x10] sm:$0xff] %v4962
    %4979 = vst [vmem:[#allocation3 + $0x18] sm:$0xff] %v4963
    %4980 = vst [vmem:[#allocation3 + $0x20] sm:$0xff] %v4964
    %4981 = vst [vmem:[#allocation3 + $0x28] sm:$0xff] %v4965
    %4982 = vst [vmem:[#allocation3 + $0x30] sm:$0xff] %v4966
    %4983 = vst [vmem:[#allocation3 + $0x38] sm:$0xff] %v4967
    %4984 = vst [vmem:[#allocation3 + $0x40] sm:$0xff] %v4968
    %4985 = vst [vmem:[#allocation3 + $0x48] sm:$0xff] %v4969
    %4986 = vst [vmem:[#allocation3 + $0x50] sm:$0xff] %v4970
    %4987 = vst [vmem:[#allocation3 + $0x58] sm:$0xff] %v4971
    %4988 = vst [vmem:[#allocation3 + $0x60] sm:$0xff] %v4972
    %4989 = vst [vmem:[#allocation3 + $0x68] sm:$0xff] %v4973
    %4990 = vst [vmem:[#allocation3 + $0x70] sm:$0xff] %v4974
    %4991 = vst [vmem:[#allocation3 + $0x78] sm:$0xff] %v4975
    // Predicated region
    $region58: #{tpu_custom_call.1} parent=1 // pred_check
      _
    $region59: #{tpu_custom_call.1} parent=1 // pred_check_branch
      %4993 = sbr.rel (0) target = $region61
    $region60: #{tpu_custom_call.1} parent=1 // pred_region
      %s4995 = ssub.s32 2048, 2048
      %4996 = vsyncadd [#allocation4], %s4995
      %s4997 = sshll.u32 [#allocation3], 4
      %s4998 = int_to_ptr.vmem [resolvable:$true] %s4997
      %5003 = dma.vmem_to_hbm [thread:$0]  %s4998, 2048, %s14, [#allocation4], 256, 256, 16
    $region61: #{tpu_custom_call.1} parent=1 // pred_fallthru
      _
    // Predicated region
    $region62: #{tpu_custom_call.1} parent=1 // pred_check
      _
    $region63: #{tpu_custom_call.1} parent=1 // pred_check_branch
      %5005 = sbr.rel (0) target = $region65
    $region64: #{tpu_custom_call.1} parent=1 // pred_region
      %5006 = dma.done [#allocation4], 2048
    $region65: #{tpu_custom_call.1} parent=1 // pred_fallthru
      _
    %5007 = vsyncpa [#allocation4], 1

</llo_original>
